<compile_context>
chip_gen: v6e
topology: v6e:2x2x1
jax: 0.10.0
libtpu: 0.0.40
codegen_flags: <defaults>
</compile_context>

<pallas_src>
import numpy as np
import jax
import jax.numpy as jnp
from jax.experimental import pallas as pl
from jax.experimental.pallas import tpu as pltpu


# --------------------------------------------------------------------------
# Pallas kernels (all pure 2-D MXU matmuls with fused bias / residual add)
# --------------------------------------------------------------------------
def _matmul_bias_kernel(w_ref, x_ref, b_ref, o_ref):
    # w: (M, K), x: (K, TN), b: (M, 1), o: (M, TN)
    o_ref[...] = (jnp.dot(w_ref[...], x_ref[...],
                          preferred_element_type=jnp.float32)
                  + b_ref[...]).astype(o_ref.dtype)


def _matmul_bias_add_kernel(w_ref, x_ref, b_ref, a_ref, o_ref):
    # Same as above, plus a fused residual add (the upsampled coarser level).
    o_ref[...] = (jnp.dot(w_ref[...], x_ref[...],
                          preferred_element_type=jnp.float32)
                  + b_ref[...] + a_ref[...]).astype(o_ref.dtype)


def _rowmatmul_kernel(x_ref, u_ref, o_ref):
    # x: (TM, K), u: (K, N), o: (TM, N) — separable interpolation pass.
    o_ref[...] = jnp.dot(x_ref[...], u_ref[...],
                         preferred_element_type=jnp.float32).astype(o_ref.dtype)


# --------------------------------------------------------------------------
# pallas_call wrappers
# --------------------------------------------------------------------------
def matmul_bias_cols(w, x, b, add=None, tn=512):
    """out = w @ x + b[:, None] (+ add).  Tiled over the lane-dense column axis."""
    M, K = w.shape
    Ncols = x.shape[1]
    tn = Ncols if Ncols <= tn else tn          # tn==Ncols or a multiple of 128
    grid = (pl.cdiv(Ncols, tn),)

    in_specs = [pl.BlockSpec((M, K), lambda j: (0, 0)),
                pl.BlockSpec((K, tn), lambda j: (0, j)),
                pl.BlockSpec((M, 1), lambda j: (0, 0))]
    args = [w, x, b.reshape(M, 1)]
    kernel = _matmul_bias_kernel
    if add is not None:
        in_specs.append(pl.BlockSpec((M, tn), lambda j: (0, j)))
        args.append(add)
        kernel = _matmul_bias_add_kernel

    return pl.pallas_call(
        kernel,
        out_shape=jax.ShapeDtypeStruct((M, Ncols), jnp.float32),
        grid=grid,
        in_specs=in_specs,
        out_specs=pl.BlockSpec((M, tn), lambda j: (0, j)),
        compiler_params=pltpu.CompilerParams(dimension_semantics=("parallel",)),
    )(*args)


def matmul_rows(x, u, tm=2048):
    """out = x @ u, tiled over the (large) row axis."""
    R, K = x.shape
    Ncols = u.shape[1]
    tm = R if R <= tm else tm
    grid = (pl.cdiv(R, tm),)
    return pl.pallas_call(
        _rowmatmul_kernel,
        out_shape=jax.ShapeDtypeStruct((R, Ncols), jnp.float32),
        grid=grid,
        in_specs=[pl.BlockSpec((tm, K), lambda i: (i, 0)),
                  pl.BlockSpec((K, Ncols), lambda i: (0, 0))],
        out_specs=pl.BlockSpec((tm, Ncols), lambda i: (i, 0)),
        compiler_params=pltpu.CompilerParams(dimension_semantics=("parallel",)),
    )(x, u)


# --------------------------------------------------------------------------
# Layers in channels-first matrix form: feature map == (C, B*H*W)
# --------------------------------------------------------------------------
def conv3x3s2_cf(x_mat, B, Hi, Wi, w, b, tn=512):
    """3x3 / stride-2 / pad-1 per-frame conv as one im2col matmul per level."""
    Ci = x_mat.shape[0]
    Co = w.shape[-1]
    Ho = (Hi - 1) // 2 + 1
    Wo = (Wi - 1) // 2 + 1

    x4 = x_mat.reshape(Ci, B, Hi, Wi)
    xp = jnp.pad(x4, ((0, 0), (0, 0), (1, 1), (1, 1)))
    taps = [xp[:, :, kh:kh + 2 * Ho:2, kw:kw + 2 * Wo:2]
            for kh in range(3) for kw in range(3)]
    # rows = (tap, cin), cols = (b, ho, wo)
    xcol = jnp.stack(taps, axis=0).reshape(9 * Ci, B * Ho * Wo)
    w_t = jnp.transpose(w.reshape(9, Ci, Co), (2, 0, 1)).reshape(Co, 9 * Ci)
    out = matmul_bias_cols(w_t, xcol, b, tn=tn)        # (Co, B*Ho*Wo)
    return out, Ho, Wo


def _upsample_matrix(in_size, out_size):
    """1-D linear interpolation matrix matching PyTorch align_corners=False."""
    dst = np.arange(out_size, dtype=np.float64)
    src = (dst + 0.5) * (in_size / out_size) - 0.5
    src = np.maximum(src, 0.0)
    i0 = np.minimum(np.floor(src).astype(np.int64), in_size - 1)
    i1 = np.minimum(i0 + 1, in_size - 1)
    lam = src - i0
    U = np.zeros((out_size, in_size), dtype=np.float32)
    U[np.arange(out_size), i0] += (1.0 - lam).astype(np.float32)
    U[np.arange(out_size), i1] += lam.astype(np.float32)
    return U


def upsample2d_cf(p_mat, B, Hc, Wc, Ho, Wo):
    """Separable bilinear (trilinear with identity T) upsample in matrix form."""
    F = p_mat.shape[0]
    UhT = jnp.asarray(_upsample_matrix(Hc, Ho).T)      # (Hc, Ho)
    UwT = jnp.asarray(_upsample_matrix(Wc, Wo).T)      # (Wc, Wo)

    t = p_mat.reshape(F, B, Hc, Wc)
    t = jnp.swapaxes(t, 2, 3).reshape(F * B * Wc, Hc)  # rows = (f, b, w)
    t = matmul_rows(t, UhT).reshape(F, B, Wc, Ho)      # H pass
    t = jnp.swapaxes(t, 2, 3).reshape(F * B * Ho, Wc)  # rows = (f, b, y)
    t = matmul_rows(t, UwT)                            # W pass
    return t.reshape(F, B * Ho * Wo)


# --------------------------------------------------------------------------
# Full forward pass (matches SparseFeaturePyramid.forward)
# --------------------------------------------------------------------------
def sparse_feature_pyramid(x_ncdhw, params):
    N, C, T, H, W = x_ncdhw.shape
    B = N * T
    # channels-first matrix form; columns ordered (n, t, h, w)
    x_mat = jnp.transpose(x_ncdhw, (1, 0, 2, 3, 4)).reshape(C, B * H * W)

    c1, H1, W1 = conv3x3s2_cf(x_mat, B, H, W, params["w1"], params["b1"])
    c2, H2, W2 = conv3x3s2_cf(c1, B, H1, W1, params["w2"], params["b2"])
    c3, H3, W3 = conv3x3s2_cf(c2, B, H2, W2, params["w3"], params["b3"])

    p3 = c3
    up3 = upsample2d_cf(p3, B, H3, W3, H2, W2)
    p2 = matmul_bias_cols(params["wl2"].T, c2, params["bl2"], add=up3)
    up2 = upsample2d_cf(p2, B, H2, W2, H1, W1)
    p1 = matmul_bias_cols(params["wl1"].T, c1, params["bl1"], add=up2)

    def to_ncdhw(mat, Hl, Wl):
        Fd = mat.shape[0]
        return jnp.transpose(mat.reshape(Fd, N, T, Hl, Wl), (1, 0, 2, 3, 4))

    return to_ncdhw(p1, H1, W1), to_ncdhw(p2, H2, W2), to_ncdhw(p3, H3, W3)


# --------------------------------------------------------------------------
# Parameters (deterministic, PyTorch-Conv-style uniform init)
# --------------------------------------------------------------------------
def init_params(key, in_channels, feature_dim):
    f4, f2, f = feature_dim // 4, feature_dim // 2, feature_dim
    ks = jax.random.split(key, 10)

    def conv_init(kw_, kb_, kh, kwd, ci, co):
        bound = 1.0 / float(np.sqrt(ci * kh * kwd))
        w = jax.random.uniform(kw_, (kh, kwd, ci, co), jnp.float32, -bound, bound)
        b = jax.random.uniform(kb_, (co,), jnp.float32, -bound, bound)
        return w, b

    w1, b1 = conv_init(ks[0], ks[1], 3, 3, in_channels, f4)
    w2, b2 = conv_init(ks[2], ks[3], 3, 3, f4, f2)
    w3, b3 = conv_init(ks[4], ks[5], 3, 3, f2, f)
    wl1, bl1 = conv_init(ks[6], ks[7], 1, 1, f4, f)
    wl2, bl2 = conv_init(ks[8], ks[9], 1, 1, f2, f)
    return dict(w1=w1, b1=b1, w2=w2, b2=b2, w3=w3, b3=b3,
                wl1=wl1.reshape(f4, f), bl1=bl1,
                wl2=wl2.reshape(f2, f), bl2=bl2)


# --------------------------------------------------------------------------
# Pure-JAX reference for validation
# --------------------------------------------------------------------------
def _conv_ref(x, w, b):
    y = jax.lax.conv_general_dilated(
        x, w, window_strides=(2, 2), padding=((1, 1), (1, 1)),
        dimension_numbers=("NHWC", "HWIO", "NHWC"),
        precision=jax.lax.Precision.HIGHEST)
    return y + b[None, None, None, :]


def _upsample_ref(p, H, W):
    Uh = jnp.asarray(_upsample_matrix(p.shape[1], H))
    Uw = jnp.asarray(_upsample_matrix(p.shape[2], W))
    return jnp.einsum("oh,pw,bhwf->bopf", Uh, Uw, p,
                      precision=jax.lax.Precision.HIGHEST)


def forward_ref(x_ncdhw, params):
    N, C, T, H, W = x_ncdhw.shape
    x = jnp.transpose(x_ncdhw, (0, 2, 3, 4, 1)).reshape(N * T, H, W, C)
    c1 = _conv_ref(x, params["w1"], params["b1"])
    c2 = _conv_ref(c1, params["w2"], params["b2"])
    c3 = _conv_ref(c2, params["w3"], params["b3"])
    p3 = c3
    p2 = (jnp.einsum("bhwc,cf->bhwf", c2, params["wl2"],
                     precision=jax.lax.Precision.HIGHEST)
          + params["bl2"] + _upsample_ref(p3, c2.shape[1], c2.shape[2]))
    p1 = (jnp.einsum("bhwc,cf->bhwf", c1, params["wl1"],
                     precision=jax.lax.Precision.HIGHEST)
          + params["bl1"] + _upsample_ref(p2, c1.shape[1], c1.shape[2]))

    def to_ncdhw(y):
        Bf, Hy, Wy, Cy = y.shape
        return jnp.transpose(y.reshape(N, T, Hy, Wy, Cy), (0, 4, 1, 2, 3))

    return to_ncdhw(p1), to_ncdhw(p2), to_ncdhw(p3)


# --------------------------------------------------------------------------
if __name__ == "__main__":
    in_channels, feature_dim = 4, 32
    N, T, H, W = 2, 3, 16, 16

    root = jax.random.PRNGKey(0)
    kp, kx = jax.random.split(root)
    params = init_params(kp, in_channels, feature_dim)
    x = jax.random.normal(kx, (N, in_channels, T, H, W), jnp.float32)

    fwd = jax.jit(sparse_feature_pyramid)
    p1, p2, p3 = fwd(x, params)
    jax.block_until_ready((p1, p2, p3))

    assert p1.shape == (N, feature_dim, T, H // 2, W // 2)
    assert p2.shape == (N, feature_dim, T, H // 4, W // 4)
    assert p3.shape == (N, feature_dim, T, H // 8, W // 8)

    r1, r2, r3 = forward_ref(x, params)
    for got, ref in ((p1, r1), (p2, r2), (p3, r3)):
        np.testing.assert_allclose(np.asarray(got), np.asarray(ref),
                                   rtol=2e-3, atol=2e-3)

    print("KERNEL_OK")
</pallas_src>

<mosaic_0001>
module attributes {stable_mosaic.version = 11 : i64} {
  func.func @_matmul_bias_kernel(%arg0: i32, %arg1: memref<8x36xf32, #tpu.memory_space<vmem>>, %arg2: memref<36x384xf32, #tpu.memory_space<vmem>>, %arg3: memref<8x1xf32, #tpu.memory_space<vmem>>, %arg4: memref<8x384xf32, #tpu.memory_space<vmem>>) attributes {dimension_semantics = [#tpu.dimension_semantics<parallel>], iteration_bounds = array<i64: 1>, scalar_prefetch = 0 : i64, scratch_operands = 0 : i64, tpu.core_type = #tpu.core_type<tc>, window_params = [{pipeline_mode = #tpu.pipeline_mode<synchronous>, transform_indices = @transform_0, window_bounds = array<i64: 8, 36>}, {transform_indices = @transform_1, window_bounds = array<i64: 36, 384>}, {pipeline_mode = #tpu.pipeline_mode<synchronous>, transform_indices = @transform_2, window_bounds = array<i64: 8, 1>}, {transform_indices = @transform_3, window_bounds = array<i64: 8, 384>}]} {
    %c0 = arith.constant 0 : index
    %c0_0 = arith.constant 0 : index
    %0 = vector.load %arg1[%c0, %c0_0] : memref<8x36xf32, #tpu.memory_space<vmem>>, vector<8x36xf32>
    %c0_1 = arith.constant 0 : index
    %c0_2 = arith.constant 0 : index
    %1 = vector.load %arg2[%c0_1, %c0_2] : memref<36x384xf32, #tpu.memory_space<vmem>>, vector<36x384xf32>
    %cst = arith.constant dense<0.000000e+00> : vector<8x384xf32>
    %2 = tpu.matmul %0, %1, %cst {dimension_numbers = #tpu.dot_dimension_numbers<[1], [0], [0], [1], [0, 0, 1, 1], [], []>} : vector<8x36xf32>, vector<36x384xf32>, vector<8x384xf32> -> vector<8x384xf32>
    %c0_3 = arith.constant 0 : index
    %c0_4 = arith.constant 0 : index
    %3 = vector.load %arg3[%c0_3, %c0_4] : memref<8x1xf32, #tpu.memory_space<vmem>>, vector<8x1xf32>
    %4 = vector.broadcast %3 : vector<8x1xf32> to vector<8x384xf32>
    %5 = arith.addf %2, %4 : vector<8x384xf32>
    %c0_5 = arith.constant 0 : index
    %c0_6 = arith.constant 0 : index
    %6 = vector.load %arg4[%c0_5, %c0_6] : memref<8x384xf32, #tpu.memory_space<vmem>>, vector<8x384xf32>
    tpu.vector_store %arg4[%c0_5, %c0_6], %5 {strides = array<i32>} : memref<8x384xf32, #tpu.memory_space<vmem>>, vector<8x384xf32>,
    return
  }
  func.func @transform_0(%arg0: i32) -> (i32, i32) {
    %c0_i32 = arith.constant 0 : i32
    %c0_i32_0 = arith.constant 0 : i32
    %c0_i32_1 = arith.constant 0 : i32
    return %c0_i32, %c0_i32_0 : i32, i32
  }
  func.func @transform_1(%arg0: i32) -> (i32, i32) {
    %c0_i32 = arith.constant 0 : i32
    %c0_i32_0 = arith.constant 0 : i32
    return %c0_i32, %arg0 : i32, i32
  }
  func.func @transform_2(%arg0: i32) -> (i32, i32) {
    %c0_i32 = arith.constant 0 : i32
    %c0_i32_0 = arith.constant 0 : i32
    %c0_i32_1 = arith.constant 0 : i32
    return %c0_i32, %c0_i32_0 : i32, i32
  }
  func.func @transform_3(%arg0: i32) -> (i32, i32) {
    %c0_i32 = arith.constant 0 : i32
    %c0_i32_0 = arith.constant 0 : i32
    return %c0_i32, %arg0 : i32, i32
  }
}

module attributes {stable_mosaic.version = 11 : i64} {
  func.func @_matmul_bias_kernel(%arg0: i32, %arg1: memref<16x72xf32, #tpu.memory_space<vmem>>, %arg2: memref<72x96xf32, #tpu.memory_space<vmem>>, %arg3: memref<16x1xf32, #tpu.memory_space<vmem>>, %arg4: memref<16x96xf32, #tpu.memory_space<vmem>>) attributes {dimension_semantics = [#tpu.dimension_semantics<parallel>], iteration_bounds = array<i64: 1>, scalar_prefetch = 0 : i64, scratch_operands = 0 : i64, tpu.core_type = #tpu.core_type<tc>, window_params = [{pipeline_mode = #tpu.pipeline_mode<synchronous>, transform_indices = @transform_0, window_bounds = array<i64: 16, 72>}, {transform_indices = @transform_1, window_bounds = array<i64: 72, 96>}, {pipeline_mode = #tpu.pipeline_mode<synchronous>, transform_indices = @transform_2, window_bounds = array<i64: 16, 1>}, {transform_indices = @transform_3, window_bounds = array<i64: 16, 96>}]} {
    %c0 = arith.constant 0 : index
    %c0_0 = arith.constant 0 : index
    %0 = vector.load %arg1[%c0, %c0_0] : memref<16x72xf32, #tpu.memory_space<vmem>>, vector<16x72xf32>
    %c0_1 = arith.constant 0 : index
    %c0_2 = arith.constant 0 : index
    %1 = vector.load %arg2[%c0_1, %c0_2] : memref<72x96xf32, #tpu.memory_space<vmem>>, vector<72x96xf32>
    %cst = arith.constant dense<0.000000e+00> : vector<16x96xf32>
    %2 = tpu.matmul %0, %1, %cst {dimension_numbers = #tpu.dot_dimension_numbers<[1], [0], [0], [1], [0, 0, 1, 1], [], []>} : vector<16x72xf32>, vector<72x96xf32>, vector<16x96xf32> -> vector<16x96xf32>
    %c0_3 = arith.constant 0 : index
    %c0_4 = arith.constant 0 : index
    %3 = vector.load %arg3[%c0_3, %c0_4] : memref<16x1xf32, #tpu.memory_space<vmem>>, vector<16x1xf32>
    %4 = vector.broadcast %3 : vector<16x1xf32> to vector<16x96xf32>
    %5 = arith.addf %2, %4 : vector<16x96xf32>
    %c0_5 = arith.constant 0 : index
    %c0_6 = arith.constant 0 : index
    %6 = vector.load %arg4[%c0_5, %c0_6] : memref<16x96xf32, #tpu.memory_space<vmem>>, vector<16x96xf32>
    tpu.vector_store %arg4[%c0_5, %c0_6], %5 {strides = array<i32>} : memref<16x96xf32, #tpu.memory_space<vmem>>, vector<16x96xf32>,
    return
  }
  func.func @transform_0(%arg0: i32) -> (i32, i32) {
    %c0_i32 = arith.constant 0 : i32
    %c0_i32_0 = arith.constant 0 : i32
    %c0_i32_1 = arith.constant 0 : i32
    return %c0_i32, %c0_i32_0 : i32, i32
  }
  func.func @transform_1(%arg0: i32) -> (i32, i32) {
    %c0_i32 = arith.constant 0 : i32
    %c0_i32_0 = arith.constant 0 : i32
    return %c0_i32, %arg0 : i32, i32
  }
  func.func @transform_2(%arg0: i32) -> (i32, i32) {
    %c0_i32 = arith.constant 0 : i32
    %c0_i32_0 = arith.constant 0 : i32
    %c0_i32_1 = arith.constant 0 : i32
    return %c0_i32, %c0_i32_0 : i32, i32
  }
  func.func @transform_3(%arg0: i32) -> (i32, i32) {
    %c0_i32 = arith.constant 0 : i32
    %c0_i32_0 = arith.constant 0 : i32
    return %c0_i32, %arg0 : i32, i32
  }
}

module attributes {stable_mosaic.version = 11 : i64} {
  func.func @_matmul_bias_kernel(%arg0: i32, %arg1: memref<32x144xf32, #tpu.memory_space<vmem>>, %arg2: memref<144x24xf32, #tpu.memory_space<vmem>>, %arg3: memref<32x1xf32, #tpu.memory_space<vmem>>, %arg4: memref<32x24xf32, #tpu.memory_space<vmem>>) attributes {dimension_semantics = [#tpu.dimension_semantics<parallel>], iteration_bounds = array<i64: 1>, scalar_prefetch = 0 : i64, scratch_operands = 0 : i64, tpu.core_type = #tpu.core_type<tc>, window_params = [{pipeline_mode = #tpu.pipeline_mode<synchronous>, transform_indices = @transform_0, window_bounds = array<i64: 32, 144>}, {transform_indices = @transform_1, window_bounds = array<i64: 144, 24>}, {pipeline_mode = #tpu.pipeline_mode<synchronous>, transform_indices = @transform_2, window_bounds = array<i64: 32, 1>}, {transform_indices = @transform_3, window_bounds = array<i64: 32, 24>}]} {
    %c0 = arith.constant 0 : index
    %c0_0 = arith.constant 0 : index
    %0 = vector.load %arg1[%c0, %c0_0] : memref<32x144xf32, #tpu.memory_space<vmem>>, vector<32x144xf32>
    %c0_1 = arith.constant 0 : index
    %c0_2 = arith.constant 0 : index
    %1 = vector.load %arg2[%c0_1, %c0_2] : memref<144x24xf32, #tpu.memory_space<vmem>>, vector<144x24xf32>
    %cst = arith.constant dense<0.000000e+00> : vector<32x24xf32>
    %2 = tpu.matmul %0, %1, %cst {dimension_numbers = #tpu.dot_dimension_numbers<[1], [0], [0], [1], [0, 0, 1, 1], [], []>} : vector<32x144xf32>, vector<144x24xf32>, vector<32x24xf32> -> vector<32x24xf32>
    %c0_3 = arith.constant 0 : index
    %c0_4 = arith.constant 0 : index
    %3 = vector.load %arg3[%c0_3, %c0_4] : memref<32x1xf32, #tpu.memory_space<vmem>>, vector<32x1xf32>
    %4 = vector.broadcast %3 : vector<32x1xf32> to vector<32x24xf32>
    %5 = arith.addf %2, %4 : vector<32x24xf32>
    %c0_5 = arith.constant 0 : index
    %c0_6 = arith.constant 0 : index
    %6 = vector.load %arg4[%c0_5, %c0_6] : memref<32x24xf32, #tpu.memory_space<vmem>>, vector<32x24xf32>
    tpu.vector_store %arg4[%c0_5, %c0_6], %5 {strides = array<i32>} : memref<32x24xf32, #tpu.memory_space<vmem>>, vector<32x24xf32>,
    return
  }
  func.func @transform_0(%arg0: i32) -> (i32, i32) {
    %c0_i32 = arith.constant 0 : i32
    %c0_i32_0 = arith.constant 0 : i32
    %c0_i32_1 = arith.constant 0 : i32
    return %c0_i32, %c0_i32_0 : i32, i32
  }
  func.func @transform_1(%arg0: i32) -> (i32, i32) {
    %c0_i32 = arith.constant 0 : i32
    %c0_i32_0 = arith.constant 0 : i32
    return %c0_i32, %arg0 : i32, i32
  }
  func.func @transform_2(%arg0: i32) -> (i32, i32) {
    %c0_i32 = arith.constant 0 : i32
    %c0_i32_0 = arith.constant 0 : i32
    %c0_i32_1 = arith.constant 0 : i32
    return %c0_i32, %c0_i32_0 : i32, i32
  }
  func.func @transform_3(%arg0: i32) -> (i32, i32) {
    %c0_i32 = arith.constant 0 : i32
    %c0_i32_0 = arith.constant 0 : i32
    return %c0_i32, %arg0 : i32, i32
  }
}

module attributes {stable_mosaic.version = 11 : i64} {
  func.func @_rowmatmul_kernel(%arg0: i32, %arg1: memref<384x2xf32, #tpu.memory_space<vmem>>, %arg2: memref<2x4xf32, #tpu.memory_space<vmem>>, %arg3: memref<384x4xf32, #tpu.memory_space<vmem>>) attributes {dimension_semantics = [#tpu.dimension_semantics<parallel>], iteration_bounds = array<i64: 1>, scalar_prefetch = 0 : i64, scratch_operands = 0 : i64, tpu.core_type = #tpu.core_type<tc>, window_params = [{transform_indices = @transform_0, window_bounds = array<i64: 384, 2>}, {pipeline_mode = #tpu.pipeline_mode<synchronous>, transform_indices = @transform_1, window_bounds = array<i64: 2, 4>}, {transform_indices = @transform_2, window_bounds = array<i64: 384, 4>}]} {
    %c0 = arith.constant 0 : index
    %c0_0 = arith.constant 0 : index
    %0 = vector.load %arg1[%c0, %c0_0] : memref<384x2xf32, #tpu.memory_space<vmem>>, vector<384x2xf32>
    %c0_1 = arith.constant 0 : index
    %c0_2 = arith.constant 0 : index
    %1 = vector.load %arg2[%c0_1, %c0_2] : memref<2x4xf32, #tpu.memory_space<vmem>>, vector<2x4xf32>
    %cst = arith.constant dense<0.000000e+00> : vector<384x4xf32>
    %2 = tpu.matmul %0, %1, %cst {dimension_numbers = #tpu.dot_dimension_numbers<[1], [0], [0], [1], [0, 0, 1, 1], [], []>} : vector<384x2xf32>, vector<2x4xf32>, vector<384x4xf32> -> vector<384x4xf32>
    %c0_3 = arith.constant 0 : index
    %c0_4 = arith.constant 0 : index
    %3 = vector.load %arg3[%c0_3, %c0_4] : memref<384x4xf32, #tpu.memory_space<vmem>>, vector<384x4xf32>
    tpu.vector_store %arg3[%c0_3, %c0_4], %2 {strides = array<i32>} : memref<384x4xf32, #tpu.memory_space<vmem>>, vector<384x4xf32>,
    return
  }
  func.func @transform_0(%arg0: i32) -> (i32, i32) {
    %c0_i32 = arith.constant 0 : i32
    %c0_i32_0 = arith.constant 0 : i32
    return %arg0, %c0_i32 : i32, i32
  }
  func.func @transform_1(%arg0: i32) -> (i32, i32) {
    %c0_i32 = arith.constant 0 : i32
    %c0_i32_0 = arith.constant 0 : i32
    %c0_i32_1 = arith.constant 0 : i32
    return %c0_i32, %c0_i32_0 : i32, i32
  }
  func.func @transform_2(%arg0: i32) -> (i32, i32) {
    %c0_i32 = arith.constant 0 : i32
    %c0_i32_0 = arith.constant 0 : i32
    return %arg0, %c0_i32 : i32, i32
  }
}

module attributes {stable_mosaic.version = 11 : i64} {
  func.func @_rowmatmul_kernel(%arg0: i32, %arg1: memref<768x2xf32, #tpu.memory_space<vmem>>, %arg2: memref<2x4xf32, #tpu.memory_space<vmem>>, %arg3: memref<768x4xf32, #tpu.memory_space<vmem>>) attributes {dimension_semantics = [#tpu.dimension_semantics<parallel>], iteration_bounds = array<i64: 1>, scalar_prefetch = 0 : i64, scratch_operands = 0 : i64, tpu.core_type = #tpu.core_type<tc>, window_params = [{transform_indices = @transform_0, window_bounds = array<i64: 768, 2>}, {pipeline_mode = #tpu.pipeline_mode<synchronous>, transform_indices = @transform_1, window_bounds = array<i64: 2, 4>}, {transform_indices = @transform_2, window_bounds = array<i64: 768, 4>}]} {
    %c0 = arith.constant 0 : index
    %c0_0 = arith.constant 0 : index
    %0 = vector.load %arg1[%c0, %c0_0] : memref<768x2xf32, #tpu.memory_space<vmem>>, vector<768x2xf32>
    %c0_1 = arith.constant 0 : index
    %c0_2 = arith.constant 0 : index
    %1 = vector.load %arg2[%c0_1, %c0_2] : memref<2x4xf32, #tpu.memory_space<vmem>>, vector<2x4xf32>
    %cst = arith.constant dense<0.000000e+00> : vector<768x4xf32>
    %2 = tpu.matmul %0, %1, %cst {dimension_numbers = #tpu.dot_dimension_numbers<[1], [0], [0], [1], [0, 0, 1, 1], [], []>} : vector<768x2xf32>, vector<2x4xf32>, vector<768x4xf32> -> vector<768x4xf32>
    %c0_3 = arith.constant 0 : index
    %c0_4 = arith.constant 0 : index
    %3 = vector.load %arg3[%c0_3, %c0_4] : memref<768x4xf32, #tpu.memory_space<vmem>>, vector<768x4xf32>
    tpu.vector_store %arg3[%c0_3, %c0_4], %2 {strides = array<i32>} : memref<768x4xf32, #tpu.memory_space<vmem>>, vector<768x4xf32>,
    return
  }
  func.func @transform_0(%arg0: i32) -> (i32, i32) {
    %c0_i32 = arith.constant 0 : i32
    %c0_i32_0 = arith.constant 0 : i32
    return %arg0, %c0_i32 : i32, i32
  }
  func.func @transform_1(%arg0: i32) -> (i32, i32) {
    %c0_i32 = arith.constant 0 : i32
    %c0_i32_0 = arith.constant 0 : i32
    %c0_i32_1 = arith.constant 0 : i32
    return %c0_i32, %c0_i32_0 : i32, i32
  }
  func.func @transform_2(%arg0: i32) -> (i32, i32) {
    %c0_i32 = arith.constant 0 : i32
    %c0_i32_0 = arith.constant 0 : i32
    return %arg0, %c0_i32 : i32, i32
  }
}

module attributes {stable_mosaic.version = 11 : i64} {
  func.func @_matmul_bias_add_kernel(%arg0: i32, %arg1: memref<32x16xf32, #tpu.memory_space<vmem>>, %arg2: memref<16x96xf32, #tpu.memory_space<vmem>>, %arg3: memref<32x1xf32, #tpu.memory_space<vmem>>, %arg4: memref<32x96xf32, #tpu.memory_space<vmem>>, %arg5: memref<32x96xf32, #tpu.memory_space<vmem>>) attributes {dimension_semantics = [#tpu.dimension_semantics<parallel>], iteration_bounds = array<i64: 1>, scalar_prefetch = 0 : i64, scratch_operands = 0 : i64, tpu.core_type = #tpu.core_type<tc>, window_params = [{pipeline_mode = #tpu.pipeline_mode<synchronous>, transform_indices = @transform_0, window_bounds = array<i64: 32, 16>}, {transform_indices = @transform_1, window_bounds = array<i64: 16, 96>}, {pipeline_mode = #tpu.pipeline_mode<synchronous>, transform_indices = @transform_2, window_bounds = array<i64: 32, 1>}, {transform_indices = @transform_3, window_bounds = array<i64: 32, 96>}, {transform_indices = @transform_4, window_bounds = array<i64: 32, 96>}]} {
    %c0 = arith.constant 0 : index
    %c0_0 = arith.constant 0 : index
    %0 = vector.load %arg1[%c0, %c0_0] : memref<32x16xf32, #tpu.memory_space<vmem>>, vector<32x16xf32>
    %c0_1 = arith.constant 0 : index
    %c0_2 = arith.constant 0 : index
    %1 = vector.load %arg2[%c0_1, %c0_2] : memref<16x96xf32, #tpu.memory_space<vmem>>, vector<16x96xf32>
    %cst = arith.constant dense<0.000000e+00> : vector<32x96xf32>
    %2 = tpu.matmul %0, %1, %cst {dimension_numbers = #tpu.dot_dimension_numbers<[1], [0], [0], [1], [0, 0, 1, 1], [], []>} : vector<32x16xf32>, vector<16x96xf32>, vector<32x96xf32> -> vector<32x96xf32>
    %c0_3 = arith.constant 0 : index
    %c0_4 = arith.constant 0 : index
    %3 = vector.load %arg3[%c0_3, %c0_4] : memref<32x1xf32, #tpu.memory_space<vmem>>, vector<32x1xf32>
    %4 = vector.broadcast %3 : vector<32x1xf32> to vector<32x96xf32>
    %5 = arith.addf %2, %4 : vector<32x96xf32>
    %c0_5 = arith.constant 0 : index
    %c0_6 = arith.constant 0 : index
    %6 = vector.load %arg4[%c0_5, %c0_6] : memref<32x96xf32, #tpu.memory_space<vmem>>, vector<32x96xf32>
    %7 = arith.addf %5, %6 : vector<32x96xf32>
    %c0_7 = arith.constant 0 : index
    %c0_8 = arith.constant 0 : index
    %8 = vector.load %arg5[%c0_7, %c0_8] : memref<32x96xf32, #tpu.memory_space<vmem>>, vector<32x96xf32>
    tpu.vector_store %arg5[%c0_7, %c0_8], %7 {strides = array<i32>} : memref<32x96xf32, #tpu.memory_space<vmem>>, vector<32x96xf32>,
    return
  }
  func.func @transform_0(%arg0: i32) -> (i32, i32) {
    %c0_i32 = arith.constant 0 : i32
    %c0_i32_0 = arith.constant 0 : i32
    %c0_i32_1 = arith.constant 0 : i32
    return %c0_i32, %c0_i32_0 : i32, i32
  }
  func.func @transform_1(%arg0: i32) -> (i32, i32) {
    %c0_i32 = arith.constant 0 : i32
    %c0_i32_0 = arith.constant 0 : i32
    return %c0_i32, %arg0 : i32, i32
  }
  func.func @transform_2(%arg0: i32) -> (i32, i32) {
    %c0_i32 = arith.constant 0 : i32
    %c0_i32_0 = arith.constant 0 : i32
    %c0_i32_1 = arith.constant 0 : i32
    return %c0_i32, %c0_i32_0 : i32, i32
  }
  func.func @transform_3(%arg0: i32) -> (i32, i32) {
    %c0_i32 = arith.constant 0 : i32
    %c0_i32_0 = arith.constant 0 : i32
    return %c0_i32, %arg0 : i32, i32
  }
  func.func @transform_4(%arg0: i32) -> (i32, i32) {
    %c0_i32 = arith.constant 0 : i32
    %c0_i32_0 = arith.constant 0 : i32
    return %c0_i32, %arg0 : i32, i32
  }
}

module attributes {stable_mosaic.version = 11 : i64} {
  func.func @_rowmatmul_kernel(%arg0: i32, %arg1: memref<768x4xf32, #tpu.memory_space<vmem>>, %arg2: memref<4x8xf32, #tpu.memory_space<vmem>>, %arg3: memref<768x8xf32, #tpu.memory_space<vmem>>) attributes {dimension_semantics = [#tpu.dimension_semantics<parallel>], iteration_bounds = array<i64: 1>, scalar_prefetch = 0 : i64, scratch_operands = 0 : i64, tpu.core_type = #tpu.core_type<tc>, window_params = [{transform_indices = @transform_0, window_bounds = array<i64: 768, 4>}, {pipeline_mode = #tpu.pipeline_mode<synchronous>, transform_indices = @transform_1, window_bounds = array<i64: 4, 8>}, {transform_indices = @transform_2, window_bounds = array<i64: 768, 8>}]} {
    %c0 = arith.constant 0 : index
    %c0_0 = arith.constant 0 : index
    %0 = vector.load %arg1[%c0, %c0_0] : memref<768x4xf32, #tpu.memory_space<vmem>>, vector<768x4xf32>
    %c0_1 = arith.constant 0 : index
    %c0_2 = arith.constant 0 : index
    %1 = vector.load %arg2[%c0_1, %c0_2] : memref<4x8xf32, #tpu.memory_space<vmem>>, vector<4x8xf32>
    %cst = arith.constant dense<0.000000e+00> : vector<768x8xf32>
    %2 = tpu.matmul %0, %1, %cst {dimension_numbers = #tpu.dot_dimension_numbers<[1], [0], [0], [1], [0, 0, 1, 1], [], []>} : vector<768x4xf32>, vector<4x8xf32>, vector<768x8xf32> -> vector<768x8xf32>
    %c0_3 = arith.constant 0 : index
    %c0_4 = arith.constant 0 : index
    %3 = vector.load %arg3[%c0_3, %c0_4] : memref<768x8xf32, #tpu.memory_space<vmem>>, vector<768x8xf32>
    tpu.vector_store %arg3[%c0_3, %c0_4], %2 {strides = array<i32>} : memref<768x8xf32, #tpu.memory_space<vmem>>, vector<768x8xf32>,
    return
  }
  func.func @transform_0(%arg0: i32) -> (i32, i32) {
    %c0_i32 = arith.constant 0 : i32
    %c0_i32_0 = arith.constant 0 : i32
    return %arg0, %c0_i32 : i32, i32
  }
  func.func @transform_1(%arg0: i32) -> (i32, i32) {
    %c0_i32 = arith.constant 0 : i32
    %c0_i32_0 = arith.constant 0 : i32
    %c0_i32_1 = arith.constant 0 : i32
    return %c0_i32, %c0_i32_0 : i32, i32
  }
  func.func @transform_2(%arg0: i32) -> (i32, i32) {
    %c0_i32 = arith.constant 0 : i32
    %c0_i32_0 = arith.constant 0 : i32
    return %arg0, %c0_i32 : i32, i32
  }
}

module attributes {stable_mosaic.version = 11 : i64} {
  func.func @_rowmatmul_kernel(%arg0: i32, %arg1: memref<1536x4xf32, #tpu.memory_space<vmem>>, %arg2: memref<4x8xf32, #tpu.memory_space<vmem>>, %arg3: memref<1536x8xf32, #tpu.memory_space<vmem>>) attributes {dimension_semantics = [#tpu.dimension_semantics<parallel>], iteration_bounds = array<i64: 1>, scalar_prefetch = 0 : i64, scratch_operands = 0 : i64, tpu.core_type = #tpu.core_type<tc>, window_params = [{transform_indices = @transform_0, window_bounds = array<i64: 1536, 4>}, {pipeline_mode = #tpu.pipeline_mode<synchronous>, transform_indices = @transform_1, window_bounds = array<i64: 4, 8>}, {transform_indices = @transform_2, window_bounds = array<i64: 1536, 8>}]} {
    %c0 = arith.constant 0 : index
    %c0_0 = arith.constant 0 : index
    %0 = vector.load %arg1[%c0, %c0_0] : memref<1536x4xf32, #tpu.memory_space<vmem>>, vector<1536x4xf32>
    %c0_1 = arith.constant 0 : index
    %c0_2 = arith.constant 0 : index
    %1 = vector.load %arg2[%c0_1, %c0_2] : memref<4x8xf32, #tpu.memory_space<vmem>>, vector<4x8xf32>
    %cst = arith.constant dense<0.000000e+00> : vector<1536x8xf32>
    %2 = tpu.matmul %0, %1, %cst {dimension_numbers = #tpu.dot_dimension_numbers<[1], [0], [0], [1], [0, 0, 1, 1], [], []>} : vector<1536x4xf32>, vector<4x8xf32>, vector<1536x8xf32> -> vector<1536x8xf32>
    %c0_3 = arith.constant 0 : index
    %c0_4 = arith.constant 0 : index
    %3 = vector.load %arg3[%c0_3, %c0_4] : memref<1536x8xf32, #tpu.memory_space<vmem>>, vector<1536x8xf32>
    tpu.vector_store %arg3[%c0_3, %c0_4], %2 {strides = array<i32>} : memref<1536x8xf32, #tpu.memory_space<vmem>>, vector<1536x8xf32>,
    return
  }
  func.func @transform_0(%arg0: i32) -> (i32, i32) {
    %c0_i32 = arith.constant 0 : i32
    %c0_i32_0 = arith.constant 0 : i32
    return %arg0, %c0_i32 : i32, i32
  }
  func.func @transform_1(%arg0: i32) -> (i32, i32) {
    %c0_i32 = arith.constant 0 : i32
    %c0_i32_0 = arith.constant 0 : i32
    %c0_i32_1 = arith.constant 0 : i32
    return %c0_i32, %c0_i32_0 : i32, i32
  }
  func.func @transform_2(%arg0: i32) -> (i32, i32) {
    %c0_i32 = arith.constant 0 : i32
    %c0_i32_0 = arith.constant 0 : i32
    return %arg0, %c0_i32 : i32, i32
  }
}

module attributes {stable_mosaic.version = 11 : i64} {
  func.func @_matmul_bias_add_kernel(%arg0: i32, %arg1: memref<32x8xf32, #tpu.memory_space<vmem>>, %arg2: memref<8x384xf32, #tpu.memory_space<vmem>>, %arg3: memref<32x1xf32, #tpu.memory_space<vmem>>, %arg4: memref<32x384xf32, #tpu.memory_space<vmem>>, %arg5: memref<32x384xf32, #tpu.memory_space<vmem>>) attributes {dimension_semantics = [#tpu.dimension_semantics<parallel>], iteration_bounds = array<i64: 1>, scalar_prefetch = 0 : i64, scratch_operands = 0 : i64, tpu.core_type = #tpu.core_type<tc>, window_params = [{pipeline_mode = #tpu.pipeline_mode<synchronous>, transform_indices = @transform_0, window_bounds = array<i64: 32, 8>}, {transform_indices = @transform_1, window_bounds = array<i64: 8, 384>}, {pipeline_mode = #tpu.pipeline_mode<synchronous>, transform_indices = @transform_2, window_bounds = array<i64: 32, 1>}, {transform_indices = @transform_3, window_bounds = array<i64: 32, 384>}, {transform_indices = @transform_4, window_bounds = array<i64: 32, 384>}]} {
    %c0 = arith.constant 0 : index
    %c0_0 = arith.constant 0 : index
    %0 = vector.load %arg1[%c0, %c0_0] : memref<32x8xf32, #tpu.memory_space<vmem>>, vector<32x8xf32>
    %c0_1 = arith.constant 0 : index
    %c0_2 = arith.constant 0 : index
    %1 = vector.load %arg2[%c0_1, %c0_2] : memref<8x384xf32, #tpu.memory_space<vmem>>, vector<8x384xf32>
    %cst = arith.constant dense<0.000000e+00> : vector<32x384xf32>
    %2 = tpu.matmul %0, %1, %cst {dimension_numbers = #tpu.dot_dimension_numbers<[1], [0], [0], [1], [0, 0, 1, 1], [], []>} : vector<32x8xf32>, vector<8x384xf32>, vector<32x384xf32> -> vector<32x384xf32>
    %c0_3 = arith.constant 0 : index
    %c0_4 = arith.constant 0 : index
    %3 = vector.load %arg3[%c0_3, %c0_4] : memref<32x1xf32, #tpu.memory_space<vmem>>, vector<32x1xf32>
    %4 = vector.broadcast %3 : vector<32x1xf32> to vector<32x384xf32>
    %5 = arith.addf %2, %4 : vector<32x384xf32>
    %c0_5 = arith.constant 0 : index
    %c0_6 = arith.constant 0 : index
    %6 = vector.load %arg4[%c0_5, %c0_6] : memref<32x384xf32, #tpu.memory_space<vmem>>, vector<32x384xf32>
    %7 = arith.addf %5, %6 : vector<32x384xf32>
    %c0_7 = arith.constant 0 : index
    %c0_8 = arith.constant 0 : index
    %8 = vector.load %arg5[%c0_7, %c0_8] : memref<32x384xf32, #tpu.memory_space<vmem>>, vector<32x384xf32>
    tpu.vector_store %arg5[%c0_7, %c0_8], %7 {strides = array<i32>} : memref<32x384xf32, #tpu.memory_space<vmem>>, vector<32x384xf32>,
    return
  }
  func.func @transform_0(%arg0: i32) -> (i32, i32) {
    %c0_i32 = arith.constant 0 : i32
    %c0_i32_0 = arith.constant 0 : i32
    %c0_i32_1 = arith.constant 0 : i32
    return %c0_i32, %c0_i32_0 : i32, i32
  }
  func.func @transform_1(%arg0: i32) -> (i32, i32) {
    %c0_i32 = arith.constant 0 : i32
    %c0_i32_0 = arith.constant 0 : i32
    return %c0_i32, %arg0 : i32, i32
  }
  func.func @transform_2(%arg0: i32) -> (i32, i32) {
    %c0_i32 = arith.constant 0 : i32
    %c0_i32_0 = arith.constant 0 : i32
    %c0_i32_1 = arith.constant 0 : i32
    return %c0_i32, %c0_i32_0 : i32, i32
  }
  func.func @transform_3(%arg0: i32) -> (i32, i32) {
    %c0_i32 = arith.constant 0 : i32
    %c0_i32_0 = arith.constant 0 : i32
    return %c0_i32, %arg0 : i32, i32
  }
  func.func @transform_4(%arg0: i32) -> (i32, i32) {
    %c0_i32 = arith.constant 0 : i32
    %c0_i32_0 = arith.constant 0 : i32
    return %c0_i32, %arg0 : i32, i32
  }
}

</mosaic_0001>

<llo_original>
// kernel: sparse_feature_pyramid.9
$region0: #{sparse_feature_pyramid.9}
  #allocation0 [shape = 'u32[]', space=smem, size = 0x4, offset = 0x4, fixed_abs, tag = 'smem constant byte address 0x4 - core index']
  #allocation1 [shape = 'u32[144,128]{1,0:T(1,128)}', space=vmem, size = 0x12000, scoped, tag = 'internal scratch']
  %s0 = inlined_call_operand.vmem [shape: f32[8,36], index: 0, kind: input, shape index: {}]
  %s1 = inlined_call_operand.vmem [shape: f32[36,384], index: 1, kind: input, shape index: {}]
  %s2 = inlined_call_operand.vmem [shape: f32[8,1], index: 2, kind: input, shape index: {}]
  %s3 = inlined_call_operand.vmem [shape: f32[8,384], index: 3, kind: output, shape index: {}]
  %s4 = sld [smem:[#allocation0]]
  $region22: #{sparse_feature_pyramid.9} parent=0
    _
  %s6 = ssub.s32 1, %s4
  %s7 = scalar_select 0, %s6, %s4
  // Predicated region
  $region2: #{sparse_feature_pyramid.9} parent=0 // pred_check
    _
  $region3: #{sparse_feature_pyramid.9} parent=0 // pred_check_branch
    %9 = sbr.rel (0) target = $region5
  $region4: #{sparse_feature_pyramid.9} parent=0 // pred_region
    _
  $region5: #{sparse_feature_pyramid.9} parent=0 // pred_fallthru
    _
  // Predicated region
  $region6: #{sparse_feature_pyramid.9} parent=0 // pred_check
    _
  $region7: #{sparse_feature_pyramid.9} parent=0 // pred_check_branch
    %11 = sbr.rel (0) target = $region9
  $region8: #{sparse_feature_pyramid.9} parent=0 // pred_region
    _
  $region9: #{sparse_feature_pyramid.9} parent=0 // pred_fallthru
    _
  // Predicated region
  $region10: #{sparse_feature_pyramid.9} parent=0 // pred_check
    _
  $region11: #{sparse_feature_pyramid.9} parent=0 // pred_check_branch
    %13 = sbr.rel (0) target = $region13
  $region12: #{sparse_feature_pyramid.9} parent=0 // pred_region
    _
  $region13: #{sparse_feature_pyramid.9} parent=0 // pred_fallthru
    _
  %v14 = vld [vmem:[%s0] sm:$0xff]
  %v15 = vld [vmem:[%s1] sm:$0xff]
  %v16 = vld [vmem:[%s1 + $0x8] sm:$0xff]
  %v17 = vld [vmem:[%s1 + $0x10] sm:$0xff]
  %v18 = vld [vmem:[%s1 + $0x18] sm:$0xff]
  %v19 = vld [vmem:[%s1 + $0x20] sm:$0xff]
  %v20 = vld [vmem:[%s1 + $0x28] sm:$0xff]
  %v21 = vld [vmem:[%s1 + $0x30] sm:$0xff]
  %v22 = vld [vmem:[%s1 + $0x38] sm:$0xff]
  %v23 = vld [vmem:[%s1 + $0x40] sm:$0xff]
  %v24 = vld [vmem:[%s1 + $0x48] sm:$0xff]
  %v25 = vld [vmem:[%s1 + $0x50] sm:$0xff]
  %v26 = vld [vmem:[%s1 + $0x58] sm:$0xff]
  %v27 = vld [vmem:[%s1 + $0x60] sm:$0xf]
  %v28 = vld [vmem:[%s1 + $0x68] sm:$0xf]
  %v29 = vld [vmem:[%s1 + $0x70] sm:$0xf]
  %v30 = vld [vmem:[%s2] sm:$0xff]
  %32 = vset.pattern.permute.xlu0 0
  %33 = vperm.xlu0 %32, %v30
  %v34 = vpop.permute.xlu0 %33
  %vm36 = vcmask 293888
  %v38 = vsel %vm36, %v14, 0
  %vm40 = vcmask 1043456
  %v42 = vsel %vm40, %v27, 0
  %v45 = vsel %vm40, %v28, 0
  %v48 = vsel %vm40, %v29, 0
  %50 = vmatprep.subr.mxu0 0.0
  %51 = vmatpush1.msra.mxu0 0.0
  %52 = vmatprep.subr.mxu0 0.0
  %53 = vmatpush1.msra.mxu0 0.0
  %54 = vmatprep.subr.mxu0 0.0
  %55 = vmatpush1.msra.mxu0 0.0
  %56 = vmatprep.subr.mxu0 0.0
  %57 = vmatpush1.msra.mxu0 0.0
  %58 = vmatprep.subr.mxu0 0.0
  %59 = vmatpush1.msra.mxu0 0.0
  %60 = vmatprep.subr.mxu0 0.0
  %61 = vmatpush1.msra.mxu0 0.0
  %62 = vmatprep.subr.mxu0 0.0
  %63 = vmatpush1.msra.mxu0 0.0
  %64 = vmatprep.subr.mxu0 0.0
  %65 = vmatpush1.msra.mxu0 0.0
  %66 = vmatprep.subr.mxu0 0.0
  %67 = vmatpush1.msra.mxu0 0.0
  %68 = vmatprep.subr.mxu0 0.0
  %69 = vmatpush1.msra.mxu0 0.0
  %70 = vmatprep.subr.mxu0 0.0
  %71 = vmatpush1.msra.mxu0 0.0
  %72 = vmatprep.subr.mxu0 %v45
  %73 = vmatpush1.msra.mxu0 %v42
  %74 = vmatprep.subr.mxu0 %v25
  %75 = vmatpush1.msra.mxu0 %v24
  %76 = vmatprep.subr.mxu0 %v22
  %77 = vmatpush1.msra.mxu0 %v21
  %78 = vmatprep.subr.mxu0 %v19
  %79 = vmatpush1.msra.mxu0 %v18
  %80 = vmatprep.subr.mxu0 %v16
  %81 = vmatpush1.msra.mxu0 %v15
  %82 = vmatprep.subr.mxu0 0.0
  %83 = vmatpush2.msra.mxu0 0.0
  %84 = vmatprep.subr.mxu0 0.0
  %85 = vmatpush2.msra.mxu0 0.0
  %86 = vmatprep.subr.mxu0 0.0
  %87 = vmatpush2.msra.mxu0 0.0
  %88 = vmatprep.subr.mxu0 0.0
  %89 = vmatpush2.msra.mxu0 0.0
  %90 = vmatprep.subr.mxu0 0.0
  %91 = vmatpush2.msra.mxu0 0.0
  %92 = vmatprep.subr.mxu0 0.0
  %93 = vmatpush2.msra.mxu0 0.0
  %94 = vmatprep.subr.mxu0 0.0
  %95 = vmatpush2.msra.mxu0 0.0
  %96 = vmatprep.subr.mxu0 0.0
  %97 = vmatpush2.msra.mxu0 0.0
  %98 = vmatprep.subr.mxu0 0.0
  %99 = vmatpush2.msra.mxu0 0.0
  %100 = vmatprep.subr.mxu0 0.0
  %101 = vmatpush2.msra.mxu0 0.0
  %102 = vmatprep.subr.mxu0 0.0
  %103 = vmatpush2.msra.mxu0 0.0
  %104 = vmatprep.subr.mxu0 0.0
  %105 = vmatpush2.msra.mxu0 0.0
  %106 = vmatprep.subr.mxu0 0.0
  %107 = vmatpush2.msra.mxu0 0.0
  %108 = vmatprep.subr.mxu0 0.0
  %109 = vmatpush2.msra.mxu0 0.0
  %110 = vmatprep.subr.mxu0 0.0
  %111 = vmatpush2.msra.mxu0 0.0
  %112 = vmatprep.subr.mxu0 0.0
  %113 = vmatpush2.msra.mxu0 0.0
  %114 = vmatprep.mubr.f32.mxu0 0.0
  %115 = vmatmul.mubr.f32.gmra.mxu0 %v38
  %v116 = vpop.f32.mrf.mxu0
  %v117 = vadd.f32 %v34, %v116
  %v118 = vpop.f32.mrf.mxu0
  %v119 = vadd.f32 %v34, %v118
  %120 = vdwg.mxu0
  %121 = vmatprep.subr.mxu0 0.0
  %122 = vmatpush1.msra.mxu0 0.0
  %123 = vmatprep.subr.mxu0 0.0
  %124 = vmatpush1.msra.mxu0 0.0
  %125 = vmatprep.subr.mxu0 0.0
  %126 = vmatpush1.msra.mxu0 0.0
  %127 = vmatprep.subr.mxu0 0.0
  %128 = vmatpush1.msra.mxu0 0.0
  %129 = vmatprep.subr.mxu0 0.0
  %130 = vmatpush1.msra.mxu0 0.0
  %131 = vmatprep.subr.mxu0 0.0
  %132 = vmatpush1.msra.mxu0 0.0
  %133 = vmatprep.subr.mxu0 0.0
  %134 = vmatpush1.msra.mxu0 0.0
  %135 = vmatprep.subr.mxu0 0.0
  %136 = vmatpush1.msra.mxu0 0.0
  %137 = vmatprep.subr.mxu0 0.0
  %138 = vmatpush1.msra.mxu0 0.0
  %139 = vmatprep.subr.mxu0 0.0
  %140 = vmatpush1.msra.mxu0 0.0
  %141 = vmatprep.subr.mxu0 0.0
  %142 = vmatpush1.msra.mxu0 0.0
  %143 = vmatprep.subr.mxu0 0.0
  %144 = vmatpush1.msra.mxu0 %v48
  %145 = vmatprep.subr.mxu0 0.0
  %146 = vmatpush1.msra.mxu0 %v26
  %147 = vmatprep.subr.mxu0 0.0
  %148 = vmatpush1.msra.mxu0 %v23
  %149 = vmatprep.subr.mxu0 0.0
  %150 = vmatpush1.msra.mxu0 %v20
  %151 = vmatprep.subr.mxu0 0.0
  %152 = vmatpush1.msra.mxu0 %v17
  %153 = vmatprep.subr.mxu0 0.0
  %154 = vmatpush2.msra.mxu0 0.0
  %155 = vmatprep.subr.mxu0 0.0
  %156 = vmatpush2.msra.mxu0 0.0
  %157 = vmatprep.subr.mxu0 0.0
  %158 = vmatpush2.msra.mxu0 0.0
  %159 = vmatprep.subr.mxu0 0.0
  %160 = vmatpush2.msra.mxu0 0.0
  %161 = vmatprep.subr.mxu0 0.0
  %162 = vmatpush2.msra.mxu0 0.0
  %163 = vmatprep.subr.mxu0 0.0
  %164 = vmatpush2.msra.mxu0 0.0
  %165 = vmatprep.subr.mxu0 0.0
  %166 = vmatpush2.msra.mxu0 0.0
  %167 = vmatprep.subr.mxu0 0.0
  %168 = vmatpush2.msra.mxu0 0.0
  %169 = vmatprep.subr.mxu0 0.0
  %170 = vmatpush2.msra.mxu0 0.0
  %171 = vmatprep.subr.mxu0 0.0
  %172 = vmatpush2.msra.mxu0 0.0
  %173 = vmatprep.subr.mxu0 0.0
  %174 = vmatpush2.msra.mxu0 0.0
  %175 = vmatprep.subr.mxu0 0.0
  %176 = vmatpush2.msra.mxu0 0.0
  %177 = vmatprep.subr.mxu0 0.0
  %178 = vmatpush2.msra.mxu0 0.0
  %179 = vmatprep.subr.mxu0 0.0
  %180 = vmatpush2.msra.mxu0 0.0
  %181 = vmatprep.subr.mxu0 0.0
  %182 = vmatpush2.msra.mxu0 0.0
  %183 = vmatprep.subr.mxu0 0.0
  %184 = vmatpush2.msra.mxu0 0.0
  %185 = vmatprep.mubr.f32.mxu0 0.0
  %186 = vmatmul.mubr.f32.gmra.mxu0 %v38
  %v187 = vpop.f32.mrf.mxu0
  %v188 = vadd.f32 %v34, %v187
  %v189 = vpop.f32.mrf.mxu0
  %190 = vdwg.mxu0
  %191 = vst [vmem:[%s3] sm:$0xff] %v117
  %192 = vst [vmem:[%s3 + $0x8] sm:$0xff] %v119
  %193 = vst [vmem:[%s3 + $0x10] sm:$0xff] %v188
  // Predicated region
  $region14: #{sparse_feature_pyramid.9} parent=0 // pred_check
    _
  $region15: #{sparse_feature_pyramid.9} parent=0 // pred_check_branch
    %195 = sbr.rel (0) target = $region17
  $region16: #{sparse_feature_pyramid.9} parent=0 // pred_region
    _
  $region17: #{sparse_feature_pyramid.9} parent=0 // pred_fallthru
    _
  // Predicated region
  $region18: #{sparse_feature_pyramid.9} parent=0 // pred_check
    _
  $region19: #{sparse_feature_pyramid.9} parent=0 // pred_check_branch
    %197 = sbr.rel (0) target = $region21
  $region20: #{sparse_feature_pyramid.9} parent=0 // pred_region
    _
  $region21: #{sparse_feature_pyramid.9} parent=0 // pred_fallthru
    _

// kernel: sparse_feature_pyramid.10
$region0: #{sparse_feature_pyramid.10}
  #allocation0 [shape = 'u32[]', space=smem, size = 0x4, offset = 0x4, fixed_abs, tag = 'smem constant byte address 0x4 - core index']
  #allocation1 [shape = 'u32[144,128]{1,0:T(1,128)}', space=vmem, size = 0x12000, scoped, tag = 'internal scratch']
  %s0 = inlined_call_operand.vmem [shape: f32[16,72], index: 0, kind: input, shape index: {}]
  %s1 = inlined_call_operand.vmem [shape: f32[72,96], index: 1, kind: input, shape index: {}]
  %s2 = inlined_call_operand.vmem [shape: f32[16,1], index: 2, kind: input, shape index: {}]
  %s3 = inlined_call_operand.vmem [shape: f32[16,96], index: 3, kind: output, shape index: {}]
  %s4 = sld [smem:[#allocation0]]
  $region22: #{sparse_feature_pyramid.10} parent=0
    _
  %s6 = ssub.s32 1, %s4
  %s7 = scalar_select 0, %s6, %s4
  // Predicated region
  $region2: #{sparse_feature_pyramid.10} parent=0 // pred_check
    _
  $region3: #{sparse_feature_pyramid.10} parent=0 // pred_check_branch
    %9 = sbr.rel (0) target = $region5
  $region4: #{sparse_feature_pyramid.10} parent=0 // pred_region
    _
  $region5: #{sparse_feature_pyramid.10} parent=0 // pred_fallthru
    _
  // Predicated region
  $region6: #{sparse_feature_pyramid.10} parent=0 // pred_check
    _
  $region7: #{sparse_feature_pyramid.10} parent=0 // pred_check_branch
    %11 = sbr.rel (0) target = $region9
  $region8: #{sparse_feature_pyramid.10} parent=0 // pred_region
    _
  $region9: #{sparse_feature_pyramid.10} parent=0 // pred_fallthru
    _
  // Predicated region
  $region10: #{sparse_feature_pyramid.10} parent=0 // pred_check
    _
  $region11: #{sparse_feature_pyramid.10} parent=0 // pred_check_branch
    %13 = sbr.rel (0) target = $region13
  $region12: #{sparse_feature_pyramid.10} parent=0 // pred_region
    _
  $region13: #{sparse_feature_pyramid.10} parent=0 // pred_fallthru
    _
  %v14 = vld [vmem:[%s0] sm:$0xff]
  %v15 = vld [vmem:[%s0 + $0x8] sm:$0xff]
  %v16 = vld [vmem:[%s1] sm:$0xff]
  %v17 = vld [vmem:[%s1 + $0x8] sm:$0xff]
  %v18 = vld [vmem:[%s1 + $0x10] sm:$0xff]
  %v19 = vld [vmem:[%s1 + $0x18] sm:$0xff]
  %v20 = vld [vmem:[%s1 + $0x20] sm:$0xff]
  %v21 = vld [vmem:[%s1 + $0x28] sm:$0xff]
  %v22 = vld [vmem:[%s1 + $0x30] sm:$0xff]
  %v23 = vld [vmem:[%s1 + $0x38] sm:$0xff]
  %v24 = vld [vmem:[%s1 + $0x40] sm:$0xff]
  %v25 = vld [vmem:[%s2] sm:$0xff]
  %v26 = vld [vmem:[%s2 + $0x8] sm:$0xff]
  %28 = vset.pattern.permute.xlu0 0
  %29 = vperm.xlu0 %28, %v25
  %v30 = vpop.permute.xlu0 %29
  %33 = vset.pattern.permute.xlu0 0
  %34 = vperm.xlu0 %33, %v26
  %v35 = vpop.permute.xlu0 %34
  %vm37 = vcmask 588800
  %v39 = vsel %vm37, %v14, 0
  %v42 = vsel %vm37, %v15, 0
  %44 = vmatprep.subr.mxu0 0.0
  %45 = vmatpush1.msra.mxu0 0.0
  %46 = vmatprep.subr.mxu0 0.0
  %47 = vmatpush1.msra.mxu0 0.0
  %48 = vmatprep.subr.mxu0 0.0
  %49 = vmatpush1.msra.mxu0 0.0
  %50 = vmatprep.subr.mxu0 0.0
  %51 = vmatpush1.msra.mxu0 0.0
  %52 = vmatprep.subr.mxu0 0.0
  %53 = vmatpush1.msra.mxu0 0.0
  %54 = vmatprep.subr.mxu0 0.0
  %55 = vmatpush1.msra.mxu0 0.0
  %56 = vmatprep.subr.mxu0 0.0
  %57 = vmatpush1.msra.mxu0 0.0
  %58 = vmatprep.subr.mxu0 0.0
  %59 = vmatpush1.msra.mxu0 %v24
  %60 = vmatprep.subr.mxu0 0.0
  %61 = vmatpush1.msra.mxu0 %v23
  %62 = vmatprep.subr.mxu0 0.0
  %63 = vmatpush1.msra.mxu0 %v22
  %64 = vmatprep.subr.mxu0 0.0
  %65 = vmatpush1.msra.mxu0 %v21
  %66 = vmatprep.subr.mxu0 0.0
  %67 = vmatpush1.msra.mxu0 %v20
  %68 = vmatprep.subr.mxu0 0.0
  %69 = vmatpush1.msra.mxu0 %v19
  %70 = vmatprep.subr.mxu0 0.0
  %71 = vmatpush1.msra.mxu0 %v18
  %72 = vmatprep.subr.mxu0 0.0
  %73 = vmatpush1.msra.mxu0 %v17
  %74 = vmatprep.subr.mxu0 0.0
  %75 = vmatpush1.msra.mxu0 %v16
  %76 = vmatprep.subr.mxu0 0.0
  %77 = vmatpush2.msra.mxu0 0.0
  %78 = vmatprep.subr.mxu0 0.0
  %79 = vmatpush2.msra.mxu0 0.0
  %80 = vmatprep.subr.mxu0 0.0
  %81 = vmatpush2.msra.mxu0 0.0
  %82 = vmatprep.subr.mxu0 0.0
  %83 = vmatpush2.msra.mxu0 0.0
  %84 = vmatprep.subr.mxu0 0.0
  %85 = vmatpush2.msra.mxu0 0.0
  %86 = vmatprep.subr.mxu0 0.0
  %87 = vmatpush2.msra.mxu0 0.0
  %88 = vmatprep.subr.mxu0 0.0
  %89 = vmatpush2.msra.mxu0 0.0
  %90 = vmatprep.subr.mxu0 0.0
  %91 = vmatpush2.msra.mxu0 0.0
  %92 = vmatprep.subr.mxu0 0.0
  %93 = vmatpush2.msra.mxu0 0.0
  %94 = vmatprep.subr.mxu0 0.0
  %95 = vmatpush2.msra.mxu0 0.0
  %96 = vmatprep.subr.mxu0 0.0
  %97 = vmatpush2.msra.mxu0 0.0
  %98 = vmatprep.subr.mxu0 0.0
  %99 = vmatpush2.msra.mxu0 0.0
  %100 = vmatprep.subr.mxu0 0.0
  %101 = vmatpush2.msra.mxu0 0.0
  %102 = vmatprep.subr.mxu0 0.0
  %103 = vmatpush2.msra.mxu0 0.0
  %104 = vmatprep.subr.mxu0 0.0
  %105 = vmatpush2.msra.mxu0 0.0
  %106 = vmatprep.subr.mxu0 0.0
  %107 = vmatpush2.msra.mxu0 0.0
  %108 = vmatprep.mubr.f32.mxu0 0.0
  %109 = vmatmul.mubr.f32.gmra.mxu0 %v39
  %v110 = vpop.f32.mrf.mxu0
  %v111 = vadd.f32 %v30, %v110
  %v112 = vpop.f32.mrf.mxu0
  %113 = vmatprep.mubr.f32.mxu0 0.0
  %114 = vmatmul.mubr.f32.gmra.mxu0 %v42
  %v115 = vpop.f32.mrf.mxu0
  %v116 = vadd.f32 %v35, %v115
  %v117 = vpop.f32.mrf.mxu0
  %118 = vdwg.mxu0
  %vm119 = vcmask 785408
  %120 = vst.msk [vmem:[%s3] sm:$0xff] %vm119, %v111
  %121 = vst.msk [vmem:[%s3 + $0x8] sm:$0xff] %vm119, %v116
  // Predicated region
  $region14: #{sparse_feature_pyramid.10} parent=0 // pred_check
    _
  $region15: #{sparse_feature_pyramid.10} parent=0 // pred_check_branch
    %123 = sbr.rel (0) target = $region17
  $region16: #{sparse_feature_pyramid.10} parent=0 // pred_region
    _
  $region17: #{sparse_feature_pyramid.10} parent=0 // pred_fallthru
    _
  // Predicated region
  $region18: #{sparse_feature_pyramid.10} parent=0 // pred_check
    _
  $region19: #{sparse_feature_pyramid.10} parent=0 // pred_check_branch
    %125 = sbr.rel (0) target = $region21
  $region20: #{sparse_feature_pyramid.10} parent=0 // pred_region
    _
  $region21: #{sparse_feature_pyramid.10} parent=0 // pred_fallthru
    _

// kernel: sparse_feature_pyramid.11
$region0: #{sparse_feature_pyramid.11}
  #allocation0 [shape = 'u32[]', space=smem, size = 0x4, offset = 0x4, fixed_abs, tag = 'smem constant byte address 0x4 - core index']
  #allocation1 [shape = 'u32[144,128]{1,0:T(1,128)}', space=vmem, size = 0x12000, scoped, tag = 'internal scratch']
  %s0 = inlined_call_operand.vmem [shape: f32[32,144], index: 0, kind: input, shape index: {}]
  %s1 = inlined_call_operand.vmem [shape: f32[144,24], index: 1, kind: input, shape index: {}]
  %s2 = inlined_call_operand.vmem [shape: f32[32,1], index: 2, kind: input, shape index: {}]
  %s3 = inlined_call_operand.vmem [shape: f32[32,24], index: 3, kind: output, shape index: {}]
  %s4 = sld [smem:[#allocation0]]
  $region22: #{sparse_feature_pyramid.11} parent=0
    _
  %s6 = ssub.s32 1, %s4
  %s7 = scalar_select 0, %s6, %s4
  // Predicated region
  $region2: #{sparse_feature_pyramid.11} parent=0 // pred_check
    _
  $region3: #{sparse_feature_pyramid.11} parent=0 // pred_check_branch
    %9 = sbr.rel (0) target = $region5
  $region4: #{sparse_feature_pyramid.11} parent=0 // pred_region
    _
  $region5: #{sparse_feature_pyramid.11} parent=0 // pred_fallthru
    _
  // Predicated region
  $region6: #{sparse_feature_pyramid.11} parent=0 // pred_check
    _
  $region7: #{sparse_feature_pyramid.11} parent=0 // pred_check_branch
    %11 = sbr.rel (0) target = $region9
  $region8: #{sparse_feature_pyramid.11} parent=0 // pred_region
    _
  $region9: #{sparse_feature_pyramid.11} parent=0 // pred_fallthru
    _
  // Predicated region
  $region10: #{sparse_feature_pyramid.11} parent=0 // pred_check
    _
  $region11: #{sparse_feature_pyramid.11} parent=0 // pred_check_branch
    %13 = sbr.rel (0) target = $region13
  $region12: #{sparse_feature_pyramid.11} parent=0 // pred_region
    _
  $region13: #{sparse_feature_pyramid.11} parent=0 // pred_fallthru
    _
  %v14 = vld [vmem:[%s0] sm:$0xff]
  %v15 = vld [vmem:[%s0 + $0x8] sm:$0xff]
  %v16 = vld [vmem:[%s0 + $0x10] sm:$0xff]
  %v17 = vld [vmem:[%s0 + $0x18] sm:$0xff]
  %v18 = vld [vmem:[%s0 + $0x20] sm:$0xff]
  %v19 = vld [vmem:[%s0 + $0x28] sm:$0xff]
  %v20 = vld [vmem:[%s0 + $0x30] sm:$0xff]
  %v21 = vld [vmem:[%s0 + $0x38] sm:$0xff]
  %v22 = vld [vmem:[%s1] sm:$0xff]
  %v23 = vld [vmem:[%s1 + $0x8] sm:$0xff]
  %v24 = vld [vmem:[%s1 + $0x10] sm:$0xff]
  %v25 = vld [vmem:[%s1 + $0x18] sm:$0xff]
  %v26 = vld [vmem:[%s1 + $0x20] sm:$0xff]
  %v27 = vld [vmem:[%s1 + $0x28] sm:$0xff]
  %v28 = vld [vmem:[%s1 + $0x30] sm:$0xff]
  %v29 = vld [vmem:[%s1 + $0x38] sm:$0xff]
  %v30 = vld [vmem:[%s1 + $0x40] sm:$0xff]
  %v31 = vld [vmem:[%s1 + $0x48] sm:$0xff]
  %v32 = vld [vmem:[%s1 + $0x50] sm:$0xff]
  %v33 = vld [vmem:[%s1 + $0x58] sm:$0xff]
  %v34 = vld [vmem:[%s1 + $0x60] sm:$0xff]
  %v35 = vld [vmem:[%s1 + $0x68] sm:$0xff]
  %v36 = vld [vmem:[%s1 + $0x70] sm:$0xff]
  %v37 = vld [vmem:[%s1 + $0x78] sm:$0xff]
  %v38 = vld [vmem:[%s1 + $0x80] sm:$0xff]
  %v39 = vld [vmem:[%s1 + $0x88] sm:$0xff]
  %v40 = vld [vmem:[%s2] sm:$0xff]
  %v41 = vld [vmem:[%s2 + $0x8] sm:$0xff]
  %v42 = vld [vmem:[%s2 + $0x10] sm:$0xff]
  %v43 = vld [vmem:[%s2 + $0x18] sm:$0xff]
  %45 = vset.pattern.permute.xlu0 0
  %46 = vperm.xlu0 %45, %v40
  %v47 = vpop.permute.xlu0 %46
  %50 = vset.pattern.permute.xlu0 0
  %51 = vperm.xlu0 %50, %v41
  %v52 = vpop.permute.xlu0 %51
  %55 = vset.pattern.permute.xlu0 0
  %56 = vperm.xlu0 %55, %v42
  %v57 = vpop.permute.xlu0 %56
  %60 = vset.pattern.permute.xlu0 0
  %61 = vperm.xlu0 %60, %v43
  %v62 = vpop.permute.xlu0 %61
  %vm64 = vcmask 130048
  %v66 = vsel %vm64, %v15, 0
  %v69 = vsel %vm64, %v17, 0
  %v72 = vsel %vm64, %v19, 0
  %v75 = vsel %vm64, %v21, 0
  %77 = vmatprep.subr.mxu0 0.0
  %78 = vmatpush1.msra.mxu0 %v37
  %79 = vmatprep.subr.mxu0 0.0
  %80 = vmatpush1.msra.mxu0 %v36
  %81 = vmatprep.subr.mxu0 0.0
  %82 = vmatpush1.msra.mxu0 %v35
  %83 = vmatprep.subr.mxu0 0.0
  %84 = vmatpush1.msra.mxu0 %v34
  %85 = vmatprep.subr.mxu0 0.0
  %86 = vmatpush1.msra.mxu0 %v33
  %87 = vmatprep.subr.mxu0 0.0
  %88 = vmatpush1.msra.mxu0 %v32
  %89 = vmatprep.subr.mxu0 0.0
  %90 = vmatpush1.msra.mxu0 %v31
  %91 = vmatprep.subr.mxu0 0.0
  %92 = vmatpush1.msra.mxu0 %v30
  %93 = vmatprep.subr.mxu0 0.0
  %94 = vmatpush1.msra.mxu0 %v29
  %95 = vmatprep.subr.mxu0 0.0
  %96 = vmatpush1.msra.mxu0 %v28
  %97 = vmatprep.subr.mxu0 0.0
  %98 = vmatpush1.msra.mxu0 %v27
  %99 = vmatprep.subr.mxu0 0.0
  %100 = vmatpush1.msra.mxu0 %v26
  %101 = vmatprep.subr.mxu0 0.0
  %102 = vmatpush1.msra.mxu0 %v25
  %103 = vmatprep.subr.mxu0 0.0
  %104 = vmatpush1.msra.mxu0 %v24
  %105 = vmatprep.subr.mxu0 0.0
  %106 = vmatpush1.msra.mxu0 %v23
  %107 = vmatprep.subr.mxu0 0.0
  %108 = vmatpush1.msra.mxu0 %v22
  %109 = vmatprep.subr.mxu0 0.0
  %110 = vmatpush2.msra.mxu0 0.0
  %111 = vmatprep.subr.mxu0 0.0
  %112 = vmatpush2.msra.mxu0 0.0
  %113 = vmatprep.subr.mxu0 0.0
  %114 = vmatpush2.msra.mxu0 0.0
  %115 = vmatprep.subr.mxu0 0.0
  %116 = vmatpush2.msra.mxu0 0.0
  %117 = vmatprep.subr.mxu0 0.0
  %118 = vmatpush2.msra.mxu0 0.0
  %119 = vmatprep.subr.mxu0 0.0
  %120 = vmatpush2.msra.mxu0 0.0
  %121 = vmatprep.subr.mxu0 0.0
  %122 = vmatpush2.msra.mxu0 0.0
  %123 = vmatprep.subr.mxu0 0.0
  %124 = vmatpush2.msra.mxu0 0.0
  %125 = vmatprep.subr.mxu0 0.0
  %126 = vmatpush2.msra.mxu0 0.0
  %127 = vmatprep.subr.mxu0 0.0
  %128 = vmatpush2.msra.mxu0 0.0
  %129 = vmatprep.subr.mxu0 0.0
  %130 = vmatpush2.msra.mxu0 0.0
  %131 = vmatprep.subr.mxu0 0.0
  %132 = vmatpush2.msra.mxu0 0.0
  %133 = vmatprep.subr.mxu0 0.0
  %134 = vmatpush2.msra.mxu0 0.0
  %135 = vmatprep.subr.mxu0 0.0
  %136 = vmatpush2.msra.mxu0 0.0
  %137 = vmatprep.subr.mxu0 0.0
  %138 = vmatpush2.msra.mxu0 %v39
  %139 = vmatprep.subr.mxu0 0.0
  %140 = vmatpush2.msra.mxu0 %v38
  %141 = vmatprep.mubr.f32.mxu0 %v66
  %142 = vmatmul.mubr.f32.gmra.mxu0 %v14
  %v143 = vpop.f32.mrf.mxu0
  %v144 = vadd.f32 %v47, %v143
  %v145 = vpop.f32.mrf.mxu0
  %146 = vmatprep.mubr.f32.mxu0 %v69
  %147 = vmatmul.mubr.f32.gmra.mxu0 %v16
  %v148 = vpop.f32.mrf.mxu0
  %v149 = vadd.f32 %v52, %v148
  %v150 = vpop.f32.mrf.mxu0
  %151 = vmatprep.mubr.f32.mxu0 %v72
  %152 = vmatmul.mubr.f32.gmra.mxu0 %v18
  %v153 = vpop.f32.mrf.mxu0
  %v154 = vadd.f32 %v57, %v153
  %v155 = vpop.f32.mrf.mxu0
  %156 = vmatprep.mubr.f32.mxu0 %v75
  %157 = vmatmul.mubr.f32.gmra.mxu0 %v20
  %v158 = vpop.f32.mrf.mxu0
  %v159 = vadd.f32 %v62, %v158
  %v160 = vpop.f32.mrf.mxu0
  %161 = vdwg.mxu0
  %vm162 = vcmask 195584
  %163 = vst.msk [vmem:[%s3] sm:$0xff] %vm162, %v144
  %164 = vst.msk [vmem:[%s3 + $0x8] sm:$0xff] %vm162, %v149
  %165 = vst.msk [vmem:[%s3 + $0x10] sm:$0xff] %vm162, %v154
  %166 = vst.msk [vmem:[%s3 + $0x18] sm:$0xff] %vm162, %v159
  // Predicated region
  $region14: #{sparse_feature_pyramid.11} parent=0 // pred_check
    _
  $region15: #{sparse_feature_pyramid.11} parent=0 // pred_check_branch
    %168 = sbr.rel (0) target = $region17
  $region16: #{sparse_feature_pyramid.11} parent=0 // pred_region
    _
  $region17: #{sparse_feature_pyramid.11} parent=0 // pred_fallthru
    _
  // Predicated region
  $region18: #{sparse_feature_pyramid.11} parent=0 // pred_check
    _
  $region19: #{sparse_feature_pyramid.11} parent=0 // pred_check_branch
    %170 = sbr.rel (0) target = $region21
  $region20: #{sparse_feature_pyramid.11} parent=0 // pred_region
    _
  $region21: #{sparse_feature_pyramid.11} parent=0 // pred_fallthru
    _

// kernel: sparse_feature_pyramid.12
$region0: #{sparse_feature_pyramid.12}
  #allocation0 [shape = 'u32[]', space=smem, size = 0x4, offset = 0x4, fixed_abs, tag = 'smem constant byte address 0x4 - core index']
  #allocation1 [shape = 'u32[144,128]{1,0:T(1,128)}', space=vmem, size = 0x12000, scoped, tag = 'internal scratch']
  %s0 = inlined_call_operand.vmem [shape: f32[384,2], index: 0, kind: input, shape index: {}]
  %s1 = inlined_call_operand.vmem [shape: f32[2,4], index: 1, kind: input, shape index: {}]
  %s2 = inlined_call_operand.vmem [shape: f32[384,4], index: 2, kind: output, shape index: {}]
  %s3 = sld [smem:[#allocation0]]
  $region18: #{sparse_feature_pyramid.12} parent=0
    _
  %s5 = ssub.s32 1, %s3
  %s6 = scalar_select 0, %s5, %s3
  // Predicated region
  $region2: #{sparse_feature_pyramid.12} parent=0 // pred_check
    _
  $region3: #{sparse_feature_pyramid.12} parent=0 // pred_check_branch
    %8 = sbr.rel (0) target = $region5
  $region4: #{sparse_feature_pyramid.12} parent=0 // pred_region
    _
  $region5: #{sparse_feature_pyramid.12} parent=0 // pred_fallthru
    _
  // Predicated region
  $region6: #{sparse_feature_pyramid.12} parent=0 // pred_check
    _
  $region7: #{sparse_feature_pyramid.12} parent=0 // pred_check_branch
    %10 = sbr.rel (0) target = $region9
  $region8: #{sparse_feature_pyramid.12} parent=0 // pred_region
    _
  $region9: #{sparse_feature_pyramid.12} parent=0 // pred_fallthru
    _
  %v11 = vld [vmem:[%s0] sm:$0xff]
  %v12 = vld [vmem:[%s0 + $0x8] sm:$0xff]
  %v13 = vld [vmem:[%s0 + $0x10] sm:$0xff]
  %v14 = vld [vmem:[%s0 + $0x18] sm:$0xff]
  %v15 = vld [vmem:[%s0 + $0x20] sm:$0xff]
  %v16 = vld [vmem:[%s0 + $0x28] sm:$0xff]
  %v17 = vld [vmem:[%s0 + $0x30] sm:$0xff]
  %v18 = vld [vmem:[%s0 + $0x38] sm:$0xff]
  %v19 = vld [vmem:[%s0 + $0x40] sm:$0xff]
  %v20 = vld [vmem:[%s0 + $0x48] sm:$0xff]
  %v21 = vld [vmem:[%s0 + $0x50] sm:$0xff]
  %v22 = vld [vmem:[%s0 + $0x58] sm:$0xff]
  %v23 = vld [vmem:[%s0 + $0x60] sm:$0xff]
  %v24 = vld [vmem:[%s0 + $0x68] sm:$0xff]
  %v25 = vld [vmem:[%s0 + $0x70] sm:$0xff]
  %v26 = vld [vmem:[%s0 + $0x78] sm:$0xff]
  %v27 = vld [vmem:[%s0 + $0x80] sm:$0xff]
  %v28 = vld [vmem:[%s0 + $0x88] sm:$0xff]
  %v29 = vld [vmem:[%s0 + $0x90] sm:$0xff]
  %v30 = vld [vmem:[%s0 + $0x98] sm:$0xff]
  %v31 = vld [vmem:[%s0 + $0xa0] sm:$0xff]
  %v32 = vld [vmem:[%s0 + $0xa8] sm:$0xff]
  %v33 = vld [vmem:[%s0 + $0xb0] sm:$0xff]
  %v34 = vld [vmem:[%s0 + $0xb8] sm:$0xff]
  %v35 = vld [vmem:[%s0 + $0xc0] sm:$0xff]
  %v36 = vld [vmem:[%s0 + $0xc8] sm:$0xff]
  %v37 = vld [vmem:[%s0 + $0xd0] sm:$0xff]
  %v38 = vld [vmem:[%s0 + $0xd8] sm:$0xff]
  %v39 = vld [vmem:[%s0 + $0xe0] sm:$0xff]
  %v40 = vld [vmem:[%s0 + $0xe8] sm:$0xff]
  %v41 = vld [vmem:[%s0 + $0xf0] sm:$0xff]
  %v42 = vld [vmem:[%s0 + $0xf8] sm:$0xff]
  %v43 = vld [vmem:[%s0 + $0x100] sm:$0xff]
  %v44 = vld [vmem:[%s0 + $0x108] sm:$0xff]
  %v45 = vld [vmem:[%s0 + $0x110] sm:$0xff]
  %v46 = vld [vmem:[%s0 + $0x118] sm:$0xff]
  %v47 = vld [vmem:[%s0 + $0x120] sm:$0xff]
  %v48 = vld [vmem:[%s0 + $0x128] sm:$0xff]
  %v49 = vld [vmem:[%s0 + $0x130] sm:$0xff]
  %v50 = vld [vmem:[%s0 + $0x138] sm:$0xff]
  %v51 = vld [vmem:[%s0 + $0x140] sm:$0xff]
  %v52 = vld [vmem:[%s0 + $0x148] sm:$0xff]
  %v53 = vld [vmem:[%s0 + $0x150] sm:$0xff]
  %v54 = vld [vmem:[%s0 + $0x158] sm:$0xff]
  %v55 = vld [vmem:[%s0 + $0x160] sm:$0xff]
  %v56 = vld [vmem:[%s0 + $0x168] sm:$0xff]
  %v57 = vld [vmem:[%s0 + $0x170] sm:$0xff]
  %v58 = vld [vmem:[%s0 + $0x178] sm:$0xff]
  %v59 = vld [vmem:[%s1] sm:$0x3]
  %vm60 = vcmask 15360
  %v62 = vsel %vm60, %v11, 0
  %v65 = vsel %vm60, %v12, 0
  %v68 = vsel %vm60, %v13, 0
  %v71 = vsel %vm60, %v14, 0
  %v74 = vsel %vm60, %v15, 0
  %v77 = vsel %vm60, %v16, 0
  %v80 = vsel %vm60, %v17, 0
  %v83 = vsel %vm60, %v18, 0
  %v86 = vsel %vm60, %v19, 0
  %v89 = vsel %vm60, %v20, 0
  %v92 = vsel %vm60, %v21, 0
  %v95 = vsel %vm60, %v22, 0
  %v98 = vsel %vm60, %v23, 0
  %v101 = vsel %vm60, %v24, 0
  %v104 = vsel %vm60, %v25, 0
  %v107 = vsel %vm60, %v26, 0
  %v110 = vsel %vm60, %v27, 0
  %v113 = vsel %vm60, %v28, 0
  %v116 = vsel %vm60, %v29, 0
  %v119 = vsel %vm60, %v30, 0
  %v122 = vsel %vm60, %v31, 0
  %v125 = vsel %vm60, %v32, 0
  %v128 = vsel %vm60, %v33, 0
  %v131 = vsel %vm60, %v34, 0
  %v134 = vsel %vm60, %v35, 0
  %v137 = vsel %vm60, %v36, 0
  %v140 = vsel %vm60, %v37, 0
  %v143 = vsel %vm60, %v38, 0
  %v146 = vsel %vm60, %v39, 0
  %v149 = vsel %vm60, %v40, 0
  %v152 = vsel %vm60, %v41, 0
  %v155 = vsel %vm60, %v42, 0
  %v158 = vsel %vm60, %v43, 0
  %v161 = vsel %vm60, %v44, 0
  %v164 = vsel %vm60, %v45, 0
  %v167 = vsel %vm60, %v46, 0
  %v170 = vsel %vm60, %v47, 0
  %v173 = vsel %vm60, %v48, 0
  %v176 = vsel %vm60, %v49, 0
  %v179 = vsel %vm60, %v50, 0
  %v182 = vsel %vm60, %v51, 0
  %v185 = vsel %vm60, %v52, 0
  %v188 = vsel %vm60, %v53, 0
  %v191 = vsel %vm60, %v54, 0
  %v194 = vsel %vm60, %v55, 0
  %v197 = vsel %vm60, %v56, 0
  %v200 = vsel %vm60, %v57, 0
  %v203 = vsel %vm60, %v58, 0
  %vm205 = vcmask 1041408
  %v207 = vsel %vm205, %v59, 0
  %209 = vmatprep.subr.mxu0 0.0
  %210 = vmatpush1.msra.mxu0 0.0
  %211 = vmatprep.subr.mxu0 0.0
  %212 = vmatpush1.msra.mxu0 0.0
  %213 = vmatprep.subr.mxu0 0.0
  %214 = vmatpush1.msra.mxu0 0.0
  %215 = vmatprep.subr.mxu0 0.0
  %216 = vmatpush1.msra.mxu0 0.0
  %217 = vmatprep.subr.mxu0 0.0
  %218 = vmatpush1.msra.mxu0 0.0
  %219 = vmatprep.subr.mxu0 0.0
  %220 = vmatpush1.msra.mxu0 0.0
  %221 = vmatprep.subr.mxu0 0.0
  %222 = vmatpush1.msra.mxu0 0.0
  %223 = vmatprep.subr.mxu0 0.0
  %224 = vmatpush1.msra.mxu0 0.0
  %225 = vmatprep.subr.mxu0 0.0
  %226 = vmatpush1.msra.mxu0 0.0
  %227 = vmatprep.subr.mxu0 0.0
  %228 = vmatpush1.msra.mxu0 0.0
  %229 = vmatprep.subr.mxu0 0.0
  %230 = vmatpush1.msra.mxu0 0.0
  %231 = vmatprep.subr.mxu0 0.0
  %232 = vmatpush1.msra.mxu0 0.0
  %233 = vmatprep.subr.mxu0 0.0
  %234 = vmatpush1.msra.mxu0 0.0
  %235 = vmatprep.subr.mxu0 0.0
  %236 = vmatpush1.msra.mxu0 0.0
  %237 = vmatprep.subr.mxu0 0.0
  %238 = vmatpush1.msra.mxu0 0.0
  %239 = vmatprep.subr.mxu0 0.0
  %240 = vmatpush1.msra.mxu0 %v207
  %241 = vmatprep.subr.mxu0 0.0
  %242 = vmatpush2.msra.mxu0 0.0
  %243 = vmatprep.subr.mxu0 0.0
  %244 = vmatpush2.msra.mxu0 0.0
  %245 = vmatprep.subr.mxu0 0.0
  %246 = vmatpush2.msra.mxu0 0.0
  %247 = vmatprep.subr.mxu0 0.0
  %248 = vmatpush2.msra.mxu0 0.0
  %249 = vmatprep.subr.mxu0 0.0
  %250 = vmatpush2.msra.mxu0 0.0
  %251 = vmatprep.subr.mxu0 0.0
  %252 = vmatpush2.msra.mxu0 0.0
  %253 = vmatprep.subr.mxu0 0.0
  %254 = vmatpush2.msra.mxu0 0.0
  %255 = vmatprep.subr.mxu0 0.0
  %256 = vmatpush2.msra.mxu0 0.0
  %257 = vmatprep.subr.mxu0 0.0
  %258 = vmatpush2.msra.mxu0 0.0
  %259 = vmatprep.subr.mxu0 0.0
  %260 = vmatpush2.msra.mxu0 0.0
  %261 = vmatprep.subr.mxu0 0.0
  %262 = vmatpush2.msra.mxu0 0.0
  %263 = vmatprep.subr.mxu0 0.0
  %264 = vmatpush2.msra.mxu0 0.0
  %265 = vmatprep.subr.mxu0 0.0
  %266 = vmatpush2.msra.mxu0 0.0
  %267 = vmatprep.subr.mxu0 0.0
  %268 = vmatpush2.msra.mxu0 0.0
  %269 = vmatprep.subr.mxu0 0.0
  %270 = vmatpush2.msra.mxu0 0.0
  %271 = vmatprep.subr.mxu0 0.0
  %272 = vmatpush2.msra.mxu0 0.0
  %273 = vmatprep.mubr.f32.mxu0 0.0
  %274 = vmatmul.mubr.f32.gmra.mxu0 %v62
  %v275 = vpop.f32.mrf.mxu0
  %v276 = vadd.f32 0.0, %v275
  %v277 = vpop.f32.mrf.mxu0
  %278 = vmatprep.mubr.f32.mxu0 0.0
  %279 = vmatmul.mubr.f32.gmra.mxu0 %v65
  %v280 = vpop.f32.mrf.mxu0
  %v281 = vadd.f32 0.0, %v280
  %v282 = vpop.f32.mrf.mxu0
  %283 = vmatprep.mubr.f32.mxu0 0.0
  %284 = vmatmul.mubr.f32.gmra.mxu0 %v68
  %v285 = vpop.f32.mrf.mxu0
  %v286 = vadd.f32 0.0, %v285
  %v287 = vpop.f32.mrf.mxu0
  %288 = vmatprep.mubr.f32.mxu0 0.0
  %289 = vmatmul.mubr.f32.gmra.mxu0 %v71
  %v290 = vpop.f32.mrf.mxu0
  %v291 = vadd.f32 0.0, %v290
  %v292 = vpop.f32.mrf.mxu0
  %293 = vmatprep.mubr.f32.mxu0 0.0
  %294 = vmatmul.mubr.f32.gmra.mxu0 %v74
  %v295 = vpop.f32.mrf.mxu0
  %v296 = vadd.f32 0.0, %v295
  %v297 = vpop.f32.mrf.mxu0
  %298 = vmatprep.mubr.f32.mxu0 0.0
  %299 = vmatmul.mubr.f32.gmra.mxu0 %v77
  %v300 = vpop.f32.mrf.mxu0
  %v301 = vadd.f32 0.0, %v300
  %v302 = vpop.f32.mrf.mxu0
  %303 = vmatprep.mubr.f32.mxu0 0.0
  %304 = vmatmul.mubr.f32.gmra.mxu0 %v80
  %v305 = vpop.f32.mrf.mxu0
  %v306 = vadd.f32 0.0, %v305
  %v307 = vpop.f32.mrf.mxu0
  %308 = vmatprep.mubr.f32.mxu0 0.0
  %309 = vmatmul.mubr.f32.gmra.mxu0 %v83
  %v310 = vpop.f32.mrf.mxu0
  %v311 = vadd.f32 0.0, %v310
  %v312 = vpop.f32.mrf.mxu0
  %313 = vmatprep.mubr.f32.mxu0 0.0
  %314 = vmatmul.mubr.f32.gmra.mxu0 %v86
  %v315 = vpop.f32.mrf.mxu0
  %v316 = vadd.f32 0.0, %v315
  %v317 = vpop.f32.mrf.mxu0
  %318 = vmatprep.mubr.f32.mxu0 0.0
  %319 = vmatmul.mubr.f32.gmra.mxu0 %v89
  %v320 = vpop.f32.mrf.mxu0
  %v321 = vadd.f32 0.0, %v320
  %v322 = vpop.f32.mrf.mxu0
  %323 = vmatprep.mubr.f32.mxu0 0.0
  %324 = vmatmul.mubr.f32.gmra.mxu0 %v92
  %v325 = vpop.f32.mrf.mxu0
  %v326 = vadd.f32 0.0, %v325
  %v327 = vpop.f32.mrf.mxu0
  %328 = vmatprep.mubr.f32.mxu0 0.0
  %329 = vmatmul.mubr.f32.gmra.mxu0 %v95
  %v330 = vpop.f32.mrf.mxu0
  %v331 = vadd.f32 0.0, %v330
  %v332 = vpop.f32.mrf.mxu0
  %333 = vmatprep.mubr.f32.mxu0 0.0
  %334 = vmatmul.mubr.f32.gmra.mxu0 %v98
  %v335 = vpop.f32.mrf.mxu0
  %v336 = vadd.f32 0.0, %v335
  %v337 = vpop.f32.mrf.mxu0
  %338 = vmatprep.mubr.f32.mxu0 0.0
  %339 = vmatmul.mubr.f32.gmra.mxu0 %v101
  %v340 = vpop.f32.mrf.mxu0
  %v341 = vadd.f32 0.0, %v340
  %v342 = vpop.f32.mrf.mxu0
  %343 = vmatprep.mubr.f32.mxu0 0.0
  %344 = vmatmul.mubr.f32.gmra.mxu0 %v104
  %v345 = vpop.f32.mrf.mxu0
  %v346 = vadd.f32 0.0, %v345
  %v347 = vpop.f32.mrf.mxu0
  %348 = vmatprep.mubr.f32.mxu0 0.0
  %349 = vmatmul.mubr.f32.gmra.mxu0 %v107
  %v350 = vpop.f32.mrf.mxu0
  %v351 = vadd.f32 0.0, %v350
  %v352 = vpop.f32.mrf.mxu0
  %353 = vmatprep.mubr.f32.mxu0 0.0
  %354 = vmatmul.mubr.f32.gmra.mxu0 %v110
  %v355 = vpop.f32.mrf.mxu0
  %v356 = vadd.f32 0.0, %v355
  %v357 = vpop.f32.mrf.mxu0
  %358 = vmatprep.mubr.f32.mxu0 0.0
  %359 = vmatmul.mubr.f32.gmra.mxu0 %v113
  %v360 = vpop.f32.mrf.mxu0
  %v361 = vadd.f32 0.0, %v360
  %v362 = vpop.f32.mrf.mxu0
  %363 = vmatprep.mubr.f32.mxu0 0.0
  %364 = vmatmul.mubr.f32.gmra.mxu0 %v116
  %v365 = vpop.f32.mrf.mxu0
  %v366 = vadd.f32 0.0, %v365
  %v367 = vpop.f32.mrf.mxu0
  %368 = vmatprep.mubr.f32.mxu0 0.0
  %369 = vmatmul.mubr.f32.gmra.mxu0 %v119
  %v370 = vpop.f32.mrf.mxu0
  %v371 = vadd.f32 0.0, %v370
  %v372 = vpop.f32.mrf.mxu0
  %373 = vmatprep.mubr.f32.mxu0 0.0
  %374 = vmatmul.mubr.f32.gmra.mxu0 %v122
  %v375 = vpop.f32.mrf.mxu0
  %v376 = vadd.f32 0.0, %v375
  %v377 = vpop.f32.mrf.mxu0
  %378 = vmatprep.mubr.f32.mxu0 0.0
  %379 = vmatmul.mubr.f32.gmra.mxu0 %v125
  %v380 = vpop.f32.mrf.mxu0
  %v381 = vadd.f32 0.0, %v380
  %v382 = vpop.f32.mrf.mxu0
  %383 = vmatprep.mubr.f32.mxu0 0.0
  %384 = vmatmul.mubr.f32.gmra.mxu0 %v128
  %v385 = vpop.f32.mrf.mxu0
  %v386 = vadd.f32 0.0, %v385
  %v387 = vpop.f32.mrf.mxu0
  %388 = vmatprep.mubr.f32.mxu0 0.0
  %389 = vmatmul.mubr.f32.gmra.mxu0 %v131
  %v390 = vpop.f32.mrf.mxu0
  %v391 = vadd.f32 0.0, %v390
  %v392 = vpop.f32.mrf.mxu0
  %393 = vmatprep.mubr.f32.mxu0 0.0
  %394 = vmatmul.mubr.f32.gmra.mxu0 %v134
  %v395 = vpop.f32.mrf.mxu0
  %v396 = vadd.f32 0.0, %v395
  %v397 = vpop.f32.mrf.mxu0
  %398 = vmatprep.mubr.f32.mxu0 0.0
  %399 = vmatmul.mubr.f32.gmra.mxu0 %v137
  %v400 = vpop.f32.mrf.mxu0
  %v401 = vadd.f32 0.0, %v400
  %v402 = vpop.f32.mrf.mxu0
  %403 = vmatprep.mubr.f32.mxu0 0.0
  %404 = vmatmul.mubr.f32.gmra.mxu0 %v140
  %v405 = vpop.f32.mrf.mxu0
  %v406 = vadd.f32 0.0, %v405
  %v407 = vpop.f32.mrf.mxu0
  %408 = vmatprep.mubr.f32.mxu0 0.0
  %409 = vmatmul.mubr.f32.gmra.mxu0 %v143
  %v410 = vpop.f32.mrf.mxu0
  %v411 = vadd.f32 0.0, %v410
  %v412 = vpop.f32.mrf.mxu0
  %413 = vmatprep.mubr.f32.mxu0 0.0
  %414 = vmatmul.mubr.f32.gmra.mxu0 %v146
  %v415 = vpop.f32.mrf.mxu0
  %v416 = vadd.f32 0.0, %v415
  %v417 = vpop.f32.mrf.mxu0
  %418 = vmatprep.mubr.f32.mxu0 0.0
  %419 = vmatmul.mubr.f32.gmra.mxu0 %v149
  %v420 = vpop.f32.mrf.mxu0
  %v421 = vadd.f32 0.0, %v420
  %v422 = vpop.f32.mrf.mxu0
  %423 = vmatprep.mubr.f32.mxu0 0.0
  %424 = vmatmul.mubr.f32.gmra.mxu0 %v152
  %v425 = vpop.f32.mrf.mxu0
  %v426 = vadd.f32 0.0, %v425
  %v427 = vpop.f32.mrf.mxu0
  %428 = vmatprep.mubr.f32.mxu0 0.0
  %429 = vmatmul.mubr.f32.gmra.mxu0 %v155
  %v430 = vpop.f32.mrf.mxu0
  %v431 = vadd.f32 0.0, %v430
  %v432 = vpop.f32.mrf.mxu0
  %433 = vmatprep.mubr.f32.mxu0 0.0
  %434 = vmatmul.mubr.f32.gmra.mxu0 %v158
  %v435 = vpop.f32.mrf.mxu0
  %v436 = vadd.f32 0.0, %v435
  %v437 = vpop.f32.mrf.mxu0
  %438 = vmatprep.mubr.f32.mxu0 0.0
  %439 = vmatmul.mubr.f32.gmra.mxu0 %v161
  %v440 = vpop.f32.mrf.mxu0
  %v441 = vadd.f32 0.0, %v440
  %v442 = vpop.f32.mrf.mxu0
  %443 = vmatprep.mubr.f32.mxu0 0.0
  %444 = vmatmul.mubr.f32.gmra.mxu0 %v164
  %v445 = vpop.f32.mrf.mxu0
  %v446 = vadd.f32 0.0, %v445
  %v447 = vpop.f32.mrf.mxu0
  %448 = vmatprep.mubr.f32.mxu0 0.0
  %449 = vmatmul.mubr.f32.gmra.mxu0 %v167
  %v450 = vpop.f32.mrf.mxu0
  %v451 = vadd.f32 0.0, %v450
  %v452 = vpop.f32.mrf.mxu0
  %453 = vmatprep.mubr.f32.mxu0 0.0
  %454 = vmatmul.mubr.f32.gmra.mxu0 %v170
  %v455 = vpop.f32.mrf.mxu0
  %v456 = vadd.f32 0.0, %v455
  %v457 = vpop.f32.mrf.mxu0
  %458 = vmatprep.mubr.f32.mxu0 0.0
  %459 = vmatmul.mubr.f32.gmra.mxu0 %v173
  %v460 = vpop.f32.mrf.mxu0
  %v461 = vadd.f32 0.0, %v460
  %v462 = vpop.f32.mrf.mxu0
  %463 = vmatprep.mubr.f32.mxu0 0.0
  %464 = vmatmul.mubr.f32.gmra.mxu0 %v176
  %v465 = vpop.f32.mrf.mxu0
  %v466 = vadd.f32 0.0, %v465
  %v467 = vpop.f32.mrf.mxu0
  %468 = vmatprep.mubr.f32.mxu0 0.0
  %469 = vmatmul.mubr.f32.gmra.mxu0 %v179
  %v470 = vpop.f32.mrf.mxu0
  %v471 = vadd.f32 0.0, %v470
  %v472 = vpop.f32.mrf.mxu0
  %473 = vmatprep.mubr.f32.mxu0 0.0
  %474 = vmatmul.mubr.f32.gmra.mxu0 %v182
  %v475 = vpop.f32.mrf.mxu0
  %v476 = vadd.f32 0.0, %v475
  %v477 = vpop.f32.mrf.mxu0
  %478 = vmatprep.mubr.f32.mxu0 0.0
  %479 = vmatmul.mubr.f32.gmra.mxu0 %v185
  %v480 = vpop.f32.mrf.mxu0
  %v481 = vadd.f32 0.0, %v480
  %v482 = vpop.f32.mrf.mxu0
  %483 = vmatprep.mubr.f32.mxu0 0.0
  %484 = vmatmul.mubr.f32.gmra.mxu0 %v188
  %v485 = vpop.f32.mrf.mxu0
  %v486 = vadd.f32 0.0, %v485
  %v487 = vpop.f32.mrf.mxu0
  %488 = vmatprep.mubr.f32.mxu0 0.0
  %489 = vmatmul.mubr.f32.gmra.mxu0 %v191
  %v490 = vpop.f32.mrf.mxu0
  %v491 = vadd.f32 0.0, %v490
  %v492 = vpop.f32.mrf.mxu0
  %493 = vmatprep.mubr.f32.mxu0 0.0
  %494 = vmatmul.mubr.f32.gmra.mxu0 %v194
  %v495 = vpop.f32.mrf.mxu0
  %v496 = vadd.f32 0.0, %v495
  %v497 = vpop.f32.mrf.mxu0
  %498 = vmatprep.mubr.f32.mxu0 0.0
  %499 = vmatmul.mubr.f32.gmra.mxu0 %v197
  %v500 = vpop.f32.mrf.mxu0
  %v501 = vadd.f32 0.0, %v500
  %v502 = vpop.f32.mrf.mxu0
  %503 = vmatprep.mubr.f32.mxu0 0.0
  %504 = vmatmul.mubr.f32.gmra.mxu0 %v200
  %v505 = vpop.f32.mrf.mxu0
  %v506 = vadd.f32 0.0, %v505
  %v507 = vpop.f32.mrf.mxu0
  %508 = vmatprep.mubr.f32.mxu0 0.0
  %509 = vmatmul.mubr.f32.gmra.mxu0 %v203
  %v510 = vpop.f32.mrf.mxu0
  %v511 = vadd.f32 0.0, %v510
  %v512 = vpop.f32.mrf.mxu0
  %513 = vdwg.mxu0
  %vm514 = vcmask 31744
  %515 = vst.msk [vmem:[%s2] sm:$0xff] %vm514, %v276
  %516 = vst.msk [vmem:[%s2 + $0x8] sm:$0xff] %vm514, %v281
  %517 = vst.msk [vmem:[%s2 + $0x10] sm:$0xff] %vm514, %v286
  %518 = vst.msk [vmem:[%s2 + $0x18] sm:$0xff] %vm514, %v291
  %519 = vst.msk [vmem:[%s2 + $0x20] sm:$0xff] %vm514, %v296
  %520 = vst.msk [vmem:[%s2 + $0x28] sm:$0xff] %vm514, %v301
  %521 = vst.msk [vmem:[%s2 + $0x30] sm:$0xff] %vm514, %v306
  %522 = vst.msk [vmem:[%s2 + $0x38] sm:$0xff] %vm514, %v311
  %523 = vst.msk [vmem:[%s2 + $0x40] sm:$0xff] %vm514, %v316
  %524 = vst.msk [vmem:[%s2 + $0x48] sm:$0xff] %vm514, %v321
  %525 = vst.msk [vmem:[%s2 + $0x50] sm:$0xff] %vm514, %v326
  %526 = vst.msk [vmem:[%s2 + $0x58] sm:$0xff] %vm514, %v331
  %527 = vst.msk [vmem:[%s2 + $0x60] sm:$0xff] %vm514, %v336
  %528 = vst.msk [vmem:[%s2 + $0x68] sm:$0xff] %vm514, %v341
  %529 = vst.msk [vmem:[%s2 + $0x70] sm:$0xff] %vm514, %v346
  %530 = vst.msk [vmem:[%s2 + $0x78] sm:$0xff] %vm514, %v351
  %531 = vst.msk [vmem:[%s2 + $0x80] sm:$0xff] %vm514, %v356
  %532 = vst.msk [vmem:[%s2 + $0x88] sm:$0xff] %vm514, %v361
  %533 = vst.msk [vmem:[%s2 + $0x90] sm:$0xff] %vm514, %v366
  %534 = vst.msk [vmem:[%s2 + $0x98] sm:$0xff] %vm514, %v371
  %535 = vst.msk [vmem:[%s2 + $0xa0] sm:$0xff] %vm514, %v376
  %536 = vst.msk [vmem:[%s2 + $0xa8] sm:$0xff] %vm514, %v381
  %537 = vst.msk [vmem:[%s2 + $0xb0] sm:$0xff] %vm514, %v386
  %538 = vst.msk [vmem:[%s2 + $0xb8] sm:$0xff] %vm514, %v391
  %539 = vst.msk [vmem:[%s2 + $0xc0] sm:$0xff] %vm514, %v396
  %540 = vst.msk [vmem:[%s2 + $0xc8] sm:$0xff] %vm514, %v401
  %541 = vst.msk [vmem:[%s2 + $0xd0] sm:$0xff] %vm514, %v406
  %542 = vst.msk [vmem:[%s2 + $0xd8] sm:$0xff] %vm514, %v411
  %543 = vst.msk [vmem:[%s2 + $0xe0] sm:$0xff] %vm514, %v416
  %544 = vst.msk [vmem:[%s2 + $0xe8] sm:$0xff] %vm514, %v421
  %545 = vst.msk [vmem:[%s2 + $0xf0] sm:$0xff] %vm514, %v426
  %546 = vst.msk [vmem:[%s2 + $0xf8] sm:$0xff] %vm514, %v431
  %547 = vst.msk [vmem:[%s2 + $0x100] sm:$0xff] %vm514, %v436
  %548 = vst.msk [vmem:[%s2 + $0x108] sm:$0xff] %vm514, %v441
  %549 = vst.msk [vmem:[%s2 + $0x110] sm:$0xff] %vm514, %v446
  %550 = vst.msk [vmem:[%s2 + $0x118] sm:$0xff] %vm514, %v451
  %551 = vst.msk [vmem:[%s2 + $0x120] sm:$0xff] %vm514, %v456
  %552 = vst.msk [vmem:[%s2 + $0x128] sm:$0xff] %vm514, %v461
  %553 = vst.msk [vmem:[%s2 + $0x130] sm:$0xff] %vm514, %v466
  %554 = vst.msk [vmem:[%s2 + $0x138] sm:$0xff] %vm514, %v471
  %555 = vst.msk [vmem:[%s2 + $0x140] sm:$0xff] %vm514, %v476
  %556 = vst.msk [vmem:[%s2 + $0x148] sm:$0xff] %vm514, %v481
  %557 = vst.msk [vmem:[%s2 + $0x150] sm:$0xff] %vm514, %v486
  %558 = vst.msk [vmem:[%s2 + $0x158] sm:$0xff] %vm514, %v491
  %559 = vst.msk [vmem:[%s2 + $0x160] sm:$0xff] %vm514, %v496
  %560 = vst.msk [vmem:[%s2 + $0x168] sm:$0xff] %vm514, %v501
  %561 = vst.msk [vmem:[%s2 + $0x170] sm:$0xff] %vm514, %v506
  %562 = vst.msk [vmem:[%s2 + $0x178] sm:$0xff] %vm514, %v511
  // Predicated region
  $region10: #{sparse_feature_pyramid.12} parent=0 // pred_check
    _
  $region11: #{sparse_feature_pyramid.12} parent=0 // pred_check_branch
    %564 = sbr.rel (0) target = $region13
  $region12: #{sparse_feature_pyramid.12} parent=0 // pred_region
    _
  $region13: #{sparse_feature_pyramid.12} parent=0 // pred_fallthru
    _
  // Predicated region
  $region14: #{sparse_feature_pyramid.12} parent=0 // pred_check
    _
  $region15: #{sparse_feature_pyramid.12} parent=0 // pred_check_branch
    %566 = sbr.rel (0) target = $region17
  $region16: #{sparse_feature_pyramid.12} parent=0 // pred_region
    _
  $region17: #{sparse_feature_pyramid.12} parent=0 // pred_fallthru
    _

// kernel: sparse_feature_pyramid.14
$region0: #{sparse_feature_pyramid.14}
  #allocation0 [shape = 'u32[]', space=smem, size = 0x4, offset = 0x4, fixed_abs, tag = 'smem constant byte address 0x4 - core index']
  #allocation1 [shape = 'u32[144,128]{1,0:T(1,128)}', space=vmem, size = 0x12000, scoped, tag = 'internal scratch']
  %s0 = inlined_call_operand.vmem [shape: f32[32,16], index: 0, kind: input, shape index: {}]
  %s1 = inlined_call_operand.vmem [shape: f32[16,96], index: 1, kind: input, shape index: {}]
  %s2 = inlined_call_operand.vmem [shape: f32[32,1], index: 2, kind: input, shape index: {}]
  %s3 = inlined_call_operand.vmem [shape: f32[32,96], index: 3, kind: input, shape index: {}]
  %s4 = inlined_call_operand.vmem [shape: f32[32,96], index: 4, kind: output, shape index: {}]
  %s5 = sld [smem:[#allocation0]]
  $region26: #{sparse_feature_pyramid.14} parent=0
    _
  %s7 = ssub.s32 1, %s5
  %s8 = scalar_select 0, %s7, %s5
  // Predicated region
  $region2: #{sparse_feature_pyramid.14} parent=0 // pred_check
    _
  $region3: #{sparse_feature_pyramid.14} parent=0 // pred_check_branch
    %10 = sbr.rel (0) target = $region5
  $region4: #{sparse_feature_pyramid.14} parent=0 // pred_region
    _
  $region5: #{sparse_feature_pyramid.14} parent=0 // pred_fallthru
    _
  // Predicated region
  $region6: #{sparse_feature_pyramid.14} parent=0 // pred_check
    _
  $region7: #{sparse_feature_pyramid.14} parent=0 // pred_check_branch
    %12 = sbr.rel (0) target = $region9
  $region8: #{sparse_feature_pyramid.14} parent=0 // pred_region
    _
  $region9: #{sparse_feature_pyramid.14} parent=0 // pred_fallthru
    _
  // Predicated region
  $region10: #{sparse_feature_pyramid.14} parent=0 // pred_check
    _
  $region11: #{sparse_feature_pyramid.14} parent=0 // pred_check_branch
    %14 = sbr.rel (0) target = $region13
  $region12: #{sparse_feature_pyramid.14} parent=0 // pred_region
    _
  $region13: #{sparse_feature_pyramid.14} parent=0 // pred_fallthru
    _
  // Predicated region
  $region14: #{sparse_feature_pyramid.14} parent=0 // pred_check
    _
  $region15: #{sparse_feature_pyramid.14} parent=0 // pred_check_branch
    %16 = sbr.rel (0) target = $region17
  $region16: #{sparse_feature_pyramid.14} parent=0 // pred_region
    _
  $region17: #{sparse_feature_pyramid.14} parent=0 // pred_fallthru
    _
  %v17 = vld [vmem:[%s0] sm:$0xff]
  %v18 = vld [vmem:[%s0 + $0x8] sm:$0xff]
  %v19 = vld [vmem:[%s0 + $0x10] sm:$0xff]
  %v20 = vld [vmem:[%s0 + $0x18] sm:$0xff]
  %v21 = vld [vmem:[%s1] sm:$0xff]
  %v22 = vld [vmem:[%s1 + $0x8] sm:$0xff]
  %v23 = vld [vmem:[%s2] sm:$0xff]
  %v24 = vld [vmem:[%s2 + $0x8] sm:$0xff]
  %v25 = vld [vmem:[%s2 + $0x10] sm:$0xff]
  %v26 = vld [vmem:[%s2 + $0x18] sm:$0xff]
  %28 = vset.pattern.permute.xlu0 0
  %29 = vperm.xlu0 %28, %v23
  %v30 = vpop.permute.xlu0 %29
  %33 = vset.pattern.permute.xlu0 0
  %34 = vperm.xlu0 %33, %v24
  %v35 = vpop.permute.xlu0 %34
  %38 = vset.pattern.permute.xlu0 0
  %39 = vperm.xlu0 %38, %v25
  %v40 = vpop.permute.xlu0 %39
  %43 = vset.pattern.permute.xlu0 0
  %44 = vperm.xlu0 %43, %v26
  %v45 = vpop.permute.xlu0 %44
  %vm47 = vcmask 130048
  %v49 = vsel %vm47, %v17, 0
  %v52 = vsel %vm47, %v18, 0
  %v55 = vsel %vm47, %v19, 0
  %v58 = vsel %vm47, %v20, 0
  %60 = vmatprep.subr.mxu0 0.0
  %61 = vmatpush1.msra.mxu0 0.0
  %62 = vmatprep.subr.mxu0 0.0
  %63 = vmatpush1.msra.mxu0 0.0
  %64 = vmatprep.subr.mxu0 0.0
  %65 = vmatpush1.msra.mxu0 0.0
  %66 = vmatprep.subr.mxu0 0.0
  %67 = vmatpush1.msra.mxu0 0.0
  %68 = vmatprep.subr.mxu0 0.0
  %69 = vmatpush1.msra.mxu0 0.0
  %70 = vmatprep.subr.mxu0 0.0
  %71 = vmatpush1.msra.mxu0 0.0
  %72 = vmatprep.subr.mxu0 0.0
  %73 = vmatpush1.msra.mxu0 0.0
  %74 = vmatprep.subr.mxu0 0.0
  %75 = vmatpush1.msra.mxu0 0.0
  %76 = vmatprep.subr.mxu0 0.0
  %77 = vmatpush1.msra.mxu0 0.0
  %78 = vmatprep.subr.mxu0 0.0
  %79 = vmatpush1.msra.mxu0 0.0
  %80 = vmatprep.subr.mxu0 0.0
  %81 = vmatpush1.msra.mxu0 0.0
  %82 = vmatprep.subr.mxu0 0.0
  %83 = vmatpush1.msra.mxu0 0.0
  %84 = vmatprep.subr.mxu0 0.0
  %85 = vmatpush1.msra.mxu0 0.0
  %86 = vmatprep.subr.mxu0 0.0
  %87 = vmatpush1.msra.mxu0 0.0
  %88 = vmatprep.subr.mxu0 0.0
  %89 = vmatpush1.msra.mxu0 %v22
  %90 = vmatprep.subr.mxu0 0.0
  %91 = vmatpush1.msra.mxu0 %v21
  %92 = vmatprep.subr.mxu0 0.0
  %93 = vmatpush2.msra.mxu0 0.0
  %94 = vmatprep.subr.mxu0 0.0
  %95 = vmatpush2.msra.mxu0 0.0
  %96 = vmatprep.subr.mxu0 0.0
  %97 = vmatpush2.msra.mxu0 0.0
  %98 = vmatprep.subr.mxu0 0.0
  %99 = vmatpush2.msra.mxu0 0.0
  %100 = vmatprep.subr.mxu0 0.0
  %101 = vmatpush2.msra.mxu0 0.0
  %102 = vmatprep.subr.mxu0 0.0
  %103 = vmatpush2.msra.mxu0 0.0
  %104 = vmatprep.subr.mxu0 0.0
  %105 = vmatpush2.msra.mxu0 0.0
  %106 = vmatprep.subr.mxu0 0.0
  %107 = vmatpush2.msra.mxu0 0.0
  %108 = vmatprep.subr.mxu0 0.0
  %109 = vmatpush2.msra.mxu0 0.0
  %110 = vmatprep.subr.mxu0 0.0
  %111 = vmatpush2.msra.mxu0 0.0
  %112 = vmatprep.subr.mxu0 0.0
  %113 = vmatpush2.msra.mxu0 0.0
  %114 = vmatprep.subr.mxu0 0.0
  %115 = vmatpush2.msra.mxu0 0.0
  %116 = vmatprep.subr.mxu0 0.0
  %117 = vmatpush2.msra.mxu0 0.0
  %118 = vmatprep.subr.mxu0 0.0
  %119 = vmatpush2.msra.mxu0 0.0
  %120 = vmatprep.subr.mxu0 0.0
  %121 = vmatpush2.msra.mxu0 0.0
  %122 = vmatprep.subr.mxu0 0.0
  %123 = vmatpush2.msra.mxu0 0.0
  %124 = vmatprep.mubr.f32.mxu0 0.0
  %125 = vmatmul.mubr.f32.gmra.mxu0 %v49
  %v126 = vpop.f32.mrf.mxu0
  %v127 = vadd.f32 %v30, %v126
  %v128 = vpop.f32.mrf.mxu0
  %129 = vmatprep.mubr.f32.mxu0 0.0
  %130 = vmatmul.mubr.f32.gmra.mxu0 %v52
  %v131 = vpop.f32.mrf.mxu0
  %v132 = vadd.f32 %v35, %v131
  %v133 = vpop.f32.mrf.mxu0
  %134 = vmatprep.mubr.f32.mxu0 0.0
  %135 = vmatmul.mubr.f32.gmra.mxu0 %v55
  %v136 = vpop.f32.mrf.mxu0
  %v137 = vadd.f32 %v40, %v136
  %v138 = vpop.f32.mrf.mxu0
  %139 = vmatprep.mubr.f32.mxu0 0.0
  %140 = vmatmul.mubr.f32.gmra.mxu0 %v58
  %v141 = vpop.f32.mrf.mxu0
  %v142 = vadd.f32 %v45, %v141
  %v143 = vpop.f32.mrf.mxu0
  %144 = vdwg.mxu0
  %v145 = vld [vmem:[%s3] sm:$0xff]
  %v146 = vld [vmem:[%s3 + $0x8] sm:$0xff]
  %v147 = vld [vmem:[%s3 + $0x10] sm:$0xff]
  %v148 = vld [vmem:[%s3 + $0x18] sm:$0xff]
  %v149 = vadd.f32 %v127, %v145
  %v150 = vadd.f32 %v132, %v146
  %v151 = vadd.f32 %v137, %v147
  %v152 = vadd.f32 %v142, %v148
  %vm153 = vcmask 785408
  %154 = vst.msk [vmem:[%s4] sm:$0xff] %vm153, %v149
  %155 = vst.msk [vmem:[%s4 + $0x8] sm:$0xff] %vm153, %v150
  %156 = vst.msk [vmem:[%s4 + $0x10] sm:$0xff] %vm153, %v151
  %157 = vst.msk [vmem:[%s4 + $0x18] sm:$0xff] %vm153, %v152
  // Predicated region
  $region18: #{sparse_feature_pyramid.14} parent=0 // pred_check
    _
  $region19: #{sparse_feature_pyramid.14} parent=0 // pred_check_branch
    %159 = sbr.rel (0) target = $region21
  $region20: #{sparse_feature_pyramid.14} parent=0 // pred_region
    _
  $region21: #{sparse_feature_pyramid.14} parent=0 // pred_fallthru
    _
  // Predicated region
  $region22: #{sparse_feature_pyramid.14} parent=0 // pred_check
    _
  $region23: #{sparse_feature_pyramid.14} parent=0 // pred_check_branch
    %161 = sbr.rel (0) target = $region25
  $region24: #{sparse_feature_pyramid.14} parent=0 // pred_region
    _
  $region25: #{sparse_feature_pyramid.14} parent=0 // pred_fallthru
    _

// kernel: sparse_feature_pyramid.13
$region0: #{sparse_feature_pyramid.13}
  #allocation0 [shape = 'u32[]', space=smem, size = 0x4, offset = 0x4, fixed_abs, tag = 'smem constant byte address 0x4 - core index']
  #allocation1 [shape = 'u32[144,128]{1,0:T(1,128)}', space=vmem, size = 0x12000, scoped, tag = 'internal scratch']
  %s0 = inlined_call_operand.vmem [shape: f32[768,2], index: 0, kind: input, shape index: {}]
  %s1 = inlined_call_operand.vmem [shape: f32[2,4], index: 1, kind: input, shape index: {}]
  %s2 = inlined_call_operand.vmem [shape: f32[768,4], index: 2, kind: output, shape index: {}]
  %s3 = sld [smem:[#allocation0]]
  $region18: #{sparse_feature_pyramid.13} parent=0
    _
  %s5 = ssub.s32 1, %s3
  %s6 = scalar_select 0, %s5, %s3
  // Predicated region
  $region2: #{sparse_feature_pyramid.13} parent=0 // pred_check
    _
  $region3: #{sparse_feature_pyramid.13} parent=0 // pred_check_branch
    %8 = sbr.rel (0) target = $region5
  $region4: #{sparse_feature_pyramid.13} parent=0 // pred_region
    _
  $region5: #{sparse_feature_pyramid.13} parent=0 // pred_fallthru
    _
  // Predicated region
  $region6: #{sparse_feature_pyramid.13} parent=0 // pred_check
    _
  $region7: #{sparse_feature_pyramid.13} parent=0 // pred_check_branch
    %10 = sbr.rel (0) target = $region9
  $region8: #{sparse_feature_pyramid.13} parent=0 // pred_region
    _
  $region9: #{sparse_feature_pyramid.13} parent=0 // pred_fallthru
    _
  %v11 = vld [vmem:[%s0] sm:$0xff]
  %v12 = vld [vmem:[%s0 + $0x8] sm:$0xff]
  %v13 = vld [vmem:[%s0 + $0x10] sm:$0xff]
  %v14 = vld [vmem:[%s0 + $0x18] sm:$0xff]
  %v15 = vld [vmem:[%s0 + $0x20] sm:$0xff]
  %v16 = vld [vmem:[%s0 + $0x28] sm:$0xff]
  %v17 = vld [vmem:[%s0 + $0x30] sm:$0xff]
  %v18 = vld [vmem:[%s0 + $0x38] sm:$0xff]
  %v19 = vld [vmem:[%s0 + $0x40] sm:$0xff]
  %v20 = vld [vmem:[%s0 + $0x48] sm:$0xff]
  %v21 = vld [vmem:[%s0 + $0x50] sm:$0xff]
  %v22 = vld [vmem:[%s0 + $0x58] sm:$0xff]
  %v23 = vld [vmem:[%s0 + $0x60] sm:$0xff]
  %v24 = vld [vmem:[%s0 + $0x68] sm:$0xff]
  %v25 = vld [vmem:[%s0 + $0x70] sm:$0xff]
  %v26 = vld [vmem:[%s0 + $0x78] sm:$0xff]
  %v27 = vld [vmem:[%s0 + $0x80] sm:$0xff]
  %v28 = vld [vmem:[%s0 + $0x88] sm:$0xff]
  %v29 = vld [vmem:[%s0 + $0x90] sm:$0xff]
  %v30 = vld [vmem:[%s0 + $0x98] sm:$0xff]
  %v31 = vld [vmem:[%s0 + $0xa0] sm:$0xff]
  %v32 = vld [vmem:[%s0 + $0xa8] sm:$0xff]
  %v33 = vld [vmem:[%s0 + $0xb0] sm:$0xff]
  %v34 = vld [vmem:[%s0 + $0xb8] sm:$0xff]
  %v35 = vld [vmem:[%s0 + $0xc0] sm:$0xff]
  %v36 = vld [vmem:[%s0 + $0xc8] sm:$0xff]
  %v37 = vld [vmem:[%s0 + $0xd0] sm:$0xff]
  %v38 = vld [vmem:[%s0 + $0xd8] sm:$0xff]
  %v39 = vld [vmem:[%s0 + $0xe0] sm:$0xff]
  %v40 = vld [vmem:[%s0 + $0xe8] sm:$0xff]
  %v41 = vld [vmem:[%s0 + $0xf0] sm:$0xff]
  %v42 = vld [vmem:[%s0 + $0xf8] sm:$0xff]
  %v43 = vld [vmem:[%s0 + $0x100] sm:$0xff]
  %v44 = vld [vmem:[%s0 + $0x108] sm:$0xff]
  %v45 = vld [vmem:[%s0 + $0x110] sm:$0xff]
  %v46 = vld [vmem:[%s0 + $0x118] sm:$0xff]
  %v47 = vld [vmem:[%s0 + $0x120] sm:$0xff]
  %v48 = vld [vmem:[%s0 + $0x128] sm:$0xff]
  %v49 = vld [vmem:[%s0 + $0x130] sm:$0xff]
  %v50 = vld [vmem:[%s0 + $0x138] sm:$0xff]
  %v51 = vld [vmem:[%s0 + $0x140] sm:$0xff]
  %v52 = vld [vmem:[%s0 + $0x148] sm:$0xff]
  %v53 = vld [vmem:[%s0 + $0x150] sm:$0xff]
  %v54 = vld [vmem:[%s0 + $0x158] sm:$0xff]
  %v55 = vld [vmem:[%s0 + $0x160] sm:$0xff]
  %v56 = vld [vmem:[%s0 + $0x168] sm:$0xff]
  %v57 = vld [vmem:[%s0 + $0x170] sm:$0xff]
  %v58 = vld [vmem:[%s0 + $0x178] sm:$0xff]
  %v59 = vld [vmem:[%s0 + $0x180] sm:$0xff]
  %v60 = vld [vmem:[%s0 + $0x188] sm:$0xff]
  %v61 = vld [vmem:[%s0 + $0x190] sm:$0xff]
  %v62 = vld [vmem:[%s0 + $0x198] sm:$0xff]
  %v63 = vld [vmem:[%s0 + $0x1a0] sm:$0xff]
  %v64 = vld [vmem:[%s0 + $0x1a8] sm:$0xff]
  %v65 = vld [vmem:[%s0 + $0x1b0] sm:$0xff]
  %v66 = vld [vmem:[%s0 + $0x1b8] sm:$0xff]
  %v67 = vld [vmem:[%s0 + $0x1c0] sm:$0xff]
  %v68 = vld [vmem:[%s0 + $0x1c8] sm:$0xff]
  %v69 = vld [vmem:[%s0 + $0x1d0] sm:$0xff]
  %v70 = vld [vmem:[%s0 + $0x1d8] sm:$0xff]
  %v71 = vld [vmem:[%s0 + $0x1e0] sm:$0xff]
  %v72 = vld [vmem:[%s0 + $0x1e8] sm:$0xff]
  %v73 = vld [vmem:[%s0 + $0x1f0] sm:$0xff]
  %v74 = vld [vmem:[%s0 + $0x1f8] sm:$0xff]
  %v75 = vld [vmem:[%s0 + $0x200] sm:$0xff]
  %v76 = vld [vmem:[%s0 + $0x208] sm:$0xff]
  %v77 = vld [vmem:[%s0 + $0x210] sm:$0xff]
  %v78 = vld [vmem:[%s0 + $0x218] sm:$0xff]
  %v79 = vld [vmem:[%s0 + $0x220] sm:$0xff]
  %v80 = vld [vmem:[%s0 + $0x228] sm:$0xff]
  %v81 = vld [vmem:[%s0 + $0x230] sm:$0xff]
  %v82 = vld [vmem:[%s0 + $0x238] sm:$0xff]
  %v83 = vld [vmem:[%s0 + $0x240] sm:$0xff]
  %v84 = vld [vmem:[%s0 + $0x248] sm:$0xff]
  %v85 = vld [vmem:[%s0 + $0x250] sm:$0xff]
  %v86 = vld [vmem:[%s0 + $0x258] sm:$0xff]
  %v87 = vld [vmem:[%s0 + $0x260] sm:$0xff]
  %v88 = vld [vmem:[%s0 + $0x268] sm:$0xff]
  %v89 = vld [vmem:[%s0 + $0x270] sm:$0xff]
  %v90 = vld [vmem:[%s0 + $0x278] sm:$0xff]
  %v91 = vld [vmem:[%s0 + $0x280] sm:$0xff]
  %v92 = vld [vmem:[%s0 + $0x288] sm:$0xff]
  %v93 = vld [vmem:[%s0 + $0x290] sm:$0xff]
  %v94 = vld [vmem:[%s0 + $0x298] sm:$0xff]
  %v95 = vld [vmem:[%s0 + $0x2a0] sm:$0xff]
  %v96 = vld [vmem:[%s0 + $0x2a8] sm:$0xff]
  %v97 = vld [vmem:[%s0 + $0x2b0] sm:$0xff]
  %v98 = vld [vmem:[%s0 + $0x2b8] sm:$0xff]
  %v99 = vld [vmem:[%s0 + $0x2c0] sm:$0xff]
  %v100 = vld [vmem:[%s0 + $0x2c8] sm:$0xff]
  %v101 = vld [vmem:[%s0 + $0x2d0] sm:$0xff]
  %v102 = vld [vmem:[%s0 + $0x2d8] sm:$0xff]
  %v103 = vld [vmem:[%s0 + $0x2e0] sm:$0xff]
  %v104 = vld [vmem:[%s0 + $0x2e8] sm:$0xff]
  %v105 = vld [vmem:[%s0 + $0x2f0] sm:$0xff]
  %v106 = vld [vmem:[%s0 + $0x2f8] sm:$0xff]
  %v107 = vld [vmem:[%s1] sm:$0x3]
  %vm108 = vcmask 15360
  %v110 = vsel %vm108, %v11, 0
  %v113 = vsel %vm108, %v12, 0
  %v116 = vsel %vm108, %v13, 0
  %v119 = vsel %vm108, %v14, 0
  %v122 = vsel %vm108, %v15, 0
  %v125 = vsel %vm108, %v16, 0
  %v128 = vsel %vm108, %v17, 0
  %v131 = vsel %vm108, %v18, 0
  %v134 = vsel %vm108, %v19, 0
  %v137 = vsel %vm108, %v20, 0
  %v140 = vsel %vm108, %v21, 0
  %v143 = vsel %vm108, %v22, 0
  %v146 = vsel %vm108, %v23, 0
  %v149 = vsel %vm108, %v24, 0
  %v152 = vsel %vm108, %v25, 0
  %v155 = vsel %vm108, %v26, 0
  %v158 = vsel %vm108, %v27, 0
  %v161 = vsel %vm108, %v28, 0
  %v164 = vsel %vm108, %v29, 0
  %v167 = vsel %vm108, %v30, 0
  %v170 = vsel %vm108, %v31, 0
  %v173 = vsel %vm108, %v32, 0
  %v176 = vsel %vm108, %v33, 0
  %v179 = vsel %vm108, %v34, 0
  %v182 = vsel %vm108, %v35, 0
  %v185 = vsel %vm108, %v36, 0
  %v188 = vsel %vm108, %v37, 0
  %v191 = vsel %vm108, %v38, 0
  %v194 = vsel %vm108, %v39, 0
  %v197 = vsel %vm108, %v40, 0
  %v200 = vsel %vm108, %v41, 0
  %v203 = vsel %vm108, %v42, 0
  %v206 = vsel %vm108, %v43, 0
  %v209 = vsel %vm108, %v44, 0
  %v212 = vsel %vm108, %v45, 0
  %v215 = vsel %vm108, %v46, 0
  %v218 = vsel %vm108, %v47, 0
  %v221 = vsel %vm108, %v48, 0
  %v224 = vsel %vm108, %v49, 0
  %v227 = vsel %vm108, %v50, 0
  %v230 = vsel %vm108, %v51, 0
  %v233 = vsel %vm108, %v52, 0
  %v236 = vsel %vm108, %v53, 0
  %v239 = vsel %vm108, %v54, 0
  %v242 = vsel %vm108, %v55, 0
  %v245 = vsel %vm108, %v56, 0
  %v248 = vsel %vm108, %v57, 0
  %v251 = vsel %vm108, %v58, 0
  %v254 = vsel %vm108, %v59, 0
  %v257 = vsel %vm108, %v60, 0
  %v260 = vsel %vm108, %v61, 0
  %v263 = vsel %vm108, %v62, 0
  %v266 = vsel %vm108, %v63, 0
  %v269 = vsel %vm108, %v64, 0
  %v272 = vsel %vm108, %v65, 0
  %v275 = vsel %vm108, %v66, 0
  %v278 = vsel %vm108, %v67, 0
  %v281 = vsel %vm108, %v68, 0
  %v284 = vsel %vm108, %v69, 0
  %v287 = vsel %vm108, %v70, 0
  %v290 = vsel %vm108, %v71, 0
  %v293 = vsel %vm108, %v72, 0
  %v296 = vsel %vm108, %v73, 0
  %v299 = vsel %vm108, %v74, 0
  %v302 = vsel %vm108, %v75, 0
  %v305 = vsel %vm108, %v76, 0
  %v308 = vsel %vm108, %v77, 0
  %v311 = vsel %vm108, %v78, 0
  %v314 = vsel %vm108, %v79, 0
  %v317 = vsel %vm108, %v80, 0
  %v320 = vsel %vm108, %v81, 0
  %v323 = vsel %vm108, %v82, 0
  %v326 = vsel %vm108, %v83, 0
  %v329 = vsel %vm108, %v84, 0
  %v332 = vsel %vm108, %v85, 0
  %v335 = vsel %vm108, %v86, 0
  %v338 = vsel %vm108, %v87, 0
  %v341 = vsel %vm108, %v88, 0
  %v344 = vsel %vm108, %v89, 0
  %v347 = vsel %vm108, %v90, 0
  %v350 = vsel %vm108, %v91, 0
  %v353 = vsel %vm108, %v92, 0
  %v356 = vsel %vm108, %v93, 0
  %v359 = vsel %vm108, %v94, 0
  %v362 = vsel %vm108, %v95, 0
  %v365 = vsel %vm108, %v96, 0
  %v368 = vsel %vm108, %v97, 0
  %v371 = vsel %vm108, %v98, 0
  %v374 = vsel %vm108, %v99, 0
  %v377 = vsel %vm108, %v100, 0
  %v380 = vsel %vm108, %v101, 0
  %v383 = vsel %vm108, %v102, 0
  %v386 = vsel %vm108, %v103, 0
  %v389 = vsel %vm108, %v104, 0
  %v392 = vsel %vm108, %v105, 0
  %v395 = vsel %vm108, %v106, 0
  %vm397 = vcmask 1041408
  %v399 = vsel %vm397, %v107, 0
  %401 = vmatprep.subr.mxu0 0.0
  %402 = vmatpush1.msra.mxu0 0.0
  %403 = vmatprep.subr.mxu0 0.0
  %404 = vmatpush1.msra.mxu0 0.0
  %405 = vmatprep.subr.mxu0 0.0
  %406 = vmatpush1.msra.mxu0 0.0
  %407 = vmatprep.subr.mxu0 0.0
  %408 = vmatpush1.msra.mxu0 0.0
  %409 = vmatprep.subr.mxu0 0.0
  %410 = vmatpush1.msra.mxu0 0.0
  %411 = vmatprep.subr.mxu0 0.0
  %412 = vmatpush1.msra.mxu0 0.0
  %413 = vmatprep.subr.mxu0 0.0
  %414 = vmatpush1.msra.mxu0 0.0
  %415 = vmatprep.subr.mxu0 0.0
  %416 = vmatpush1.msra.mxu0 0.0
  %417 = vmatprep.subr.mxu0 0.0
  %418 = vmatpush1.msra.mxu0 0.0
  %419 = vmatprep.subr.mxu0 0.0
  %420 = vmatpush1.msra.mxu0 0.0
  %421 = vmatprep.subr.mxu0 0.0
  %422 = vmatpush1.msra.mxu0 0.0
  %423 = vmatprep.subr.mxu0 0.0
  %424 = vmatpush1.msra.mxu0 0.0
  %425 = vmatprep.subr.mxu0 0.0
  %426 = vmatpush1.msra.mxu0 0.0
  %427 = vmatprep.subr.mxu0 0.0
  %428 = vmatpush1.msra.mxu0 0.0
  %429 = vmatprep.subr.mxu0 0.0
  %430 = vmatpush1.msra.mxu0 0.0
  %431 = vmatprep.subr.mxu0 0.0
  %432 = vmatpush1.msra.mxu0 %v399
  %433 = vmatprep.subr.mxu0 0.0
  %434 = vmatpush2.msra.mxu0 0.0
  %435 = vmatprep.subr.mxu0 0.0
  %436 = vmatpush2.msra.mxu0 0.0
  %437 = vmatprep.subr.mxu0 0.0
  %438 = vmatpush2.msra.mxu0 0.0
  %439 = vmatprep.subr.mxu0 0.0
  %440 = vmatpush2.msra.mxu0 0.0
  %441 = vmatprep.subr.mxu0 0.0
  %442 = vmatpush2.msra.mxu0 0.0
  %443 = vmatprep.subr.mxu0 0.0
  %444 = vmatpush2.msra.mxu0 0.0
  %445 = vmatprep.subr.mxu0 0.0
  %446 = vmatpush2.msra.mxu0 0.0
  %447 = vmatprep.subr.mxu0 0.0
  %448 = vmatpush2.msra.mxu0 0.0
  %449 = vmatprep.subr.mxu0 0.0
  %450 = vmatpush2.msra.mxu0 0.0
  %451 = vmatprep.subr.mxu0 0.0
  %452 = vmatpush2.msra.mxu0 0.0
  %453 = vmatprep.subr.mxu0 0.0
  %454 = vmatpush2.msra.mxu0 0.0
  %455 = vmatprep.subr.mxu0 0.0
  %456 = vmatpush2.msra.mxu0 0.0
  %457 = vmatprep.subr.mxu0 0.0
  %458 = vmatpush2.msra.mxu0 0.0
  %459 = vmatprep.subr.mxu0 0.0
  %460 = vmatpush2.msra.mxu0 0.0
  %461 = vmatprep.subr.mxu0 0.0
  %462 = vmatpush2.msra.mxu0 0.0
  %463 = vmatprep.subr.mxu0 0.0
  %464 = vmatpush2.msra.mxu0 0.0
  %465 = vmatprep.mubr.f32.mxu0 0.0
  %466 = vmatmul.mubr.f32.gmra.mxu0 %v110
  %v467 = vpop.f32.mrf.mxu0
  %v468 = vadd.f32 0.0, %v467
  %v469 = vpop.f32.mrf.mxu0
  %470 = vmatprep.mubr.f32.mxu0 0.0
  %471 = vmatmul.mubr.f32.gmra.mxu0 %v113
  %v472 = vpop.f32.mrf.mxu0
  %v473 = vadd.f32 0.0, %v472
  %v474 = vpop.f32.mrf.mxu0
  %475 = vmatprep.mubr.f32.mxu0 0.0
  %476 = vmatmul.mubr.f32.gmra.mxu0 %v116
  %v477 = vpop.f32.mrf.mxu0
  %v478 = vadd.f32 0.0, %v477
  %v479 = vpop.f32.mrf.mxu0
  %480 = vmatprep.mubr.f32.mxu0 0.0
  %481 = vmatmul.mubr.f32.gmra.mxu0 %v119
  %v482 = vpop.f32.mrf.mxu0
  %v483 = vadd.f32 0.0, %v482
  %v484 = vpop.f32.mrf.mxu0
  %485 = vmatprep.mubr.f32.mxu0 0.0
  %486 = vmatmul.mubr.f32.gmra.mxu0 %v122
  %v487 = vpop.f32.mrf.mxu0
  %v488 = vadd.f32 0.0, %v487
  %v489 = vpop.f32.mrf.mxu0
  %490 = vmatprep.mubr.f32.mxu0 0.0
  %491 = vmatmul.mubr.f32.gmra.mxu0 %v125
  %v492 = vpop.f32.mrf.mxu0
  %v493 = vadd.f32 0.0, %v492
  %v494 = vpop.f32.mrf.mxu0
  %495 = vmatprep.mubr.f32.mxu0 0.0
  %496 = vmatmul.mubr.f32.gmra.mxu0 %v128
  %v497 = vpop.f32.mrf.mxu0
  %v498 = vadd.f32 0.0, %v497
  %v499 = vpop.f32.mrf.mxu0
  %500 = vmatprep.mubr.f32.mxu0 0.0
  %501 = vmatmul.mubr.f32.gmra.mxu0 %v131
  %v502 = vpop.f32.mrf.mxu0
  %v503 = vadd.f32 0.0, %v502
  %v504 = vpop.f32.mrf.mxu0
  %505 = vmatprep.mubr.f32.mxu0 0.0
  %506 = vmatmul.mubr.f32.gmra.mxu0 %v134
  %v507 = vpop.f32.mrf.mxu0
  %v508 = vadd.f32 0.0, %v507
  %v509 = vpop.f32.mrf.mxu0
  %510 = vmatprep.mubr.f32.mxu0 0.0
  %511 = vmatmul.mubr.f32.gmra.mxu0 %v137
  %v512 = vpop.f32.mrf.mxu0
  %v513 = vadd.f32 0.0, %v512
  %v514 = vpop.f32.mrf.mxu0
  %515 = vmatprep.mubr.f32.mxu0 0.0
  %516 = vmatmul.mubr.f32.gmra.mxu0 %v140
  %v517 = vpop.f32.mrf.mxu0
  %v518 = vadd.f32 0.0, %v517
  %v519 = vpop.f32.mrf.mxu0
  %520 = vmatprep.mubr.f32.mxu0 0.0
  %521 = vmatmul.mubr.f32.gmra.mxu0 %v143
  %v522 = vpop.f32.mrf.mxu0
  %v523 = vadd.f32 0.0, %v522
  %v524 = vpop.f32.mrf.mxu0
  %525 = vmatprep.mubr.f32.mxu0 0.0
  %526 = vmatmul.mubr.f32.gmra.mxu0 %v146
  %v527 = vpop.f32.mrf.mxu0
  %v528 = vadd.f32 0.0, %v527
  %v529 = vpop.f32.mrf.mxu0
  %530 = vmatprep.mubr.f32.mxu0 0.0
  %531 = vmatmul.mubr.f32.gmra.mxu0 %v149
  %v532 = vpop.f32.mrf.mxu0
  %v533 = vadd.f32 0.0, %v532
  %v534 = vpop.f32.mrf.mxu0
  %535 = vmatprep.mubr.f32.mxu0 0.0
  %536 = vmatmul.mubr.f32.gmra.mxu0 %v152
  %v537 = vpop.f32.mrf.mxu0
  %v538 = vadd.f32 0.0, %v537
  %v539 = vpop.f32.mrf.mxu0
  %540 = vmatprep.mubr.f32.mxu0 0.0
  %541 = vmatmul.mubr.f32.gmra.mxu0 %v155
  %v542 = vpop.f32.mrf.mxu0
  %v543 = vadd.f32 0.0, %v542
  %v544 = vpop.f32.mrf.mxu0
  %545 = vmatprep.mubr.f32.mxu0 0.0
  %546 = vmatmul.mubr.f32.gmra.mxu0 %v158
  %v547 = vpop.f32.mrf.mxu0
  %v548 = vadd.f32 0.0, %v547
  %v549 = vpop.f32.mrf.mxu0
  %550 = vmatprep.mubr.f32.mxu0 0.0
  %551 = vmatmul.mubr.f32.gmra.mxu0 %v161
  %v552 = vpop.f32.mrf.mxu0
  %v553 = vadd.f32 0.0, %v552
  %v554 = vpop.f32.mrf.mxu0
  %555 = vmatprep.mubr.f32.mxu0 0.0
  %556 = vmatmul.mubr.f32.gmra.mxu0 %v164
  %v557 = vpop.f32.mrf.mxu0
  %v558 = vadd.f32 0.0, %v557
  %v559 = vpop.f32.mrf.mxu0
  %560 = vmatprep.mubr.f32.mxu0 0.0
  %561 = vmatmul.mubr.f32.gmra.mxu0 %v167
  %v562 = vpop.f32.mrf.mxu0
  %v563 = vadd.f32 0.0, %v562
  %v564 = vpop.f32.mrf.mxu0
  %565 = vmatprep.mubr.f32.mxu0 0.0
  %566 = vmatmul.mubr.f32.gmra.mxu0 %v170
  %v567 = vpop.f32.mrf.mxu0
  %v568 = vadd.f32 0.0, %v567
  %v569 = vpop.f32.mrf.mxu0
  %570 = vmatprep.mubr.f32.mxu0 0.0
  %571 = vmatmul.mubr.f32.gmra.mxu0 %v173
  %v572 = vpop.f32.mrf.mxu0
  %v573 = vadd.f32 0.0, %v572
  %v574 = vpop.f32.mrf.mxu0
  %575 = vmatprep.mubr.f32.mxu0 0.0
  %576 = vmatmul.mubr.f32.gmra.mxu0 %v176
  %v577 = vpop.f32.mrf.mxu0
  %v578 = vadd.f32 0.0, %v577
  %v579 = vpop.f32.mrf.mxu0
  %580 = vmatprep.mubr.f32.mxu0 0.0
  %581 = vmatmul.mubr.f32.gmra.mxu0 %v179
  %v582 = vpop.f32.mrf.mxu0
  %v583 = vadd.f32 0.0, %v582
  %v584 = vpop.f32.mrf.mxu0
  %585 = vmatprep.mubr.f32.mxu0 0.0
  %586 = vmatmul.mubr.f32.gmra.mxu0 %v182
  %v587 = vpop.f32.mrf.mxu0
  %v588 = vadd.f32 0.0, %v587
  %v589 = vpop.f32.mrf.mxu0
  %590 = vmatprep.mubr.f32.mxu0 0.0
  %591 = vmatmul.mubr.f32.gmra.mxu0 %v185
  %v592 = vpop.f32.mrf.mxu0
  %v593 = vadd.f32 0.0, %v592
  %v594 = vpop.f32.mrf.mxu0
  %595 = vmatprep.mubr.f32.mxu0 0.0
  %596 = vmatmul.mubr.f32.gmra.mxu0 %v188
  %v597 = vpop.f32.mrf.mxu0
  %v598 = vadd.f32 0.0, %v597
  %v599 = vpop.f32.mrf.mxu0
  %600 = vmatprep.mubr.f32.mxu0 0.0
  %601 = vmatmul.mubr.f32.gmra.mxu0 %v191
  %v602 = vpop.f32.mrf.mxu0
  %v603 = vadd.f32 0.0, %v602
  %v604 = vpop.f32.mrf.mxu0
  %605 = vmatprep.mubr.f32.mxu0 0.0
  %606 = vmatmul.mubr.f32.gmra.mxu0 %v194
  %v607 = vpop.f32.mrf.mxu0
  %v608 = vadd.f32 0.0, %v607
  %v609 = vpop.f32.mrf.mxu0
  %610 = vmatprep.mubr.f32.mxu0 0.0
  %611 = vmatmul.mubr.f32.gmra.mxu0 %v197
  %v612 = vpop.f32.mrf.mxu0
  %v613 = vadd.f32 0.0, %v612
  %v614 = vpop.f32.mrf.mxu0
  %615 = vmatprep.mubr.f32.mxu0 0.0
  %616 = vmatmul.mubr.f32.gmra.mxu0 %v200
  %v617 = vpop.f32.mrf.mxu0
  %v618 = vadd.f32 0.0, %v617
  %v619 = vpop.f32.mrf.mxu0
  %620 = vmatprep.mubr.f32.mxu0 0.0
  %621 = vmatmul.mubr.f32.gmra.mxu0 %v203
  %v622 = vpop.f32.mrf.mxu0
  %v623 = vadd.f32 0.0, %v622
  %v624 = vpop.f32.mrf.mxu0
  %625 = vmatprep.mubr.f32.mxu0 0.0
  %626 = vmatmul.mubr.f32.gmra.mxu0 %v206
  %v627 = vpop.f32.mrf.mxu0
  %v628 = vadd.f32 0.0, %v627
  %v629 = vpop.f32.mrf.mxu0
  %630 = vmatprep.mubr.f32.mxu0 0.0
  %631 = vmatmul.mubr.f32.gmra.mxu0 %v209
  %v632 = vpop.f32.mrf.mxu0
  %v633 = vadd.f32 0.0, %v632
  %v634 = vpop.f32.mrf.mxu0
  %635 = vmatprep.mubr.f32.mxu0 0.0
  %636 = vmatmul.mubr.f32.gmra.mxu0 %v212
  %v637 = vpop.f32.mrf.mxu0
  %v638 = vadd.f32 0.0, %v637
  %v639 = vpop.f32.mrf.mxu0
  %640 = vmatprep.mubr.f32.mxu0 0.0
  %641 = vmatmul.mubr.f32.gmra.mxu0 %v215
  %v642 = vpop.f32.mrf.mxu0
  %v643 = vadd.f32 0.0, %v642
  %v644 = vpop.f32.mrf.mxu0
  %645 = vmatprep.mubr.f32.mxu0 0.0
  %646 = vmatmul.mubr.f32.gmra.mxu0 %v218
  %v647 = vpop.f32.mrf.mxu0
  %v648 = vadd.f32 0.0, %v647
  %v649 = vpop.f32.mrf.mxu0
  %650 = vmatprep.mubr.f32.mxu0 0.0
  %651 = vmatmul.mubr.f32.gmra.mxu0 %v221
  %v652 = vpop.f32.mrf.mxu0
  %v653 = vadd.f32 0.0, %v652
  %v654 = vpop.f32.mrf.mxu0
  %655 = vmatprep.mubr.f32.mxu0 0.0
  %656 = vmatmul.mubr.f32.gmra.mxu0 %v224
  %v657 = vpop.f32.mrf.mxu0
  %v658 = vadd.f32 0.0, %v657
  %v659 = vpop.f32.mrf.mxu0
  %660 = vmatprep.mubr.f32.mxu0 0.0
  %661 = vmatmul.mubr.f32.gmra.mxu0 %v227
  %v662 = vpop.f32.mrf.mxu0
  %v663 = vadd.f32 0.0, %v662
  %v664 = vpop.f32.mrf.mxu0
  %665 = vmatprep.mubr.f32.mxu0 0.0
  %666 = vmatmul.mubr.f32.gmra.mxu0 %v230
  %v667 = vpop.f32.mrf.mxu0
  %v668 = vadd.f32 0.0, %v667
  %v669 = vpop.f32.mrf.mxu0
  %670 = vmatprep.mubr.f32.mxu0 0.0
  %671 = vmatmul.mubr.f32.gmra.mxu0 %v233
  %v672 = vpop.f32.mrf.mxu0
  %v673 = vadd.f32 0.0, %v672
  %v674 = vpop.f32.mrf.mxu0
  %675 = vmatprep.mubr.f32.mxu0 0.0
  %676 = vmatmul.mubr.f32.gmra.mxu0 %v236
  %v677 = vpop.f32.mrf.mxu0
  %v678 = vadd.f32 0.0, %v677
  %v679 = vpop.f32.mrf.mxu0
  %680 = vmatprep.mubr.f32.mxu0 0.0
  %681 = vmatmul.mubr.f32.gmra.mxu0 %v239
  %v682 = vpop.f32.mrf.mxu0
  %v683 = vadd.f32 0.0, %v682
  %v684 = vpop.f32.mrf.mxu0
  %685 = vmatprep.mubr.f32.mxu0 0.0
  %686 = vmatmul.mubr.f32.gmra.mxu0 %v242
  %v687 = vpop.f32.mrf.mxu0
  %v688 = vadd.f32 0.0, %v687
  %v689 = vpop.f32.mrf.mxu0
  %690 = vmatprep.mubr.f32.mxu0 0.0
  %691 = vmatmul.mubr.f32.gmra.mxu0 %v245
  %v692 = vpop.f32.mrf.mxu0
  %v693 = vadd.f32 0.0, %v692
  %v694 = vpop.f32.mrf.mxu0
  %695 = vmatprep.mubr.f32.mxu0 0.0
  %696 = vmatmul.mubr.f32.gmra.mxu0 %v248
  %v697 = vpop.f32.mrf.mxu0
  %v698 = vadd.f32 0.0, %v697
  %v699 = vpop.f32.mrf.mxu0
  %700 = vmatprep.mubr.f32.mxu0 0.0
  %701 = vmatmul.mubr.f32.gmra.mxu0 %v251
  %v702 = vpop.f32.mrf.mxu0
  %v703 = vadd.f32 0.0, %v702
  %v704 = vpop.f32.mrf.mxu0
  %705 = vmatprep.mubr.f32.mxu0 0.0
  %706 = vmatmul.mubr.f32.gmra.mxu0 %v254
  %v707 = vpop.f32.mrf.mxu0
  %v708 = vadd.f32 0.0, %v707
  %v709 = vpop.f32.mrf.mxu0
  %710 = vmatprep.mubr.f32.mxu0 0.0
  %711 = vmatmul.mubr.f32.gmra.mxu0 %v257
  %v712 = vpop.f32.mrf.mxu0
  %v713 = vadd.f32 0.0, %v712
  %v714 = vpop.f32.mrf.mxu0
  %715 = vmatprep.mubr.f32.mxu0 0.0
  %716 = vmatmul.mubr.f32.gmra.mxu0 %v260
  %v717 = vpop.f32.mrf.mxu0
  %v718 = vadd.f32 0.0, %v717
  %v719 = vpop.f32.mrf.mxu0
  %720 = vmatprep.mubr.f32.mxu0 0.0
  %721 = vmatmul.mubr.f32.gmra.mxu0 %v263
  %v722 = vpop.f32.mrf.mxu0
  %v723 = vadd.f32 0.0, %v722
  %v724 = vpop.f32.mrf.mxu0
  %725 = vmatprep.mubr.f32.mxu0 0.0
  %726 = vmatmul.mubr.f32.gmra.mxu0 %v266
  %v727 = vpop.f32.mrf.mxu0
  %v728 = vadd.f32 0.0, %v727
  %v729 = vpop.f32.mrf.mxu0
  %730 = vmatprep.mubr.f32.mxu0 0.0
  %731 = vmatmul.mubr.f32.gmra.mxu0 %v269
  %v732 = vpop.f32.mrf.mxu0
  %v733 = vadd.f32 0.0, %v732
  %v734 = vpop.f32.mrf.mxu0
  %735 = vmatprep.mubr.f32.mxu0 0.0
  %736 = vmatmul.mubr.f32.gmra.mxu0 %v272
  %v737 = vpop.f32.mrf.mxu0
  %v738 = vadd.f32 0.0, %v737
  %v739 = vpop.f32.mrf.mxu0
  %740 = vmatprep.mubr.f32.mxu0 0.0
  %741 = vmatmul.mubr.f32.gmra.mxu0 %v275
  %v742 = vpop.f32.mrf.mxu0
  %v743 = vadd.f32 0.0, %v742
  %v744 = vpop.f32.mrf.mxu0
  %745 = vmatprep.mubr.f32.mxu0 0.0
  %746 = vmatmul.mubr.f32.gmra.mxu0 %v278
  %v747 = vpop.f32.mrf.mxu0
  %v748 = vadd.f32 0.0, %v747
  %v749 = vpop.f32.mrf.mxu0
  %750 = vmatprep.mubr.f32.mxu0 0.0
  %751 = vmatmul.mubr.f32.gmra.mxu0 %v281
  %v752 = vpop.f32.mrf.mxu0
  %v753 = vadd.f32 0.0, %v752
  %v754 = vpop.f32.mrf.mxu0
  %755 = vmatprep.mubr.f32.mxu0 0.0
  %756 = vmatmul.mubr.f32.gmra.mxu0 %v284
  %v757 = vpop.f32.mrf.mxu0
  %v758 = vadd.f32 0.0, %v757
  %v759 = vpop.f32.mrf.mxu0
  %760 = vmatprep.mubr.f32.mxu0 0.0
  %761 = vmatmul.mubr.f32.gmra.mxu0 %v287
  %v762 = vpop.f32.mrf.mxu0
  %v763 = vadd.f32 0.0, %v762
  %v764 = vpop.f32.mrf.mxu0
  %765 = vmatprep.mubr.f32.mxu0 0.0
  %766 = vmatmul.mubr.f32.gmra.mxu0 %v290
  %v767 = vpop.f32.mrf.mxu0
  %v768 = vadd.f32 0.0, %v767
  %v769 = vpop.f32.mrf.mxu0
  %770 = vmatprep.mubr.f32.mxu0 0.0
  %771 = vmatmul.mubr.f32.gmra.mxu0 %v293
  %v772 = vpop.f32.mrf.mxu0
  %v773 = vadd.f32 0.0, %v772
  %v774 = vpop.f32.mrf.mxu0
  %775 = vmatprep.mubr.f32.mxu0 0.0
  %776 = vmatmul.mubr.f32.gmra.mxu0 %v296
  %v777 = vpop.f32.mrf.mxu0
  %v778 = vadd.f32 0.0, %v777
  %v779 = vpop.f32.mrf.mxu0
  %780 = vmatprep.mubr.f32.mxu0 0.0
  %781 = vmatmul.mubr.f32.gmra.mxu0 %v299
  %v782 = vpop.f32.mrf.mxu0
  %v783 = vadd.f32 0.0, %v782
  %v784 = vpop.f32.mrf.mxu0
  %785 = vmatprep.mubr.f32.mxu0 0.0
  %786 = vmatmul.mubr.f32.gmra.mxu0 %v302
  %v787 = vpop.f32.mrf.mxu0
  %v788 = vadd.f32 0.0, %v787
  %v789 = vpop.f32.mrf.mxu0
  %790 = vmatprep.mubr.f32.mxu0 0.0
  %791 = vmatmul.mubr.f32.gmra.mxu0 %v305
  %v792 = vpop.f32.mrf.mxu0
  %v793 = vadd.f32 0.0, %v792
  %v794 = vpop.f32.mrf.mxu0
  %795 = vmatprep.mubr.f32.mxu0 0.0
  %796 = vmatmul.mubr.f32.gmra.mxu0 %v308
  %v797 = vpop.f32.mrf.mxu0
  %v798 = vadd.f32 0.0, %v797
  %v799 = vpop.f32.mrf.mxu0
  %800 = vmatprep.mubr.f32.mxu0 0.0
  %801 = vmatmul.mubr.f32.gmra.mxu0 %v311
  %v802 = vpop.f32.mrf.mxu0
  %v803 = vadd.f32 0.0, %v802
  %v804 = vpop.f32.mrf.mxu0
  %805 = vmatprep.mubr.f32.mxu0 0.0
  %806 = vmatmul.mubr.f32.gmra.mxu0 %v314
  %v807 = vpop.f32.mrf.mxu0
  %v808 = vadd.f32 0.0, %v807
  %v809 = vpop.f32.mrf.mxu0
  %810 = vmatprep.mubr.f32.mxu0 0.0
  %811 = vmatmul.mubr.f32.gmra.mxu0 %v317
  %v812 = vpop.f32.mrf.mxu0
  %v813 = vadd.f32 0.0, %v812
  %v814 = vpop.f32.mrf.mxu0
  %815 = vmatprep.mubr.f32.mxu0 0.0
  %816 = vmatmul.mubr.f32.gmra.mxu0 %v320
  %v817 = vpop.f32.mrf.mxu0
  %v818 = vadd.f32 0.0, %v817
  %v819 = vpop.f32.mrf.mxu0
  %820 = vmatprep.mubr.f32.mxu0 0.0
  %821 = vmatmul.mubr.f32.gmra.mxu0 %v323
  %v822 = vpop.f32.mrf.mxu0
  %v823 = vadd.f32 0.0, %v822
  %v824 = vpop.f32.mrf.mxu0
  %825 = vmatprep.mubr.f32.mxu0 0.0
  %826 = vmatmul.mubr.f32.gmra.mxu0 %v326
  %v827 = vpop.f32.mrf.mxu0
  %v828 = vadd.f32 0.0, %v827
  %v829 = vpop.f32.mrf.mxu0
  %830 = vmatprep.mubr.f32.mxu0 0.0
  %831 = vmatmul.mubr.f32.gmra.mxu0 %v329
  %v832 = vpop.f32.mrf.mxu0
  %v833 = vadd.f32 0.0, %v832
  %v834 = vpop.f32.mrf.mxu0
  %835 = vmatprep.mubr.f32.mxu0 0.0
  %836 = vmatmul.mubr.f32.gmra.mxu0 %v332
  %v837 = vpop.f32.mrf.mxu0
  %v838 = vadd.f32 0.0, %v837
  %v839 = vpop.f32.mrf.mxu0
  %840 = vmatprep.mubr.f32.mxu0 0.0
  %841 = vmatmul.mubr.f32.gmra.mxu0 %v335
  %v842 = vpop.f32.mrf.mxu0
  %v843 = vadd.f32 0.0, %v842
  %v844 = vpop.f32.mrf.mxu0
  %845 = vmatprep.mubr.f32.mxu0 0.0
  %846 = vmatmul.mubr.f32.gmra.mxu0 %v338
  %v847 = vpop.f32.mrf.mxu0
  %v848 = vadd.f32 0.0, %v847
  %v849 = vpop.f32.mrf.mxu0
  %850 = vmatprep.mubr.f32.mxu0 0.0
  %851 = vmatmul.mubr.f32.gmra.mxu0 %v341
  %v852 = vpop.f32.mrf.mxu0
  %v853 = vadd.f32 0.0, %v852
  %v854 = vpop.f32.mrf.mxu0
  %855 = vmatprep.mubr.f32.mxu0 0.0
  %856 = vmatmul.mubr.f32.gmra.mxu0 %v344
  %v857 = vpop.f32.mrf.mxu0
  %v858 = vadd.f32 0.0, %v857
  %v859 = vpop.f32.mrf.mxu0
  %860 = vmatprep.mubr.f32.mxu0 0.0
  %861 = vmatmul.mubr.f32.gmra.mxu0 %v347
  %v862 = vpop.f32.mrf.mxu0
  %v863 = vadd.f32 0.0, %v862
  %v864 = vpop.f32.mrf.mxu0
  %865 = vmatprep.mubr.f32.mxu0 0.0
  %866 = vmatmul.mubr.f32.gmra.mxu0 %v350
  %v867 = vpop.f32.mrf.mxu0
  %v868 = vadd.f32 0.0, %v867
  %v869 = vpop.f32.mrf.mxu0
  %870 = vmatprep.mubr.f32.mxu0 0.0
  %871 = vmatmul.mubr.f32.gmra.mxu0 %v353
  %v872 = vpop.f32.mrf.mxu0
  %v873 = vadd.f32 0.0, %v872
  %v874 = vpop.f32.mrf.mxu0
  %875 = vmatprep.mubr.f32.mxu0 0.0
  %876 = vmatmul.mubr.f32.gmra.mxu0 %v356
  %v877 = vpop.f32.mrf.mxu0
  %v878 = vadd.f32 0.0, %v877
  %v879 = vpop.f32.mrf.mxu0
  %880 = vmatprep.mubr.f32.mxu0 0.0
  %881 = vmatmul.mubr.f32.gmra.mxu0 %v359
  %v882 = vpop.f32.mrf.mxu0
  %v883 = vadd.f32 0.0, %v882
  %v884 = vpop.f32.mrf.mxu0
  %885 = vmatprep.mubr.f32.mxu0 0.0
  %886 = vmatmul.mubr.f32.gmra.mxu0 %v362
  %v887 = vpop.f32.mrf.mxu0
  %v888 = vadd.f32 0.0, %v887
  %v889 = vpop.f32.mrf.mxu0
  %890 = vmatprep.mubr.f32.mxu0 0.0
  %891 = vmatmul.mubr.f32.gmra.mxu0 %v365
  %v892 = vpop.f32.mrf.mxu0
  %v893 = vadd.f32 0.0, %v892
  %v894 = vpop.f32.mrf.mxu0
  %895 = vmatprep.mubr.f32.mxu0 0.0
  %896 = vmatmul.mubr.f32.gmra.mxu0 %v368
  %v897 = vpop.f32.mrf.mxu0
  %v898 = vadd.f32 0.0, %v897
  %v899 = vpop.f32.mrf.mxu0
  %900 = vmatprep.mubr.f32.mxu0 0.0
  %901 = vmatmul.mubr.f32.gmra.mxu0 %v371
  %v902 = vpop.f32.mrf.mxu0
  %v903 = vadd.f32 0.0, %v902
  %v904 = vpop.f32.mrf.mxu0
  %905 = vmatprep.mubr.f32.mxu0 0.0
  %906 = vmatmul.mubr.f32.gmra.mxu0 %v374
  %v907 = vpop.f32.mrf.mxu0
  %v908 = vadd.f32 0.0, %v907
  %v909 = vpop.f32.mrf.mxu0
  %910 = vmatprep.mubr.f32.mxu0 0.0
  %911 = vmatmul.mubr.f32.gmra.mxu0 %v377
  %v912 = vpop.f32.mrf.mxu0
  %v913 = vadd.f32 0.0, %v912
  %v914 = vpop.f32.mrf.mxu0
  %915 = vmatprep.mubr.f32.mxu0 0.0
  %916 = vmatmul.mubr.f32.gmra.mxu0 %v380
  %v917 = vpop.f32.mrf.mxu0
  %v918 = vadd.f32 0.0, %v917
  %v919 = vpop.f32.mrf.mxu0
  %920 = vmatprep.mubr.f32.mxu0 0.0
  %921 = vmatmul.mubr.f32.gmra.mxu0 %v383
  %v922 = vpop.f32.mrf.mxu0
  %v923 = vadd.f32 0.0, %v922
  %v924 = vpop.f32.mrf.mxu0
  %925 = vmatprep.mubr.f32.mxu0 0.0
  %926 = vmatmul.mubr.f32.gmra.mxu0 %v386
  %v927 = vpop.f32.mrf.mxu0
  %v928 = vadd.f32 0.0, %v927
  %v929 = vpop.f32.mrf.mxu0
  %930 = vmatprep.mubr.f32.mxu0 0.0
  %931 = vmatmul.mubr.f32.gmra.mxu0 %v389
  %v932 = vpop.f32.mrf.mxu0
  %v933 = vadd.f32 0.0, %v932
  %v934 = vpop.f32.mrf.mxu0
  %935 = vmatprep.mubr.f32.mxu0 0.0
  %936 = vmatmul.mubr.f32.gmra.mxu0 %v392
  %v937 = vpop.f32.mrf.mxu0
  %v938 = vadd.f32 0.0, %v937
  %v939 = vpop.f32.mrf.mxu0
  %940 = vmatprep.mubr.f32.mxu0 0.0
  %941 = vmatmul.mubr.f32.gmra.mxu0 %v395
  %v942 = vpop.f32.mrf.mxu0
  %v943 = vadd.f32 0.0, %v942
  %v944 = vpop.f32.mrf.mxu0
  %945 = vdwg.mxu0
  %vm946 = vcmask 31744
  %947 = vst.msk [vmem:[%s2] sm:$0xff] %vm946, %v468
  %948 = vst.msk [vmem:[%s2 + $0x8] sm:$0xff] %vm946, %v473
  %949 = vst.msk [vmem:[%s2 + $0x10] sm:$0xff] %vm946, %v478
  %950 = vst.msk [vmem:[%s2 + $0x18] sm:$0xff] %vm946, %v483
  %951 = vst.msk [vmem:[%s2 + $0x20] sm:$0xff] %vm946, %v488
  %952 = vst.msk [vmem:[%s2 + $0x28] sm:$0xff] %vm946, %v493
  %953 = vst.msk [vmem:[%s2 + $0x30] sm:$0xff] %vm946, %v498
  %954 = vst.msk [vmem:[%s2 + $0x38] sm:$0xff] %vm946, %v503
  %955 = vst.msk [vmem:[%s2 + $0x40] sm:$0xff] %vm946, %v508
  %956 = vst.msk [vmem:[%s2 + $0x48] sm:$0xff] %vm946, %v513
  %957 = vst.msk [vmem:[%s2 + $0x50] sm:$0xff] %vm946, %v518
  %958 = vst.msk [vmem:[%s2 + $0x58] sm:$0xff] %vm946, %v523
  %959 = vst.msk [vmem:[%s2 + $0x60] sm:$0xff] %vm946, %v528
  %960 = vst.msk [vmem:[%s2 + $0x68] sm:$0xff] %vm946, %v533
  %961 = vst.msk [vmem:[%s2 + $0x70] sm:$0xff] %vm946, %v538
  %962 = vst.msk [vmem:[%s2 + $0x78] sm:$0xff] %vm946, %v543
  %963 = vst.msk [vmem:[%s2 + $0x80] sm:$0xff] %vm946, %v548
  %964 = vst.msk [vmem:[%s2 + $0x88] sm:$0xff] %vm946, %v553
  %965 = vst.msk [vmem:[%s2 + $0x90] sm:$0xff] %vm946, %v558
  %966 = vst.msk [vmem:[%s2 + $0x98] sm:$0xff] %vm946, %v563
  %967 = vst.msk [vmem:[%s2 + $0xa0] sm:$0xff] %vm946, %v568
  %968 = vst.msk [vmem:[%s2 + $0xa8] sm:$0xff] %vm946, %v573
  %969 = vst.msk [vmem:[%s2 + $0xb0] sm:$0xff] %vm946, %v578
  %970 = vst.msk [vmem:[%s2 + $0xb8] sm:$0xff] %vm946, %v583
  %971 = vst.msk [vmem:[%s2 + $0xc0] sm:$0xff] %vm946, %v588
  %972 = vst.msk [vmem:[%s2 + $0xc8] sm:$0xff] %vm946, %v593
  %973 = vst.msk [vmem:[%s2 + $0xd0] sm:$0xff] %vm946, %v598
  %974 = vst.msk [vmem:[%s2 + $0xd8] sm:$0xff] %vm946, %v603
  %975 = vst.msk [vmem:[%s2 + $0xe0] sm:$0xff] %vm946, %v608
  %976 = vst.msk [vmem:[%s2 + $0xe8] sm:$0xff] %vm946, %v613
  %977 = vst.msk [vmem:[%s2 + $0xf0] sm:$0xff] %vm946, %v618
  %978 = vst.msk [vmem:[%s2 + $0xf8] sm:$0xff] %vm946, %v623
  %979 = vst.msk [vmem:[%s2 + $0x100] sm:$0xff] %vm946, %v628
  %980 = vst.msk [vmem:[%s2 + $0x108] sm:$0xff] %vm946, %v633
  %981 = vst.msk [vmem:[%s2 + $0x110] sm:$0xff] %vm946, %v638
  %982 = vst.msk [vmem:[%s2 + $0x118] sm:$0xff] %vm946, %v643
  %983 = vst.msk [vmem:[%s2 + $0x120] sm:$0xff] %vm946, %v648
  %984 = vst.msk [vmem:[%s2 + $0x128] sm:$0xff] %vm946, %v653
  %985 = vst.msk [vmem:[%s2 + $0x130] sm:$0xff] %vm946, %v658
  %986 = vst.msk [vmem:[%s2 + $0x138] sm:$0xff] %vm946, %v663
  %987 = vst.msk [vmem:[%s2 + $0x140] sm:$0xff] %vm946, %v668
  %988 = vst.msk [vmem:[%s2 + $0x148] sm:$0xff] %vm946, %v673
  %989 = vst.msk [vmem:[%s2 + $0x150] sm:$0xff] %vm946, %v678
  %990 = vst.msk [vmem:[%s2 + $0x158] sm:$0xff] %vm946, %v683
  %991 = vst.msk [vmem:[%s2 + $0x160] sm:$0xff] %vm946, %v688
  %992 = vst.msk [vmem:[%s2 + $0x168] sm:$0xff] %vm946, %v693
  %993 = vst.msk [vmem:[%s2 + $0x170] sm:$0xff] %vm946, %v698
  %994 = vst.msk [vmem:[%s2 + $0x178] sm:$0xff] %vm946, %v703
  %995 = vst.msk [vmem:[%s2 + $0x180] sm:$0xff] %vm946, %v708
  %996 = vst.msk [vmem:[%s2 + $0x188] sm:$0xff] %vm946, %v713
  %997 = vst.msk [vmem:[%s2 + $0x190] sm:$0xff] %vm946, %v718
  %998 = vst.msk [vmem:[%s2 + $0x198] sm:$0xff] %vm946, %v723
  %999 = vst.msk [vmem:[%s2 + $0x1a0] sm:$0xff] %vm946, %v728
  %1000 = vst.msk [vmem:[%s2 + $0x1a8] sm:$0xff] %vm946, %v733
  %1001 = vst.msk [vmem:[%s2 + $0x1b0] sm:$0xff] %vm946, %v738
  %1002 = vst.msk [vmem:[%s2 + $0x1b8] sm:$0xff] %vm946, %v743
  %1003 = vst.msk [vmem:[%s2 + $0x1c0] sm:$0xff] %vm946, %v748
  %1004 = vst.msk [vmem:[%s2 + $0x1c8] sm:$0xff] %vm946, %v753
  %1005 = vst.msk [vmem:[%s2 + $0x1d0] sm:$0xff] %vm946, %v758
  %1006 = vst.msk [vmem:[%s2 + $0x1d8] sm:$0xff] %vm946, %v763
  %1007 = vst.msk [vmem:[%s2 + $0x1e0] sm:$0xff] %vm946, %v768
  %1008 = vst.msk [vmem:[%s2 + $0x1e8] sm:$0xff] %vm946, %v773
  %1009 = vst.msk [vmem:[%s2 + $0x1f0] sm:$0xff] %vm946, %v778
  %1010 = vst.msk [vmem:[%s2 + $0x1f8] sm:$0xff] %vm946, %v783
  %1011 = vst.msk [vmem:[%s2 + $0x200] sm:$0xff] %vm946, %v788
  %1012 = vst.msk [vmem:[%s2 + $0x208] sm:$0xff] %vm946, %v793
  %1013 = vst.msk [vmem:[%s2 + $0x210] sm:$0xff] %vm946, %v798
  %1014 = vst.msk [vmem:[%s2 + $0x218] sm:$0xff] %vm946, %v803
  %1015 = vst.msk [vmem:[%s2 + $0x220] sm:$0xff] %vm946, %v808
  %1016 = vst.msk [vmem:[%s2 + $0x228] sm:$0xff] %vm946, %v813
  %1017 = vst.msk [vmem:[%s2 + $0x230] sm:$0xff] %vm946, %v818
  %1018 = vst.msk [vmem:[%s2 + $0x238] sm:$0xff] %vm946, %v823
  %1019 = vst.msk [vmem:[%s2 + $0x240] sm:$0xff] %vm946, %v828
  %1020 = vst.msk [vmem:[%s2 + $0x248] sm:$0xff] %vm946, %v833
  %1021 = vst.msk [vmem:[%s2 + $0x250] sm:$0xff] %vm946, %v838
  %1022 = vst.msk [vmem:[%s2 + $0x258] sm:$0xff] %vm946, %v843
  %1023 = vst.msk [vmem:[%s2 + $0x260] sm:$0xff] %vm946, %v848
  %1024 = vst.msk [vmem:[%s2 + $0x268] sm:$0xff] %vm946, %v853
  %1025 = vst.msk [vmem:[%s2 + $0x270] sm:$0xff] %vm946, %v858
  %1026 = vst.msk [vmem:[%s2 + $0x278] sm:$0xff] %vm946, %v863
  %1027 = vst.msk [vmem:[%s2 + $0x280] sm:$0xff] %vm946, %v868
  %1028 = vst.msk [vmem:[%s2 + $0x288] sm:$0xff] %vm946, %v873
  %1029 = vst.msk [vmem:[%s2 + $0x290] sm:$0xff] %vm946, %v878
  %1030 = vst.msk [vmem:[%s2 + $0x298] sm:$0xff] %vm946, %v883
  %1031 = vst.msk [vmem:[%s2 + $0x2a0] sm:$0xff] %vm946, %v888
  %1032 = vst.msk [vmem:[%s2 + $0x2a8] sm:$0xff] %vm946, %v893
  %1033 = vst.msk [vmem:[%s2 + $0x2b0] sm:$0xff] %vm946, %v898
  %1034 = vst.msk [vmem:[%s2 + $0x2b8] sm:$0xff] %vm946, %v903
  %1035 = vst.msk [vmem:[%s2 + $0x2c0] sm:$0xff] %vm946, %v908
  %1036 = vst.msk [vmem:[%s2 + $0x2c8] sm:$0xff] %vm946, %v913
  %1037 = vst.msk [vmem:[%s2 + $0x2d0] sm:$0xff] %vm946, %v918
  %1038 = vst.msk [vmem:[%s2 + $0x2d8] sm:$0xff] %vm946, %v923
  %1039 = vst.msk [vmem:[%s2 + $0x2e0] sm:$0xff] %vm946, %v928
  %1040 = vst.msk [vmem:[%s2 + $0x2e8] sm:$0xff] %vm946, %v933
  %1041 = vst.msk [vmem:[%s2 + $0x2f0] sm:$0xff] %vm946, %v938
  %1042 = vst.msk [vmem:[%s2 + $0x2f8] sm:$0xff] %vm946, %v943
  // Predicated region
  $region10: #{sparse_feature_pyramid.13} parent=0 // pred_check
    _
  $region11: #{sparse_feature_pyramid.13} parent=0 // pred_check_branch
    %1044 = sbr.rel (0) target = $region13
  $region12: #{sparse_feature_pyramid.13} parent=0 // pred_region
    _
  $region13: #{sparse_feature_pyramid.13} parent=0 // pred_fallthru
    _
  // Predicated region
  $region14: #{sparse_feature_pyramid.13} parent=0 // pred_check
    _
  $region15: #{sparse_feature_pyramid.13} parent=0 // pred_check_branch
    %1046 = sbr.rel (0) target = $region17
  $region16: #{sparse_feature_pyramid.13} parent=0 // pred_region
    _
  $region17: #{sparse_feature_pyramid.13} parent=0 // pred_fallthru
    _

// kernel: sparse_feature_pyramid.15
$region0: #{sparse_feature_pyramid.15}
  #allocation0 [shape = 'u32[]', space=smem, size = 0x4, offset = 0x4, fixed_abs, tag = 'smem constant byte address 0x4 - core index']
  #allocation1 [shape = 'u32[144,128]{1,0:T(1,128)}', space=vmem, size = 0x12000, scoped, tag = 'internal scratch']
  %s0 = inlined_call_operand.vmem [shape: f32[768,4], index: 0, kind: input, shape index: {}]
  %s1 = inlined_call_operand.vmem [shape: f32[4,8], index: 1, kind: input, shape index: {}]
  %s2 = inlined_call_operand.vmem [shape: f32[768,8], index: 2, kind: output, shape index: {}]
  %s3 = sld [smem:[#allocation0]]
  $region18: #{sparse_feature_pyramid.15} parent=0
    _
  %s5 = ssub.s32 1, %s3
  %s6 = scalar_select 0, %s5, %s3
  // Predicated region
  $region2: #{sparse_feature_pyramid.15} parent=0 // pred_check
    _
  $region3: #{sparse_feature_pyramid.15} parent=0 // pred_check_branch
    %8 = sbr.rel (0) target = $region5
  $region4: #{sparse_feature_pyramid.15} parent=0 // pred_region
    _
  $region5: #{sparse_feature_pyramid.15} parent=0 // pred_fallthru
    _
  // Predicated region
  $region6: #{sparse_feature_pyramid.15} parent=0 // pred_check
    _
  $region7: #{sparse_feature_pyramid.15} parent=0 // pred_check_branch
    %10 = sbr.rel (0) target = $region9
  $region8: #{sparse_feature_pyramid.15} parent=0 // pred_region
    _
  $region9: #{sparse_feature_pyramid.15} parent=0 // pred_fallthru
    _
  %v11 = vld [vmem:[%s0] sm:$0xff]
  %v12 = vld [vmem:[%s0 + $0x8] sm:$0xff]
  %v13 = vld [vmem:[%s0 + $0x10] sm:$0xff]
  %v14 = vld [vmem:[%s0 + $0x18] sm:$0xff]
  %v15 = vld [vmem:[%s0 + $0x20] sm:$0xff]
  %v16 = vld [vmem:[%s0 + $0x28] sm:$0xff]
  %v17 = vld [vmem:[%s0 + $0x30] sm:$0xff]
  %v18 = vld [vmem:[%s0 + $0x38] sm:$0xff]
  %v19 = vld [vmem:[%s0 + $0x40] sm:$0xff]
  %v20 = vld [vmem:[%s0 + $0x48] sm:$0xff]
  %v21 = vld [vmem:[%s0 + $0x50] sm:$0xff]
  %v22 = vld [vmem:[%s0 + $0x58] sm:$0xff]
  %v23 = vld [vmem:[%s0 + $0x60] sm:$0xff]
  %v24 = vld [vmem:[%s0 + $0x68] sm:$0xff]
  %v25 = vld [vmem:[%s0 + $0x70] sm:$0xff]
  %v26 = vld [vmem:[%s0 + $0x78] sm:$0xff]
  %v27 = vld [vmem:[%s0 + $0x80] sm:$0xff]
  %v28 = vld [vmem:[%s0 + $0x88] sm:$0xff]
  %v29 = vld [vmem:[%s0 + $0x90] sm:$0xff]
  %v30 = vld [vmem:[%s0 + $0x98] sm:$0xff]
  %v31 = vld [vmem:[%s0 + $0xa0] sm:$0xff]
  %v32 = vld [vmem:[%s0 + $0xa8] sm:$0xff]
  %v33 = vld [vmem:[%s0 + $0xb0] sm:$0xff]
  %v34 = vld [vmem:[%s0 + $0xb8] sm:$0xff]
  %v35 = vld [vmem:[%s0 + $0xc0] sm:$0xff]
  %v36 = vld [vmem:[%s0 + $0xc8] sm:$0xff]
  %v37 = vld [vmem:[%s0 + $0xd0] sm:$0xff]
  %v38 = vld [vmem:[%s0 + $0xd8] sm:$0xff]
  %v39 = vld [vmem:[%s0 + $0xe0] sm:$0xff]
  %v40 = vld [vmem:[%s0 + $0xe8] sm:$0xff]
  %v41 = vld [vmem:[%s0 + $0xf0] sm:$0xff]
  %v42 = vld [vmem:[%s0 + $0xf8] sm:$0xff]
  %v43 = vld [vmem:[%s0 + $0x100] sm:$0xff]
  %v44 = vld [vmem:[%s0 + $0x108] sm:$0xff]
  %v45 = vld [vmem:[%s0 + $0x110] sm:$0xff]
  %v46 = vld [vmem:[%s0 + $0x118] sm:$0xff]
  %v47 = vld [vmem:[%s0 + $0x120] sm:$0xff]
  %v48 = vld [vmem:[%s0 + $0x128] sm:$0xff]
  %v49 = vld [vmem:[%s0 + $0x130] sm:$0xff]
  %v50 = vld [vmem:[%s0 + $0x138] sm:$0xff]
  %v51 = vld [vmem:[%s0 + $0x140] sm:$0xff]
  %v52 = vld [vmem:[%s0 + $0x148] sm:$0xff]
  %v53 = vld [vmem:[%s0 + $0x150] sm:$0xff]
  %v54 = vld [vmem:[%s0 + $0x158] sm:$0xff]
  %v55 = vld [vmem:[%s0 + $0x160] sm:$0xff]
  %v56 = vld [vmem:[%s0 + $0x168] sm:$0xff]
  %v57 = vld [vmem:[%s0 + $0x170] sm:$0xff]
  %v58 = vld [vmem:[%s0 + $0x178] sm:$0xff]
  %v59 = vld [vmem:[%s0 + $0x180] sm:$0xff]
  %v60 = vld [vmem:[%s0 + $0x188] sm:$0xff]
  %v61 = vld [vmem:[%s0 + $0x190] sm:$0xff]
  %v62 = vld [vmem:[%s0 + $0x198] sm:$0xff]
  %v63 = vld [vmem:[%s0 + $0x1a0] sm:$0xff]
  %v64 = vld [vmem:[%s0 + $0x1a8] sm:$0xff]
  %v65 = vld [vmem:[%s0 + $0x1b0] sm:$0xff]
  %v66 = vld [vmem:[%s0 + $0x1b8] sm:$0xff]
  %v67 = vld [vmem:[%s0 + $0x1c0] sm:$0xff]
  %v68 = vld [vmem:[%s0 + $0x1c8] sm:$0xff]
  %v69 = vld [vmem:[%s0 + $0x1d0] sm:$0xff]
  %v70 = vld [vmem:[%s0 + $0x1d8] sm:$0xff]
  %v71 = vld [vmem:[%s0 + $0x1e0] sm:$0xff]
  %v72 = vld [vmem:[%s0 + $0x1e8] sm:$0xff]
  %v73 = vld [vmem:[%s0 + $0x1f0] sm:$0xff]
  %v74 = vld [vmem:[%s0 + $0x1f8] sm:$0xff]
  %v75 = vld [vmem:[%s0 + $0x200] sm:$0xff]
  %v76 = vld [vmem:[%s0 + $0x208] sm:$0xff]
  %v77 = vld [vmem:[%s0 + $0x210] sm:$0xff]
  %v78 = vld [vmem:[%s0 + $0x218] sm:$0xff]
  %v79 = vld [vmem:[%s0 + $0x220] sm:$0xff]
  %v80 = vld [vmem:[%s0 + $0x228] sm:$0xff]
  %v81 = vld [vmem:[%s0 + $0x230] sm:$0xff]
  %v82 = vld [vmem:[%s0 + $0x238] sm:$0xff]
  %v83 = vld [vmem:[%s0 + $0x240] sm:$0xff]
  %v84 = vld [vmem:[%s0 + $0x248] sm:$0xff]
  %v85 = vld [vmem:[%s0 + $0x250] sm:$0xff]
  %v86 = vld [vmem:[%s0 + $0x258] sm:$0xff]
  %v87 = vld [vmem:[%s0 + $0x260] sm:$0xff]
  %v88 = vld [vmem:[%s0 + $0x268] sm:$0xff]
  %v89 = vld [vmem:[%s0 + $0x270] sm:$0xff]
  %v90 = vld [vmem:[%s0 + $0x278] sm:$0xff]
  %v91 = vld [vmem:[%s0 + $0x280] sm:$0xff]
  %v92 = vld [vmem:[%s0 + $0x288] sm:$0xff]
  %v93 = vld [vmem:[%s0 + $0x290] sm:$0xff]
  %v94 = vld [vmem:[%s0 + $0x298] sm:$0xff]
  %v95 = vld [vmem:[%s0 + $0x2a0] sm:$0xff]
  %v96 = vld [vmem:[%s0 + $0x2a8] sm:$0xff]
  %v97 = vld [vmem:[%s0 + $0x2b0] sm:$0xff]
  %v98 = vld [vmem:[%s0 + $0x2b8] sm:$0xff]
  %v99 = vld [vmem:[%s0 + $0x2c0] sm:$0xff]
  %v100 = vld [vmem:[%s0 + $0x2c8] sm:$0xff]
  %v101 = vld [vmem:[%s0 + $0x2d0] sm:$0xff]
  %v102 = vld [vmem:[%s0 + $0x2d8] sm:$0xff]
  %v103 = vld [vmem:[%s0 + $0x2e0] sm:$0xff]
  %v104 = vld [vmem:[%s0 + $0x2e8] sm:$0xff]
  %v105 = vld [vmem:[%s0 + $0x2f0] sm:$0xff]
  %v106 = vld [vmem:[%s0 + $0x2f8] sm:$0xff]
  %v107 = vld [vmem:[%s1] sm:$0xf]
  %vm108 = vcmask 31744
  %v110 = vsel %vm108, %v11, 0
  %v113 = vsel %vm108, %v12, 0
  %v116 = vsel %vm108, %v13, 0
  %v119 = vsel %vm108, %v14, 0
  %v122 = vsel %vm108, %v15, 0
  %v125 = vsel %vm108, %v16, 0
  %v128 = vsel %vm108, %v17, 0
  %v131 = vsel %vm108, %v18, 0
  %v134 = vsel %vm108, %v19, 0
  %v137 = vsel %vm108, %v20, 0
  %v140 = vsel %vm108, %v21, 0
  %v143 = vsel %vm108, %v22, 0
  %v146 = vsel %vm108, %v23, 0
  %v149 = vsel %vm108, %v24, 0
  %v152 = vsel %vm108, %v25, 0
  %v155 = vsel %vm108, %v26, 0
  %v158 = vsel %vm108, %v27, 0
  %v161 = vsel %vm108, %v28, 0
  %v164 = vsel %vm108, %v29, 0
  %v167 = vsel %vm108, %v30, 0
  %v170 = vsel %vm108, %v31, 0
  %v173 = vsel %vm108, %v32, 0
  %v176 = vsel %vm108, %v33, 0
  %v179 = vsel %vm108, %v34, 0
  %v182 = vsel %vm108, %v35, 0
  %v185 = vsel %vm108, %v36, 0
  %v188 = vsel %vm108, %v37, 0
  %v191 = vsel %vm108, %v38, 0
  %v194 = vsel %vm108, %v39, 0
  %v197 = vsel %vm108, %v40, 0
  %v200 = vsel %vm108, %v41, 0
  %v203 = vsel %vm108, %v42, 0
  %v206 = vsel %vm108, %v43, 0
  %v209 = vsel %vm108, %v44, 0
  %v212 = vsel %vm108, %v45, 0
  %v215 = vsel %vm108, %v46, 0
  %v218 = vsel %vm108, %v47, 0
  %v221 = vsel %vm108, %v48, 0
  %v224 = vsel %vm108, %v49, 0
  %v227 = vsel %vm108, %v50, 0
  %v230 = vsel %vm108, %v51, 0
  %v233 = vsel %vm108, %v52, 0
  %v236 = vsel %vm108, %v53, 0
  %v239 = vsel %vm108, %v54, 0
  %v242 = vsel %vm108, %v55, 0
  %v245 = vsel %vm108, %v56, 0
  %v248 = vsel %vm108, %v57, 0
  %v251 = vsel %vm108, %v58, 0
  %v254 = vsel %vm108, %v59, 0
  %v257 = vsel %vm108, %v60, 0
  %v260 = vsel %vm108, %v61, 0
  %v263 = vsel %vm108, %v62, 0
  %v266 = vsel %vm108, %v63, 0
  %v269 = vsel %vm108, %v64, 0
  %v272 = vsel %vm108, %v65, 0
  %v275 = vsel %vm108, %v66, 0
  %v278 = vsel %vm108, %v67, 0
  %v281 = vsel %vm108, %v68, 0
  %v284 = vsel %vm108, %v69, 0
  %v287 = vsel %vm108, %v70, 0
  %v290 = vsel %vm108, %v71, 0
  %v293 = vsel %vm108, %v72, 0
  %v296 = vsel %vm108, %v73, 0
  %v299 = vsel %vm108, %v74, 0
  %v302 = vsel %vm108, %v75, 0
  %v305 = vsel %vm108, %v76, 0
  %v308 = vsel %vm108, %v77, 0
  %v311 = vsel %vm108, %v78, 0
  %v314 = vsel %vm108, %v79, 0
  %v317 = vsel %vm108, %v80, 0
  %v320 = vsel %vm108, %v81, 0
  %v323 = vsel %vm108, %v82, 0
  %v326 = vsel %vm108, %v83, 0
  %v329 = vsel %vm108, %v84, 0
  %v332 = vsel %vm108, %v85, 0
  %v335 = vsel %vm108, %v86, 0
  %v338 = vsel %vm108, %v87, 0
  %v341 = vsel %vm108, %v88, 0
  %v344 = vsel %vm108, %v89, 0
  %v347 = vsel %vm108, %v90, 0
  %v350 = vsel %vm108, %v91, 0
  %v353 = vsel %vm108, %v92, 0
  %v356 = vsel %vm108, %v93, 0
  %v359 = vsel %vm108, %v94, 0
  %v362 = vsel %vm108, %v95, 0
  %v365 = vsel %vm108, %v96, 0
  %v368 = vsel %vm108, %v97, 0
  %v371 = vsel %vm108, %v98, 0
  %v374 = vsel %vm108, %v99, 0
  %v377 = vsel %vm108, %v100, 0
  %v380 = vsel %vm108, %v101, 0
  %v383 = vsel %vm108, %v102, 0
  %v386 = vsel %vm108, %v103, 0
  %v389 = vsel %vm108, %v104, 0
  %v392 = vsel %vm108, %v105, 0
  %v395 = vsel %vm108, %v106, 0
  %vm397 = vcmask 1043456
  %v399 = vsel %vm397, %v107, 0
  %401 = vmatprep.subr.mxu0 0.0
  %402 = vmatpush1.msra.mxu0 0.0
  %403 = vmatprep.subr.mxu0 0.0
  %404 = vmatpush1.msra.mxu0 0.0
  %405 = vmatprep.subr.mxu0 0.0
  %406 = vmatpush1.msra.mxu0 0.0
  %407 = vmatprep.subr.mxu0 0.0
  %408 = vmatpush1.msra.mxu0 0.0
  %409 = vmatprep.subr.mxu0 0.0
  %410 = vmatpush1.msra.mxu0 0.0
  %411 = vmatprep.subr.mxu0 0.0
  %412 = vmatpush1.msra.mxu0 0.0
  %413 = vmatprep.subr.mxu0 0.0
  %414 = vmatpush1.msra.mxu0 0.0
  %415 = vmatprep.subr.mxu0 0.0
  %416 = vmatpush1.msra.mxu0 0.0
  %417 = vmatprep.subr.mxu0 0.0
  %418 = vmatpush1.msra.mxu0 0.0
  %419 = vmatprep.subr.mxu0 0.0
  %420 = vmatpush1.msra.mxu0 0.0
  %421 = vmatprep.subr.mxu0 0.0
  %422 = vmatpush1.msra.mxu0 0.0
  %423 = vmatprep.subr.mxu0 0.0
  %424 = vmatpush1.msra.mxu0 0.0
  %425 = vmatprep.subr.mxu0 0.0
  %426 = vmatpush1.msra.mxu0 0.0
  %427 = vmatprep.subr.mxu0 0.0
  %428 = vmatpush1.msra.mxu0 0.0
  %429 = vmatprep.subr.mxu0 0.0
  %430 = vmatpush1.msra.mxu0 0.0
  %431 = vmatprep.subr.mxu0 0.0
  %432 = vmatpush1.msra.mxu0 %v399
  %433 = vmatprep.subr.mxu0 0.0
  %434 = vmatpush2.msra.mxu0 0.0
  %435 = vmatprep.subr.mxu0 0.0
  %436 = vmatpush2.msra.mxu0 0.0
  %437 = vmatprep.subr.mxu0 0.0
  %438 = vmatpush2.msra.mxu0 0.0
  %439 = vmatprep.subr.mxu0 0.0
  %440 = vmatpush2.msra.mxu0 0.0
  %441 = vmatprep.subr.mxu0 0.0
  %442 = vmatpush2.msra.mxu0 0.0
  %443 = vmatprep.subr.mxu0 0.0
  %444 = vmatpush2.msra.mxu0 0.0
  %445 = vmatprep.subr.mxu0 0.0
  %446 = vmatpush2.msra.mxu0 0.0
  %447 = vmatprep.subr.mxu0 0.0
  %448 = vmatpush2.msra.mxu0 0.0
  %449 = vmatprep.subr.mxu0 0.0
  %450 = vmatpush2.msra.mxu0 0.0
  %451 = vmatprep.subr.mxu0 0.0
  %452 = vmatpush2.msra.mxu0 0.0
  %453 = vmatprep.subr.mxu0 0.0
  %454 = vmatpush2.msra.mxu0 0.0
  %455 = vmatprep.subr.mxu0 0.0
  %456 = vmatpush2.msra.mxu0 0.0
  %457 = vmatprep.subr.mxu0 0.0
  %458 = vmatpush2.msra.mxu0 0.0
  %459 = vmatprep.subr.mxu0 0.0
  %460 = vmatpush2.msra.mxu0 0.0
  %461 = vmatprep.subr.mxu0 0.0
  %462 = vmatpush2.msra.mxu0 0.0
  %463 = vmatprep.subr.mxu0 0.0
  %464 = vmatpush2.msra.mxu0 0.0
  %465 = vmatprep.mubr.f32.mxu0 0.0
  %466 = vmatmul.mubr.f32.gmra.mxu0 %v110
  %v467 = vpop.f32.mrf.mxu0
  %v468 = vadd.f32 0.0, %v467
  %v469 = vpop.f32.mrf.mxu0
  %470 = vmatprep.mubr.f32.mxu0 0.0
  %471 = vmatmul.mubr.f32.gmra.mxu0 %v113
  %v472 = vpop.f32.mrf.mxu0
  %v473 = vadd.f32 0.0, %v472
  %v474 = vpop.f32.mrf.mxu0
  %475 = vmatprep.mubr.f32.mxu0 0.0
  %476 = vmatmul.mubr.f32.gmra.mxu0 %v116
  %v477 = vpop.f32.mrf.mxu0
  %v478 = vadd.f32 0.0, %v477
  %v479 = vpop.f32.mrf.mxu0
  %480 = vmatprep.mubr.f32.mxu0 0.0
  %481 = vmatmul.mubr.f32.gmra.mxu0 %v119
  %v482 = vpop.f32.mrf.mxu0
  %v483 = vadd.f32 0.0, %v482
  %v484 = vpop.f32.mrf.mxu0
  %485 = vmatprep.mubr.f32.mxu0 0.0
  %486 = vmatmul.mubr.f32.gmra.mxu0 %v122
  %v487 = vpop.f32.mrf.mxu0
  %v488 = vadd.f32 0.0, %v487
  %v489 = vpop.f32.mrf.mxu0
  %490 = vmatprep.mubr.f32.mxu0 0.0
  %491 = vmatmul.mubr.f32.gmra.mxu0 %v125
  %v492 = vpop.f32.mrf.mxu0
  %v493 = vadd.f32 0.0, %v492
  %v494 = vpop.f32.mrf.mxu0
  %495 = vmatprep.mubr.f32.mxu0 0.0
  %496 = vmatmul.mubr.f32.gmra.mxu0 %v128
  %v497 = vpop.f32.mrf.mxu0
  %v498 = vadd.f32 0.0, %v497
  %v499 = vpop.f32.mrf.mxu0
  %500 = vmatprep.mubr.f32.mxu0 0.0
  %501 = vmatmul.mubr.f32.gmra.mxu0 %v131
  %v502 = vpop.f32.mrf.mxu0
  %v503 = vadd.f32 0.0, %v502
  %v504 = vpop.f32.mrf.mxu0
  %505 = vmatprep.mubr.f32.mxu0 0.0
  %506 = vmatmul.mubr.f32.gmra.mxu0 %v134
  %v507 = vpop.f32.mrf.mxu0
  %v508 = vadd.f32 0.0, %v507
  %v509 = vpop.f32.mrf.mxu0
  %510 = vmatprep.mubr.f32.mxu0 0.0
  %511 = vmatmul.mubr.f32.gmra.mxu0 %v137
  %v512 = vpop.f32.mrf.mxu0
  %v513 = vadd.f32 0.0, %v512
  %v514 = vpop.f32.mrf.mxu0
  %515 = vmatprep.mubr.f32.mxu0 0.0
  %516 = vmatmul.mubr.f32.gmra.mxu0 %v140
  %v517 = vpop.f32.mrf.mxu0
  %v518 = vadd.f32 0.0, %v517
  %v519 = vpop.f32.mrf.mxu0
  %520 = vmatprep.mubr.f32.mxu0 0.0
  %521 = vmatmul.mubr.f32.gmra.mxu0 %v143
  %v522 = vpop.f32.mrf.mxu0
  %v523 = vadd.f32 0.0, %v522
  %v524 = vpop.f32.mrf.mxu0
  %525 = vmatprep.mubr.f32.mxu0 0.0
  %526 = vmatmul.mubr.f32.gmra.mxu0 %v146
  %v527 = vpop.f32.mrf.mxu0
  %v528 = vadd.f32 0.0, %v527
  %v529 = vpop.f32.mrf.mxu0
  %530 = vmatprep.mubr.f32.mxu0 0.0
  %531 = vmatmul.mubr.f32.gmra.mxu0 %v149
  %v532 = vpop.f32.mrf.mxu0
  %v533 = vadd.f32 0.0, %v532
  %v534 = vpop.f32.mrf.mxu0
  %535 = vmatprep.mubr.f32.mxu0 0.0
  %536 = vmatmul.mubr.f32.gmra.mxu0 %v152
  %v537 = vpop.f32.mrf.mxu0
  %v538 = vadd.f32 0.0, %v537
  %v539 = vpop.f32.mrf.mxu0
  %540 = vmatprep.mubr.f32.mxu0 0.0
  %541 = vmatmul.mubr.f32.gmra.mxu0 %v155
  %v542 = vpop.f32.mrf.mxu0
  %v543 = vadd.f32 0.0, %v542
  %v544 = vpop.f32.mrf.mxu0
  %545 = vmatprep.mubr.f32.mxu0 0.0
  %546 = vmatmul.mubr.f32.gmra.mxu0 %v158
  %v547 = vpop.f32.mrf.mxu0
  %v548 = vadd.f32 0.0, %v547
  %v549 = vpop.f32.mrf.mxu0
  %550 = vmatprep.mubr.f32.mxu0 0.0
  %551 = vmatmul.mubr.f32.gmra.mxu0 %v161
  %v552 = vpop.f32.mrf.mxu0
  %v553 = vadd.f32 0.0, %v552
  %v554 = vpop.f32.mrf.mxu0
  %555 = vmatprep.mubr.f32.mxu0 0.0
  %556 = vmatmul.mubr.f32.gmra.mxu0 %v164
  %v557 = vpop.f32.mrf.mxu0
  %v558 = vadd.f32 0.0, %v557
  %v559 = vpop.f32.mrf.mxu0
  %560 = vmatprep.mubr.f32.mxu0 0.0
  %561 = vmatmul.mubr.f32.gmra.mxu0 %v167
  %v562 = vpop.f32.mrf.mxu0
  %v563 = vadd.f32 0.0, %v562
  %v564 = vpop.f32.mrf.mxu0
  %565 = vmatprep.mubr.f32.mxu0 0.0
  %566 = vmatmul.mubr.f32.gmra.mxu0 %v170
  %v567 = vpop.f32.mrf.mxu0
  %v568 = vadd.f32 0.0, %v567
  %v569 = vpop.f32.mrf.mxu0
  %570 = vmatprep.mubr.f32.mxu0 0.0
  %571 = vmatmul.mubr.f32.gmra.mxu0 %v173
  %v572 = vpop.f32.mrf.mxu0
  %v573 = vadd.f32 0.0, %v572
  %v574 = vpop.f32.mrf.mxu0
  %575 = vmatprep.mubr.f32.mxu0 0.0
  %576 = vmatmul.mubr.f32.gmra.mxu0 %v176
  %v577 = vpop.f32.mrf.mxu0
  %v578 = vadd.f32 0.0, %v577
  %v579 = vpop.f32.mrf.mxu0
  %580 = vmatprep.mubr.f32.mxu0 0.0
  %581 = vmatmul.mubr.f32.gmra.mxu0 %v179
  %v582 = vpop.f32.mrf.mxu0
  %v583 = vadd.f32 0.0, %v582
  %v584 = vpop.f32.mrf.mxu0
  %585 = vmatprep.mubr.f32.mxu0 0.0
  %586 = vmatmul.mubr.f32.gmra.mxu0 %v182
  %v587 = vpop.f32.mrf.mxu0
  %v588 = vadd.f32 0.0, %v587
  %v589 = vpop.f32.mrf.mxu0
  %590 = vmatprep.mubr.f32.mxu0 0.0
  %591 = vmatmul.mubr.f32.gmra.mxu0 %v185
  %v592 = vpop.f32.mrf.mxu0
  %v593 = vadd.f32 0.0, %v592
  %v594 = vpop.f32.mrf.mxu0
  %595 = vmatprep.mubr.f32.mxu0 0.0
  %596 = vmatmul.mubr.f32.gmra.mxu0 %v188
  %v597 = vpop.f32.mrf.mxu0
  %v598 = vadd.f32 0.0, %v597
  %v599 = vpop.f32.mrf.mxu0
  %600 = vmatprep.mubr.f32.mxu0 0.0
  %601 = vmatmul.mubr.f32.gmra.mxu0 %v191
  %v602 = vpop.f32.mrf.mxu0
  %v603 = vadd.f32 0.0, %v602
  %v604 = vpop.f32.mrf.mxu0
  %605 = vmatprep.mubr.f32.mxu0 0.0
  %606 = vmatmul.mubr.f32.gmra.mxu0 %v194
  %v607 = vpop.f32.mrf.mxu0
  %v608 = vadd.f32 0.0, %v607
  %v609 = vpop.f32.mrf.mxu0
  %610 = vmatprep.mubr.f32.mxu0 0.0
  %611 = vmatmul.mubr.f32.gmra.mxu0 %v197
  %v612 = vpop.f32.mrf.mxu0
  %v613 = vadd.f32 0.0, %v612
  %v614 = vpop.f32.mrf.mxu0
  %615 = vmatprep.mubr.f32.mxu0 0.0
  %616 = vmatmul.mubr.f32.gmra.mxu0 %v200
  %v617 = vpop.f32.mrf.mxu0
  %v618 = vadd.f32 0.0, %v617
  %v619 = vpop.f32.mrf.mxu0
  %620 = vmatprep.mubr.f32.mxu0 0.0
  %621 = vmatmul.mubr.f32.gmra.mxu0 %v203
  %v622 = vpop.f32.mrf.mxu0
  %v623 = vadd.f32 0.0, %v622
  %v624 = vpop.f32.mrf.mxu0
  %625 = vmatprep.mubr.f32.mxu0 0.0
  %626 = vmatmul.mubr.f32.gmra.mxu0 %v206
  %v627 = vpop.f32.mrf.mxu0
  %v628 = vadd.f32 0.0, %v627
  %v629 = vpop.f32.mrf.mxu0
  %630 = vmatprep.mubr.f32.mxu0 0.0
  %631 = vmatmul.mubr.f32.gmra.mxu0 %v209
  %v632 = vpop.f32.mrf.mxu0
  %v633 = vadd.f32 0.0, %v632
  %v634 = vpop.f32.mrf.mxu0
  %635 = vmatprep.mubr.f32.mxu0 0.0
  %636 = vmatmul.mubr.f32.gmra.mxu0 %v212
  %v637 = vpop.f32.mrf.mxu0
  %v638 = vadd.f32 0.0, %v637
  %v639 = vpop.f32.mrf.mxu0
  %640 = vmatprep.mubr.f32.mxu0 0.0
  %641 = vmatmul.mubr.f32.gmra.mxu0 %v215
  %v642 = vpop.f32.mrf.mxu0
  %v643 = vadd.f32 0.0, %v642
  %v644 = vpop.f32.mrf.mxu0
  %645 = vmatprep.mubr.f32.mxu0 0.0
  %646 = vmatmul.mubr.f32.gmra.mxu0 %v218
  %v647 = vpop.f32.mrf.mxu0
  %v648 = vadd.f32 0.0, %v647
  %v649 = vpop.f32.mrf.mxu0
  %650 = vmatprep.mubr.f32.mxu0 0.0
  %651 = vmatmul.mubr.f32.gmra.mxu0 %v221
  %v652 = vpop.f32.mrf.mxu0
  %v653 = vadd.f32 0.0, %v652
  %v654 = vpop.f32.mrf.mxu0
  %655 = vmatprep.mubr.f32.mxu0 0.0
  %656 = vmatmul.mubr.f32.gmra.mxu0 %v224
  %v657 = vpop.f32.mrf.mxu0
  %v658 = vadd.f32 0.0, %v657
  %v659 = vpop.f32.mrf.mxu0
  %660 = vmatprep.mubr.f32.mxu0 0.0
  %661 = vmatmul.mubr.f32.gmra.mxu0 %v227
  %v662 = vpop.f32.mrf.mxu0
  %v663 = vadd.f32 0.0, %v662
  %v664 = vpop.f32.mrf.mxu0
  %665 = vmatprep.mubr.f32.mxu0 0.0
  %666 = vmatmul.mubr.f32.gmra.mxu0 %v230
  %v667 = vpop.f32.mrf.mxu0
  %v668 = vadd.f32 0.0, %v667
  %v669 = vpop.f32.mrf.mxu0
  %670 = vmatprep.mubr.f32.mxu0 0.0
  %671 = vmatmul.mubr.f32.gmra.mxu0 %v233
  %v672 = vpop.f32.mrf.mxu0
  %v673 = vadd.f32 0.0, %v672
  %v674 = vpop.f32.mrf.mxu0
  %675 = vmatprep.mubr.f32.mxu0 0.0
  %676 = vmatmul.mubr.f32.gmra.mxu0 %v236
  %v677 = vpop.f32.mrf.mxu0
  %v678 = vadd.f32 0.0, %v677
  %v679 = vpop.f32.mrf.mxu0
  %680 = vmatprep.mubr.f32.mxu0 0.0
  %681 = vmatmul.mubr.f32.gmra.mxu0 %v239
  %v682 = vpop.f32.mrf.mxu0
  %v683 = vadd.f32 0.0, %v682
  %v684 = vpop.f32.mrf.mxu0
  %685 = vmatprep.mubr.f32.mxu0 0.0
  %686 = vmatmul.mubr.f32.gmra.mxu0 %v242
  %v687 = vpop.f32.mrf.mxu0
  %v688 = vadd.f32 0.0, %v687
  %v689 = vpop.f32.mrf.mxu0
  %690 = vmatprep.mubr.f32.mxu0 0.0
  %691 = vmatmul.mubr.f32.gmra.mxu0 %v245
  %v692 = vpop.f32.mrf.mxu0
  %v693 = vadd.f32 0.0, %v692
  %v694 = vpop.f32.mrf.mxu0
  %695 = vmatprep.mubr.f32.mxu0 0.0
  %696 = vmatmul.mubr.f32.gmra.mxu0 %v248
  %v697 = vpop.f32.mrf.mxu0
  %v698 = vadd.f32 0.0, %v697
  %v699 = vpop.f32.mrf.mxu0
  %700 = vmatprep.mubr.f32.mxu0 0.0
  %701 = vmatmul.mubr.f32.gmra.mxu0 %v251
  %v702 = vpop.f32.mrf.mxu0
  %v703 = vadd.f32 0.0, %v702
  %v704 = vpop.f32.mrf.mxu0
  %705 = vmatprep.mubr.f32.mxu0 0.0
  %706 = vmatmul.mubr.f32.gmra.mxu0 %v254
  %v707 = vpop.f32.mrf.mxu0
  %v708 = vadd.f32 0.0, %v707
  %v709 = vpop.f32.mrf.mxu0
  %710 = vmatprep.mubr.f32.mxu0 0.0
  %711 = vmatmul.mubr.f32.gmra.mxu0 %v257
  %v712 = vpop.f32.mrf.mxu0
  %v713 = vadd.f32 0.0, %v712
  %v714 = vpop.f32.mrf.mxu0
  %715 = vmatprep.mubr.f32.mxu0 0.0
  %716 = vmatmul.mubr.f32.gmra.mxu0 %v260
  %v717 = vpop.f32.mrf.mxu0
  %v718 = vadd.f32 0.0, %v717
  %v719 = vpop.f32.mrf.mxu0
  %720 = vmatprep.mubr.f32.mxu0 0.0
  %721 = vmatmul.mubr.f32.gmra.mxu0 %v263
  %v722 = vpop.f32.mrf.mxu0
  %v723 = vadd.f32 0.0, %v722
  %v724 = vpop.f32.mrf.mxu0
  %725 = vmatprep.mubr.f32.mxu0 0.0
  %726 = vmatmul.mubr.f32.gmra.mxu0 %v266
  %v727 = vpop.f32.mrf.mxu0
  %v728 = vadd.f32 0.0, %v727
  %v729 = vpop.f32.mrf.mxu0
  %730 = vmatprep.mubr.f32.mxu0 0.0
  %731 = vmatmul.mubr.f32.gmra.mxu0 %v269
  %v732 = vpop.f32.mrf.mxu0
  %v733 = vadd.f32 0.0, %v732
  %v734 = vpop.f32.mrf.mxu0
  %735 = vmatprep.mubr.f32.mxu0 0.0
  %736 = vmatmul.mubr.f32.gmra.mxu0 %v272
  %v737 = vpop.f32.mrf.mxu0
  %v738 = vadd.f32 0.0, %v737
  %v739 = vpop.f32.mrf.mxu0
  %740 = vmatprep.mubr.f32.mxu0 0.0
  %741 = vmatmul.mubr.f32.gmra.mxu0 %v275
  %v742 = vpop.f32.mrf.mxu0
  %v743 = vadd.f32 0.0, %v742
  %v744 = vpop.f32.mrf.mxu0
  %745 = vmatprep.mubr.f32.mxu0 0.0
  %746 = vmatmul.mubr.f32.gmra.mxu0 %v278
  %v747 = vpop.f32.mrf.mxu0
  %v748 = vadd.f32 0.0, %v747
  %v749 = vpop.f32.mrf.mxu0
  %750 = vmatprep.mubr.f32.mxu0 0.0
  %751 = vmatmul.mubr.f32.gmra.mxu0 %v281
  %v752 = vpop.f32.mrf.mxu0
  %v753 = vadd.f32 0.0, %v752
  %v754 = vpop.f32.mrf.mxu0
  %755 = vmatprep.mubr.f32.mxu0 0.0
  %756 = vmatmul.mubr.f32.gmra.mxu0 %v284
  %v757 = vpop.f32.mrf.mxu0
  %v758 = vadd.f32 0.0, %v757
  %v759 = vpop.f32.mrf.mxu0
  %760 = vmatprep.mubr.f32.mxu0 0.0
  %761 = vmatmul.mubr.f32.gmra.mxu0 %v287
  %v762 = vpop.f32.mrf.mxu0
  %v763 = vadd.f32 0.0, %v762
  %v764 = vpop.f32.mrf.mxu0
  %765 = vmatprep.mubr.f32.mxu0 0.0
  %766 = vmatmul.mubr.f32.gmra.mxu0 %v290
  %v767 = vpop.f32.mrf.mxu0
  %v768 = vadd.f32 0.0, %v767
  %v769 = vpop.f32.mrf.mxu0
  %770 = vmatprep.mubr.f32.mxu0 0.0
  %771 = vmatmul.mubr.f32.gmra.mxu0 %v293
  %v772 = vpop.f32.mrf.mxu0
  %v773 = vadd.f32 0.0, %v772
  %v774 = vpop.f32.mrf.mxu0
  %775 = vmatprep.mubr.f32.mxu0 0.0
  %776 = vmatmul.mubr.f32.gmra.mxu0 %v296
  %v777 = vpop.f32.mrf.mxu0
  %v778 = vadd.f32 0.0, %v777
  %v779 = vpop.f32.mrf.mxu0
  %780 = vmatprep.mubr.f32.mxu0 0.0
  %781 = vmatmul.mubr.f32.gmra.mxu0 %v299
  %v782 = vpop.f32.mrf.mxu0
  %v783 = vadd.f32 0.0, %v782
  %v784 = vpop.f32.mrf.mxu0
  %785 = vmatprep.mubr.f32.mxu0 0.0
  %786 = vmatmul.mubr.f32.gmra.mxu0 %v302
  %v787 = vpop.f32.mrf.mxu0
  %v788 = vadd.f32 0.0, %v787
  %v789 = vpop.f32.mrf.mxu0
  %790 = vmatprep.mubr.f32.mxu0 0.0
  %791 = vmatmul.mubr.f32.gmra.mxu0 %v305
  %v792 = vpop.f32.mrf.mxu0
  %v793 = vadd.f32 0.0, %v792
  %v794 = vpop.f32.mrf.mxu0
  %795 = vmatprep.mubr.f32.mxu0 0.0
  %796 = vmatmul.mubr.f32.gmra.mxu0 %v308
  %v797 = vpop.f32.mrf.mxu0
  %v798 = vadd.f32 0.0, %v797
  %v799 = vpop.f32.mrf.mxu0
  %800 = vmatprep.mubr.f32.mxu0 0.0
  %801 = vmatmul.mubr.f32.gmra.mxu0 %v311
  %v802 = vpop.f32.mrf.mxu0
  %v803 = vadd.f32 0.0, %v802
  %v804 = vpop.f32.mrf.mxu0
  %805 = vmatprep.mubr.f32.mxu0 0.0
  %806 = vmatmul.mubr.f32.gmra.mxu0 %v314
  %v807 = vpop.f32.mrf.mxu0
  %v808 = vadd.f32 0.0, %v807
  %v809 = vpop.f32.mrf.mxu0
  %810 = vmatprep.mubr.f32.mxu0 0.0
  %811 = vmatmul.mubr.f32.gmra.mxu0 %v317
  %v812 = vpop.f32.mrf.mxu0
  %v813 = vadd.f32 0.0, %v812
  %v814 = vpop.f32.mrf.mxu0
  %815 = vmatprep.mubr.f32.mxu0 0.0
  %816 = vmatmul.mubr.f32.gmra.mxu0 %v320
  %v817 = vpop.f32.mrf.mxu0
  %v818 = vadd.f32 0.0, %v817
  %v819 = vpop.f32.mrf.mxu0
  %820 = vmatprep.mubr.f32.mxu0 0.0
  %821 = vmatmul.mubr.f32.gmra.mxu0 %v323
  %v822 = vpop.f32.mrf.mxu0
  %v823 = vadd.f32 0.0, %v822
  %v824 = vpop.f32.mrf.mxu0
  %825 = vmatprep.mubr.f32.mxu0 0.0
  %826 = vmatmul.mubr.f32.gmra.mxu0 %v326
  %v827 = vpop.f32.mrf.mxu0
  %v828 = vadd.f32 0.0, %v827
  %v829 = vpop.f32.mrf.mxu0
  %830 = vmatprep.mubr.f32.mxu0 0.0
  %831 = vmatmul.mubr.f32.gmra.mxu0 %v329
  %v832 = vpop.f32.mrf.mxu0
  %v833 = vadd.f32 0.0, %v832
  %v834 = vpop.f32.mrf.mxu0
  %835 = vmatprep.mubr.f32.mxu0 0.0
  %836 = vmatmul.mubr.f32.gmra.mxu0 %v332
  %v837 = vpop.f32.mrf.mxu0
  %v838 = vadd.f32 0.0, %v837
  %v839 = vpop.f32.mrf.mxu0
  %840 = vmatprep.mubr.f32.mxu0 0.0
  %841 = vmatmul.mubr.f32.gmra.mxu0 %v335
  %v842 = vpop.f32.mrf.mxu0
  %v843 = vadd.f32 0.0, %v842
  %v844 = vpop.f32.mrf.mxu0
  %845 = vmatprep.mubr.f32.mxu0 0.0
  %846 = vmatmul.mubr.f32.gmra.mxu0 %v338
  %v847 = vpop.f32.mrf.mxu0
  %v848 = vadd.f32 0.0, %v847
  %v849 = vpop.f32.mrf.mxu0
  %850 = vmatprep.mubr.f32.mxu0 0.0
  %851 = vmatmul.mubr.f32.gmra.mxu0 %v341
  %v852 = vpop.f32.mrf.mxu0
  %v853 = vadd.f32 0.0, %v852
  %v854 = vpop.f32.mrf.mxu0
  %855 = vmatprep.mubr.f32.mxu0 0.0
  %856 = vmatmul.mubr.f32.gmra.mxu0 %v344
  %v857 = vpop.f32.mrf.mxu0
  %v858 = vadd.f32 0.0, %v857
  %v859 = vpop.f32.mrf.mxu0
  %860 = vmatprep.mubr.f32.mxu0 0.0
  %861 = vmatmul.mubr.f32.gmra.mxu0 %v347
  %v862 = vpop.f32.mrf.mxu0
  %v863 = vadd.f32 0.0, %v862
  %v864 = vpop.f32.mrf.mxu0
  %865 = vmatprep.mubr.f32.mxu0 0.0
  %866 = vmatmul.mubr.f32.gmra.mxu0 %v350
  %v867 = vpop.f32.mrf.mxu0
  %v868 = vadd.f32 0.0, %v867
  %v869 = vpop.f32.mrf.mxu0
  %870 = vmatprep.mubr.f32.mxu0 0.0
  %871 = vmatmul.mubr.f32.gmra.mxu0 %v353
  %v872 = vpop.f32.mrf.mxu0
  %v873 = vadd.f32 0.0, %v872
  %v874 = vpop.f32.mrf.mxu0
  %875 = vmatprep.mubr.f32.mxu0 0.0
  %876 = vmatmul.mubr.f32.gmra.mxu0 %v356
  %v877 = vpop.f32.mrf.mxu0
  %v878 = vadd.f32 0.0, %v877
  %v879 = vpop.f32.mrf.mxu0
  %880 = vmatprep.mubr.f32.mxu0 0.0
  %881 = vmatmul.mubr.f32.gmra.mxu0 %v359
  %v882 = vpop.f32.mrf.mxu0
  %v883 = vadd.f32 0.0, %v882
  %v884 = vpop.f32.mrf.mxu0
  %885 = vmatprep.mubr.f32.mxu0 0.0
  %886 = vmatmul.mubr.f32.gmra.mxu0 %v362
  %v887 = vpop.f32.mrf.mxu0
  %v888 = vadd.f32 0.0, %v887
  %v889 = vpop.f32.mrf.mxu0
  %890 = vmatprep.mubr.f32.mxu0 0.0
  %891 = vmatmul.mubr.f32.gmra.mxu0 %v365
  %v892 = vpop.f32.mrf.mxu0
  %v893 = vadd.f32 0.0, %v892
  %v894 = vpop.f32.mrf.mxu0
  %895 = vmatprep.mubr.f32.mxu0 0.0
  %896 = vmatmul.mubr.f32.gmra.mxu0 %v368
  %v897 = vpop.f32.mrf.mxu0
  %v898 = vadd.f32 0.0, %v897
  %v899 = vpop.f32.mrf.mxu0
  %900 = vmatprep.mubr.f32.mxu0 0.0
  %901 = vmatmul.mubr.f32.gmra.mxu0 %v371
  %v902 = vpop.f32.mrf.mxu0
  %v903 = vadd.f32 0.0, %v902
  %v904 = vpop.f32.mrf.mxu0
  %905 = vmatprep.mubr.f32.mxu0 0.0
  %906 = vmatmul.mubr.f32.gmra.mxu0 %v374
  %v907 = vpop.f32.mrf.mxu0
  %v908 = vadd.f32 0.0, %v907
  %v909 = vpop.f32.mrf.mxu0
  %910 = vmatprep.mubr.f32.mxu0 0.0
  %911 = vmatmul.mubr.f32.gmra.mxu0 %v377
  %v912 = vpop.f32.mrf.mxu0
  %v913 = vadd.f32 0.0, %v912
  %v914 = vpop.f32.mrf.mxu0
  %915 = vmatprep.mubr.f32.mxu0 0.0
  %916 = vmatmul.mubr.f32.gmra.mxu0 %v380
  %v917 = vpop.f32.mrf.mxu0
  %v918 = vadd.f32 0.0, %v917
  %v919 = vpop.f32.mrf.mxu0
  %920 = vmatprep.mubr.f32.mxu0 0.0
  %921 = vmatmul.mubr.f32.gmra.mxu0 %v383
  %v922 = vpop.f32.mrf.mxu0
  %v923 = vadd.f32 0.0, %v922
  %v924 = vpop.f32.mrf.mxu0
  %925 = vmatprep.mubr.f32.mxu0 0.0
  %926 = vmatmul.mubr.f32.gmra.mxu0 %v386
  %v927 = vpop.f32.mrf.mxu0
  %v928 = vadd.f32 0.0, %v927
  %v929 = vpop.f32.mrf.mxu0
  %930 = vmatprep.mubr.f32.mxu0 0.0
  %931 = vmatmul.mubr.f32.gmra.mxu0 %v389
  %v932 = vpop.f32.mrf.mxu0
  %v933 = vadd.f32 0.0, %v932
  %v934 = vpop.f32.mrf.mxu0
  %935 = vmatprep.mubr.f32.mxu0 0.0
  %936 = vmatmul.mubr.f32.gmra.mxu0 %v392
  %v937 = vpop.f32.mrf.mxu0
  %v938 = vadd.f32 0.0, %v937
  %v939 = vpop.f32.mrf.mxu0
  %940 = vmatprep.mubr.f32.mxu0 0.0
  %941 = vmatmul.mubr.f32.gmra.mxu0 %v395
  %v942 = vpop.f32.mrf.mxu0
  %v943 = vadd.f32 0.0, %v942
  %v944 = vpop.f32.mrf.mxu0
  %945 = vdwg.mxu0
  %vm946 = vcmask 64512
  %947 = vst.msk [vmem:[%s2] sm:$0xff] %vm946, %v468
  %948 = vst.msk [vmem:[%s2 + $0x8] sm:$0xff] %vm946, %v473
  %949 = vst.msk [vmem:[%s2 + $0x10] sm:$0xff] %vm946, %v478
  %950 = vst.msk [vmem:[%s2 + $0x18] sm:$0xff] %vm946, %v483
  %951 = vst.msk [vmem:[%s2 + $0x20] sm:$0xff] %vm946, %v488
  %952 = vst.msk [vmem:[%s2 + $0x28] sm:$0xff] %vm946, %v493
  %953 = vst.msk [vmem:[%s2 + $0x30] sm:$0xff] %vm946, %v498
  %954 = vst.msk [vmem:[%s2 + $0x38] sm:$0xff] %vm946, %v503
  %955 = vst.msk [vmem:[%s2 + $0x40] sm:$0xff] %vm946, %v508
  %956 = vst.msk [vmem:[%s2 + $0x48] sm:$0xff] %vm946, %v513
  %957 = vst.msk [vmem:[%s2 + $0x50] sm:$0xff] %vm946, %v518
  %958 = vst.msk [vmem:[%s2 + $0x58] sm:$0xff] %vm946, %v523
  %959 = vst.msk [vmem:[%s2 + $0x60] sm:$0xff] %vm946, %v528
  %960 = vst.msk [vmem:[%s2 + $0x68] sm:$0xff] %vm946, %v533
  %961 = vst.msk [vmem:[%s2 + $0x70] sm:$0xff] %vm946, %v538
  %962 = vst.msk [vmem:[%s2 + $0x78] sm:$0xff] %vm946, %v543
  %963 = vst.msk [vmem:[%s2 + $0x80] sm:$0xff] %vm946, %v548
  %964 = vst.msk [vmem:[%s2 + $0x88] sm:$0xff] %vm946, %v553
  %965 = vst.msk [vmem:[%s2 + $0x90] sm:$0xff] %vm946, %v558
  %966 = vst.msk [vmem:[%s2 + $0x98] sm:$0xff] %vm946, %v563
  %967 = vst.msk [vmem:[%s2 + $0xa0] sm:$0xff] %vm946, %v568
  %968 = vst.msk [vmem:[%s2 + $0xa8] sm:$0xff] %vm946, %v573
  %969 = vst.msk [vmem:[%s2 + $0xb0] sm:$0xff] %vm946, %v578
  %970 = vst.msk [vmem:[%s2 + $0xb8] sm:$0xff] %vm946, %v583
  %971 = vst.msk [vmem:[%s2 + $0xc0] sm:$0xff] %vm946, %v588
  %972 = vst.msk [vmem:[%s2 + $0xc8] sm:$0xff] %vm946, %v593
  %973 = vst.msk [vmem:[%s2 + $0xd0] sm:$0xff] %vm946, %v598
  %974 = vst.msk [vmem:[%s2 + $0xd8] sm:$0xff] %vm946, %v603
  %975 = vst.msk [vmem:[%s2 + $0xe0] sm:$0xff] %vm946, %v608
  %976 = vst.msk [vmem:[%s2 + $0xe8] sm:$0xff] %vm946, %v613
  %977 = vst.msk [vmem:[%s2 + $0xf0] sm:$0xff] %vm946, %v618
  %978 = vst.msk [vmem:[%s2 + $0xf8] sm:$0xff] %vm946, %v623
  %979 = vst.msk [vmem:[%s2 + $0x100] sm:$0xff] %vm946, %v628
  %980 = vst.msk [vmem:[%s2 + $0x108] sm:$0xff] %vm946, %v633
  %981 = vst.msk [vmem:[%s2 + $0x110] sm:$0xff] %vm946, %v638
  %982 = vst.msk [vmem:[%s2 + $0x118] sm:$0xff] %vm946, %v643
  %983 = vst.msk [vmem:[%s2 + $0x120] sm:$0xff] %vm946, %v648
  %984 = vst.msk [vmem:[%s2 + $0x128] sm:$0xff] %vm946, %v653
  %985 = vst.msk [vmem:[%s2 + $0x130] sm:$0xff] %vm946, %v658
  %986 = vst.msk [vmem:[%s2 + $0x138] sm:$0xff] %vm946, %v663
  %987 = vst.msk [vmem:[%s2 + $0x140] sm:$0xff] %vm946, %v668
  %988 = vst.msk [vmem:[%s2 + $0x148] sm:$0xff] %vm946, %v673
  %989 = vst.msk [vmem:[%s2 + $0x150] sm:$0xff] %vm946, %v678
  %990 = vst.msk [vmem:[%s2 + $0x158] sm:$0xff] %vm946, %v683
  %991 = vst.msk [vmem:[%s2 + $0x160] sm:$0xff] %vm946, %v688
  %992 = vst.msk [vmem:[%s2 + $0x168] sm:$0xff] %vm946, %v693
  %993 = vst.msk [vmem:[%s2 + $0x170] sm:$0xff] %vm946, %v698
  %994 = vst.msk [vmem:[%s2 + $0x178] sm:$0xff] %vm946, %v703
  %995 = vst.msk [vmem:[%s2 + $0x180] sm:$0xff] %vm946, %v708
  %996 = vst.msk [vmem:[%s2 + $0x188] sm:$0xff] %vm946, %v713
  %997 = vst.msk [vmem:[%s2 + $0x190] sm:$0xff] %vm946, %v718
  %998 = vst.msk [vmem:[%s2 + $0x198] sm:$0xff] %vm946, %v723
  %999 = vst.msk [vmem:[%s2 + $0x1a0] sm:$0xff] %vm946, %v728
  %1000 = vst.msk [vmem:[%s2 + $0x1a8] sm:$0xff] %vm946, %v733
  %1001 = vst.msk [vmem:[%s2 + $0x1b0] sm:$0xff] %vm946, %v738
  %1002 = vst.msk [vmem:[%s2 + $0x1b8] sm:$0xff] %vm946, %v743
  %1003 = vst.msk [vmem:[%s2 + $0x1c0] sm:$0xff] %vm946, %v748
  %1004 = vst.msk [vmem:[%s2 + $0x1c8] sm:$0xff] %vm946, %v753
  %1005 = vst.msk [vmem:[%s2 + $0x1d0] sm:$0xff] %vm946, %v758
  %1006 = vst.msk [vmem:[%s2 + $0x1d8] sm:$0xff] %vm946, %v763
  %1007 = vst.msk [vmem:[%s2 + $0x1e0] sm:$0xff] %vm946, %v768
  %1008 = vst.msk [vmem:[%s2 + $0x1e8] sm:$0xff] %vm946, %v773
  %1009 = vst.msk [vmem:[%s2 + $0x1f0] sm:$0xff] %vm946, %v778
  %1010 = vst.msk [vmem:[%s2 + $0x1f8] sm:$0xff] %vm946, %v783
  %1011 = vst.msk [vmem:[%s2 + $0x200] sm:$0xff] %vm946, %v788
  %1012 = vst.msk [vmem:[%s2 + $0x208] sm:$0xff] %vm946, %v793
  %1013 = vst.msk [vmem:[%s2 + $0x210] sm:$0xff] %vm946, %v798
  %1014 = vst.msk [vmem:[%s2 + $0x218] sm:$0xff] %vm946, %v803
  %1015 = vst.msk [vmem:[%s2 + $0x220] sm:$0xff] %vm946, %v808
  %1016 = vst.msk [vmem:[%s2 + $0x228] sm:$0xff] %vm946, %v813
  %1017 = vst.msk [vmem:[%s2 + $0x230] sm:$0xff] %vm946, %v818
  %1018 = vst.msk [vmem:[%s2 + $0x238] sm:$0xff] %vm946, %v823
  %1019 = vst.msk [vmem:[%s2 + $0x240] sm:$0xff] %vm946, %v828
  %1020 = vst.msk [vmem:[%s2 + $0x248] sm:$0xff] %vm946, %v833
  %1021 = vst.msk [vmem:[%s2 + $0x250] sm:$0xff] %vm946, %v838
  %1022 = vst.msk [vmem:[%s2 + $0x258] sm:$0xff] %vm946, %v843
  %1023 = vst.msk [vmem:[%s2 + $0x260] sm:$0xff] %vm946, %v848
  %1024 = vst.msk [vmem:[%s2 + $0x268] sm:$0xff] %vm946, %v853
  %1025 = vst.msk [vmem:[%s2 + $0x270] sm:$0xff] %vm946, %v858
  %1026 = vst.msk [vmem:[%s2 + $0x278] sm:$0xff] %vm946, %v863
  %1027 = vst.msk [vmem:[%s2 + $0x280] sm:$0xff] %vm946, %v868
  %1028 = vst.msk [vmem:[%s2 + $0x288] sm:$0xff] %vm946, %v873
  %1029 = vst.msk [vmem:[%s2 + $0x290] sm:$0xff] %vm946, %v878
  %1030 = vst.msk [vmem:[%s2 + $0x298] sm:$0xff] %vm946, %v883
  %1031 = vst.msk [vmem:[%s2 + $0x2a0] sm:$0xff] %vm946, %v888
  %1032 = vst.msk [vmem:[%s2 + $0x2a8] sm:$0xff] %vm946, %v893
  %1033 = vst.msk [vmem:[%s2 + $0x2b0] sm:$0xff] %vm946, %v898
  %1034 = vst.msk [vmem:[%s2 + $0x2b8] sm:$0xff] %vm946, %v903
  %1035 = vst.msk [vmem:[%s2 + $0x2c0] sm:$0xff] %vm946, %v908
  %1036 = vst.msk [vmem:[%s2 + $0x2c8] sm:$0xff] %vm946, %v913
  %1037 = vst.msk [vmem:[%s2 + $0x2d0] sm:$0xff] %vm946, %v918
  %1038 = vst.msk [vmem:[%s2 + $0x2d8] sm:$0xff] %vm946, %v923
  %1039 = vst.msk [vmem:[%s2 + $0x2e0] sm:$0xff] %vm946, %v928
  %1040 = vst.msk [vmem:[%s2 + $0x2e8] sm:$0xff] %vm946, %v933
  %1041 = vst.msk [vmem:[%s2 + $0x2f0] sm:$0xff] %vm946, %v938
  %1042 = vst.msk [vmem:[%s2 + $0x2f8] sm:$0xff] %vm946, %v943
  // Predicated region
  $region10: #{sparse_feature_pyramid.15} parent=0 // pred_check
    _
  $region11: #{sparse_feature_pyramid.15} parent=0 // pred_check_branch
    %1044 = sbr.rel (0) target = $region13
  $region12: #{sparse_feature_pyramid.15} parent=0 // pred_region
    _
  $region13: #{sparse_feature_pyramid.15} parent=0 // pred_fallthru
    _
  // Predicated region
  $region14: #{sparse_feature_pyramid.15} parent=0 // pred_check
    _
  $region15: #{sparse_feature_pyramid.15} parent=0 // pred_check_branch
    %1046 = sbr.rel (0) target = $region17
  $region16: #{sparse_feature_pyramid.15} parent=0 // pred_region
    _
  $region17: #{sparse_feature_pyramid.15} parent=0 // pred_fallthru
    _

// kernel: sparse_feature_pyramid.17
$region0: #{sparse_feature_pyramid.17}
  #allocation0 [shape = 'u32[]', space=smem, size = 0x4, offset = 0x4, fixed_abs, tag = 'smem constant byte address 0x4 - core index']
  #allocation1 [shape = 'u32[144,128]{1,0:T(1,128)}', space=vmem, size = 0x12000, scoped, tag = 'internal scratch']
  %s0 = inlined_call_operand.vmem [shape: f32[32,8], index: 0, kind: input, shape index: {}]
  %s1 = inlined_call_operand.vmem [shape: f32[8,384], index: 1, kind: input, shape index: {}]
  %s2 = inlined_call_operand.vmem [shape: f32[32,1], index: 2, kind: input, shape index: {}]
  %s3 = inlined_call_operand.vmem [shape: f32[32,384], index: 3, kind: input, shape index: {}]
  %s4 = inlined_call_operand.vmem [shape: f32[32,384], index: 4, kind: output, shape index: {}]
  %s5 = sld [smem:[#allocation0]]
  $region26: #{sparse_feature_pyramid.17} parent=0
    _
  %s7 = ssub.s32 1, %s5
  %s8 = scalar_select 0, %s7, %s5
  // Predicated region
  $region2: #{sparse_feature_pyramid.17} parent=0 // pred_check
    _
  $region3: #{sparse_feature_pyramid.17} parent=0 // pred_check_branch
    %10 = sbr.rel (0) target = $region5
  $region4: #{sparse_feature_pyramid.17} parent=0 // pred_region
    _
  $region5: #{sparse_feature_pyramid.17} parent=0 // pred_fallthru
    _
  // Predicated region
  $region6: #{sparse_feature_pyramid.17} parent=0 // pred_check
    _
  $region7: #{sparse_feature_pyramid.17} parent=0 // pred_check_branch
    %12 = sbr.rel (0) target = $region9
  $region8: #{sparse_feature_pyramid.17} parent=0 // pred_region
    _
  $region9: #{sparse_feature_pyramid.17} parent=0 // pred_fallthru
    _
  // Predicated region
  $region10: #{sparse_feature_pyramid.17} parent=0 // pred_check
    _
  $region11: #{sparse_feature_pyramid.17} parent=0 // pred_check_branch
    %14 = sbr.rel (0) target = $region13
  $region12: #{sparse_feature_pyramid.17} parent=0 // pred_region
    _
  $region13: #{sparse_feature_pyramid.17} parent=0 // pred_fallthru
    _
  // Predicated region
  $region14: #{sparse_feature_pyramid.17} parent=0 // pred_check
    _
  $region15: #{sparse_feature_pyramid.17} parent=0 // pred_check_branch
    %16 = sbr.rel (0) target = $region17
  $region16: #{sparse_feature_pyramid.17} parent=0 // pred_region
    _
  $region17: #{sparse_feature_pyramid.17} parent=0 // pred_fallthru
    _
  %v17 = vld [vmem:[%s0] sm:$0xff]
  %v18 = vld [vmem:[%s0 + $0x8] sm:$0xff]
  %v19 = vld [vmem:[%s0 + $0x10] sm:$0xff]
  %v20 = vld [vmem:[%s0 + $0x18] sm:$0xff]
  %v21 = vld [vmem:[%s1] sm:$0xff]
  %v22 = vld [vmem:[%s1 + $0x8] sm:$0xff]
  %v23 = vld [vmem:[%s1 + $0x10] sm:$0xff]
  %v24 = vld [vmem:[%s2] sm:$0xff]
  %v25 = vld [vmem:[%s2 + $0x8] sm:$0xff]
  %v26 = vld [vmem:[%s2 + $0x10] sm:$0xff]
  %v27 = vld [vmem:[%s2 + $0x18] sm:$0xff]
  %29 = vset.pattern.permute.xlu0 0
  %30 = vperm.xlu0 %29, %v24
  %v31 = vpop.permute.xlu0 %30
  %34 = vset.pattern.permute.xlu0 0
  %35 = vperm.xlu0 %34, %v25
  %v36 = vpop.permute.xlu0 %35
  %39 = vset.pattern.permute.xlu0 0
  %40 = vperm.xlu0 %39, %v26
  %v41 = vpop.permute.xlu0 %40
  %44 = vset.pattern.permute.xlu0 0
  %45 = vperm.xlu0 %44, %v27
  %v46 = vpop.permute.xlu0 %45
  %vm48 = vcmask 64512
  %v50 = vsel %vm48, %v17, 0
  %v53 = vsel %vm48, %v18, 0
  %v56 = vsel %vm48, %v19, 0
  %v59 = vsel %vm48, %v20, 0
  %61 = vmatprep.subr.mxu0 0.0
  %62 = vmatpush1.msra.mxu0 0.0
  %63 = vmatprep.subr.mxu0 0.0
  %64 = vmatpush1.msra.mxu0 0.0
  %65 = vmatprep.subr.mxu0 0.0
  %66 = vmatpush1.msra.mxu0 0.0
  %67 = vmatprep.subr.mxu0 0.0
  %68 = vmatpush1.msra.mxu0 0.0
  %69 = vmatprep.subr.mxu0 0.0
  %70 = vmatpush1.msra.mxu0 0.0
  %71 = vmatprep.subr.mxu0 0.0
  %72 = vmatpush1.msra.mxu0 0.0
  %73 = vmatprep.subr.mxu0 0.0
  %74 = vmatpush1.msra.mxu0 0.0
  %75 = vmatprep.subr.mxu0 0.0
  %76 = vmatpush1.msra.mxu0 0.0
  %77 = vmatprep.subr.mxu0 0.0
  %78 = vmatpush1.msra.mxu0 0.0
  %79 = vmatprep.subr.mxu0 0.0
  %80 = vmatpush1.msra.mxu0 0.0
  %81 = vmatprep.subr.mxu0 0.0
  %82 = vmatpush1.msra.mxu0 0.0
  %83 = vmatprep.subr.mxu0 0.0
  %84 = vmatpush1.msra.mxu0 0.0
  %85 = vmatprep.subr.mxu0 0.0
  %86 = vmatpush1.msra.mxu0 0.0
  %87 = vmatprep.subr.mxu0 0.0
  %88 = vmatpush1.msra.mxu0 0.0
  %89 = vmatprep.subr.mxu0 0.0
  %90 = vmatpush1.msra.mxu0 0.0
  %91 = vmatprep.subr.mxu0 %v22
  %92 = vmatpush1.msra.mxu0 %v21
  %93 = vmatprep.subr.mxu0 0.0
  %94 = vmatpush2.msra.mxu0 0.0
  %95 = vmatprep.subr.mxu0 0.0
  %96 = vmatpush2.msra.mxu0 0.0
  %97 = vmatprep.subr.mxu0 0.0
  %98 = vmatpush2.msra.mxu0 0.0
  %99 = vmatprep.subr.mxu0 0.0
  %100 = vmatpush2.msra.mxu0 0.0
  %101 = vmatprep.subr.mxu0 0.0
  %102 = vmatpush2.msra.mxu0 0.0
  %103 = vmatprep.subr.mxu0 0.0
  %104 = vmatpush2.msra.mxu0 0.0
  %105 = vmatprep.subr.mxu0 0.0
  %106 = vmatpush2.msra.mxu0 0.0
  %107 = vmatprep.subr.mxu0 0.0
  %108 = vmatpush2.msra.mxu0 0.0
  %109 = vmatprep.subr.mxu0 0.0
  %110 = vmatpush2.msra.mxu0 0.0
  %111 = vmatprep.subr.mxu0 0.0
  %112 = vmatpush2.msra.mxu0 0.0
  %113 = vmatprep.subr.mxu0 0.0
  %114 = vmatpush2.msra.mxu0 0.0
  %115 = vmatprep.subr.mxu0 0.0
  %116 = vmatpush2.msra.mxu0 0.0
  %117 = vmatprep.subr.mxu0 0.0
  %118 = vmatpush2.msra.mxu0 0.0
  %119 = vmatprep.subr.mxu0 0.0
  %120 = vmatpush2.msra.mxu0 0.0
  %121 = vmatprep.subr.mxu0 0.0
  %122 = vmatpush2.msra.mxu0 0.0
  %123 = vmatprep.subr.mxu0 0.0
  %124 = vmatpush2.msra.mxu0 0.0
  %125 = vmatprep.mubr.f32.mxu0 0.0
  %126 = vmatmul.mubr.f32.gmra.mxu0 %v50
  %v127 = vpop.f32.mrf.mxu0
  %v128 = vadd.f32 %v31, %v127
  %v129 = vpop.f32.mrf.mxu0
  %v130 = vadd.f32 %v31, %v129
  %131 = vmatprep.mubr.f32.mxu0 0.0
  %132 = vmatmul.mubr.f32.gmra.mxu0 %v53
  %v133 = vpop.f32.mrf.mxu0
  %v134 = vadd.f32 %v36, %v133
  %v135 = vpop.f32.mrf.mxu0
  %v136 = vadd.f32 %v36, %v135
  %137 = vmatprep.mubr.f32.mxu0 0.0
  %138 = vmatmul.mubr.f32.gmra.mxu0 %v56
  %v139 = vpop.f32.mrf.mxu0
  %v140 = vadd.f32 %v41, %v139
  %v141 = vpop.f32.mrf.mxu0
  %v142 = vadd.f32 %v41, %v141
  %143 = vmatprep.mubr.f32.mxu0 0.0
  %144 = vmatmul.mubr.f32.gmra.mxu0 %v59
  %v145 = vpop.f32.mrf.mxu0
  %v146 = vadd.f32 %v46, %v145
  %v147 = vpop.f32.mrf.mxu0
  %v148 = vadd.f32 %v46, %v147
  %149 = vdwg.mxu0
  %150 = vmatprep.subr.mxu0 0.0
  %151 = vmatpush1.msra.mxu0 0.0
  %152 = vmatprep.subr.mxu0 0.0
  %153 = vmatpush1.msra.mxu0 0.0
  %154 = vmatprep.subr.mxu0 0.0
  %155 = vmatpush1.msra.mxu0 0.0
  %156 = vmatprep.subr.mxu0 0.0
  %157 = vmatpush1.msra.mxu0 0.0
  %158 = vmatprep.subr.mxu0 0.0
  %159 = vmatpush1.msra.mxu0 0.0
  %160 = vmatprep.subr.mxu0 0.0
  %161 = vmatpush1.msra.mxu0 0.0
  %162 = vmatprep.subr.mxu0 0.0
  %163 = vmatpush1.msra.mxu0 0.0
  %164 = vmatprep.subr.mxu0 0.0
  %165 = vmatpush1.msra.mxu0 0.0
  %166 = vmatprep.subr.mxu0 0.0
  %167 = vmatpush1.msra.mxu0 0.0
  %168 = vmatprep.subr.mxu0 0.0
  %169 = vmatpush1.msra.mxu0 0.0
  %170 = vmatprep.subr.mxu0 0.0
  %171 = vmatpush1.msra.mxu0 0.0
  %172 = vmatprep.subr.mxu0 0.0
  %173 = vmatpush1.msra.mxu0 0.0
  %174 = vmatprep.subr.mxu0 0.0
  %175 = vmatpush1.msra.mxu0 0.0
  %176 = vmatprep.subr.mxu0 0.0
  %177 = vmatpush1.msra.mxu0 0.0
  %178 = vmatprep.subr.mxu0 0.0
  %179 = vmatpush1.msra.mxu0 0.0
  %180 = vmatprep.subr.mxu0 0.0
  %181 = vmatpush1.msra.mxu0 %v23
  %182 = vmatprep.subr.mxu0 0.0
  %183 = vmatpush2.msra.mxu0 0.0
  %184 = vmatprep.subr.mxu0 0.0
  %185 = vmatpush2.msra.mxu0 0.0
  %186 = vmatprep.subr.mxu0 0.0
  %187 = vmatpush2.msra.mxu0 0.0
  %188 = vmatprep.subr.mxu0 0.0
  %189 = vmatpush2.msra.mxu0 0.0
  %190 = vmatprep.subr.mxu0 0.0
  %191 = vmatpush2.msra.mxu0 0.0
  %192 = vmatprep.subr.mxu0 0.0
  %193 = vmatpush2.msra.mxu0 0.0
  %194 = vmatprep.subr.mxu0 0.0
  %195 = vmatpush2.msra.mxu0 0.0
  %196 = vmatprep.subr.mxu0 0.0
  %197 = vmatpush2.msra.mxu0 0.0
  %198 = vmatprep.subr.mxu0 0.0
  %199 = vmatpush2.msra.mxu0 0.0
  %200 = vmatprep.subr.mxu0 0.0
  %201 = vmatpush2.msra.mxu0 0.0
  %202 = vmatprep.subr.mxu0 0.0
  %203 = vmatpush2.msra.mxu0 0.0
  %204 = vmatprep.subr.mxu0 0.0
  %205 = vmatpush2.msra.mxu0 0.0
  %206 = vmatprep.subr.mxu0 0.0
  %207 = vmatpush2.msra.mxu0 0.0
  %208 = vmatprep.subr.mxu0 0.0
  %209 = vmatpush2.msra.mxu0 0.0
  %210 = vmatprep.subr.mxu0 0.0
  %211 = vmatpush2.msra.mxu0 0.0
  %212 = vmatprep.subr.mxu0 0.0
  %213 = vmatpush2.msra.mxu0 0.0
  %214 = vmatprep.mubr.f32.mxu0 0.0
  %215 = vmatmul.mubr.f32.gmra.mxu0 %v50
  %v216 = vpop.f32.mrf.mxu0
  %v217 = vadd.f32 %v31, %v216
  %v218 = vpop.f32.mrf.mxu0
  %219 = vmatprep.mubr.f32.mxu0 0.0
  %220 = vmatmul.mubr.f32.gmra.mxu0 %v53
  %v221 = vpop.f32.mrf.mxu0
  %v222 = vadd.f32 %v36, %v221
  %v223 = vpop.f32.mrf.mxu0
  %224 = vmatprep.mubr.f32.mxu0 0.0
  %225 = vmatmul.mubr.f32.gmra.mxu0 %v56
  %v226 = vpop.f32.mrf.mxu0
  %v227 = vadd.f32 %v41, %v226
  %v228 = vpop.f32.mrf.mxu0
  %229 = vmatprep.mubr.f32.mxu0 0.0
  %230 = vmatmul.mubr.f32.gmra.mxu0 %v59
  %v231 = vpop.f32.mrf.mxu0
  %v232 = vadd.f32 %v46, %v231
  %v233 = vpop.f32.mrf.mxu0
  %234 = vdwg.mxu0
  %v235 = vld [vmem:[%s3] sm:$0xff]
  %v236 = vld [vmem:[%s3 + $0x8] sm:$0xff]
  %v237 = vld [vmem:[%s3 + $0x10] sm:$0xff]
  %v238 = vld [vmem:[%s3 + $0x18] sm:$0xff]
  %v239 = vld [vmem:[%s3 + $0x20] sm:$0xff]
  %v240 = vld [vmem:[%s3 + $0x28] sm:$0xff]
  %v241 = vld [vmem:[%s3 + $0x30] sm:$0xff]
  %v242 = vld [vmem:[%s3 + $0x38] sm:$0xff]
  %v243 = vld [vmem:[%s3 + $0x40] sm:$0xff]
  %v244 = vld [vmem:[%s3 + $0x48] sm:$0xff]
  %v245 = vld [vmem:[%s3 + $0x50] sm:$0xff]
  %v246 = vld [vmem:[%s3 + $0x58] sm:$0xff]
  %v247 = vadd.f32 %v128, %v235
  %v248 = vadd.f32 %v130, %v236
  %v249 = vadd.f32 %v217, %v237
  %v250 = vadd.f32 %v134, %v238
  %v251 = vadd.f32 %v136, %v239
  %v252 = vadd.f32 %v222, %v240
  %v253 = vadd.f32 %v140, %v241
  %v254 = vadd.f32 %v142, %v242
  %v255 = vadd.f32 %v227, %v243
  %v256 = vadd.f32 %v146, %v244
  %v257 = vadd.f32 %v148, %v245
  %v258 = vadd.f32 %v232, %v246
  %259 = vst [vmem:[%s4] sm:$0xff] %v247
  %260 = vst [vmem:[%s4 + $0x8] sm:$0xff] %v248
  %261 = vst [vmem:[%s4 + $0x10] sm:$0xff] %v249
  %262 = vst [vmem:[%s4 + $0x18] sm:$0xff] %v250
  %263 = vst [vmem:[%s4 + $0x20] sm:$0xff] %v251
  %264 = vst [vmem:[%s4 + $0x28] sm:$0xff] %v252
  %265 = vst [vmem:[%s4 + $0x30] sm:$0xff] %v253
  %266 = vst [vmem:[%s4 + $0x38] sm:$0xff] %v254
  %267 = vst [vmem:[%s4 + $0x40] sm:$0xff] %v255
  %268 = vst [vmem:[%s4 + $0x48] sm:$0xff] %v256
  %269 = vst [vmem:[%s4 + $0x50] sm:$0xff] %v257
  %270 = vst [vmem:[%s4 + $0x58] sm:$0xff] %v258
  // Predicated region
  $region18: #{sparse_feature_pyramid.17} parent=0 // pred_check
    _
  $region19: #{sparse_feature_pyramid.17} parent=0 // pred_check_branch
    %272 = sbr.rel (0) target = $region21
  $region20: #{sparse_feature_pyramid.17} parent=0 // pred_region
    _
  $region21: #{sparse_feature_pyramid.17} parent=0 // pred_fallthru
    _
  // Predicated region
  $region22: #{sparse_feature_pyramid.17} parent=0 // pred_check
    _
  $region23: #{sparse_feature_pyramid.17} parent=0 // pred_check_branch
    %274 = sbr.rel (0) target = $region25
  $region24: #{sparse_feature_pyramid.17} parent=0 // pred_region
    _
  $region25: #{sparse_feature_pyramid.17} parent=0 // pred_fallthru
    _

// kernel: sparse_feature_pyramid.16
$region0: #{sparse_feature_pyramid.16}
  #allocation0 [shape = 'u32[]', space=smem, size = 0x4, offset = 0x4, fixed_abs, tag = 'smem constant byte address 0x4 - core index']
  #allocation1 [shape = 'u32[144,128]{1,0:T(1,128)}', space=vmem, size = 0x12000, scoped, tag = 'internal scratch']
  %s0 = inlined_call_operand.vmem [shape: f32[1536,4], index: 0, kind: input, shape index: {}]
  %s1 = inlined_call_operand.vmem [shape: f32[4,8], index: 1, kind: input, shape index: {}]
  %s2 = inlined_call_operand.vmem [shape: f32[1536,8], index: 2, kind: output, shape index: {}]
  %s3 = sld [smem:[#allocation0]]
  $region18: #{sparse_feature_pyramid.16} parent=0
    _
  %s5 = ssub.s32 1, %s3
  %s6 = scalar_select 0, %s5, %s3
  // Predicated region
  $region2: #{sparse_feature_pyramid.16} parent=0 // pred_check
    _
  $region3: #{sparse_feature_pyramid.16} parent=0 // pred_check_branch
    %8 = sbr.rel (0) target = $region5
  $region4: #{sparse_feature_pyramid.16} parent=0 // pred_region
    _
  $region5: #{sparse_feature_pyramid.16} parent=0 // pred_fallthru
    _
  // Predicated region
  $region6: #{sparse_feature_pyramid.16} parent=0 // pred_check
    _
  $region7: #{sparse_feature_pyramid.16} parent=0 // pred_check_branch
    %10 = sbr.rel (0) target = $region9
  $region8: #{sparse_feature_pyramid.16} parent=0 // pred_region
    _
  $region9: #{sparse_feature_pyramid.16} parent=0 // pred_fallthru
    _
  %v11 = vld [vmem:[%s0] sm:$0xff]
  %v12 = vld [vmem:[%s0 + $0x8] sm:$0xff]
  %v13 = vld [vmem:[%s0 + $0x10] sm:$0xff]
  %v14 = vld [vmem:[%s0 + $0x18] sm:$0xff]
  %v15 = vld [vmem:[%s0 + $0x20] sm:$0xff]
  %v16 = vld [vmem:[%s0 + $0x28] sm:$0xff]
  %v17 = vld [vmem:[%s0 + $0x30] sm:$0xff]
  %v18 = vld [vmem:[%s0 + $0x38] sm:$0xff]
  %v19 = vld [vmem:[%s0 + $0x40] sm:$0xff]
  %v20 = vld [vmem:[%s0 + $0x48] sm:$0xff]
  %v21 = vld [vmem:[%s0 + $0x50] sm:$0xff]
  %v22 = vld [vmem:[%s0 + $0x58] sm:$0xff]
  %v23 = vld [vmem:[%s0 + $0x60] sm:$0xff]
  %v24 = vld [vmem:[%s0 + $0x68] sm:$0xff]
  %v25 = vld [vmem:[%s0 + $0x70] sm:$0xff]
  %v26 = vld [vmem:[%s0 + $0x78] sm:$0xff]
  %v27 = vld [vmem:[%s0 + $0x80] sm:$0xff]
  %v28 = vld [vmem:[%s0 + $0x88] sm:$0xff]
  %v29 = vld [vmem:[%s0 + $0x90] sm:$0xff]
  %v30 = vld [vmem:[%s0 + $0x98] sm:$0xff]
  %v31 = vld [vmem:[%s0 + $0xa0] sm:$0xff]
  %v32 = vld [vmem:[%s0 + $0xa8] sm:$0xff]
  %v33 = vld [vmem:[%s0 + $0xb0] sm:$0xff]
  %v34 = vld [vmem:[%s0 + $0xb8] sm:$0xff]
  %v35 = vld [vmem:[%s0 + $0xc0] sm:$0xff]
  %v36 = vld [vmem:[%s0 + $0xc8] sm:$0xff]
  %v37 = vld [vmem:[%s0 + $0xd0] sm:$0xff]
  %v38 = vld [vmem:[%s0 + $0xd8] sm:$0xff]
  %v39 = vld [vmem:[%s0 + $0xe0] sm:$0xff]
  %v40 = vld [vmem:[%s0 + $0xe8] sm:$0xff]
  %v41 = vld [vmem:[%s0 + $0xf0] sm:$0xff]
  %v42 = vld [vmem:[%s0 + $0xf8] sm:$0xff]
  %v43 = vld [vmem:[%s0 + $0x100] sm:$0xff]
  %v44 = vld [vmem:[%s0 + $0x108] sm:$0xff]
  %v45 = vld [vmem:[%s0 + $0x110] sm:$0xff]
  %v46 = vld [vmem:[%s0 + $0x118] sm:$0xff]
  %v47 = vld [vmem:[%s0 + $0x120] sm:$0xff]
  %v48 = vld [vmem:[%s0 + $0x128] sm:$0xff]
  %v49 = vld [vmem:[%s0 + $0x130] sm:$0xff]
  %v50 = vld [vmem:[%s0 + $0x138] sm:$0xff]
  %v51 = vld [vmem:[%s0 + $0x140] sm:$0xff]
  %v52 = vld [vmem:[%s0 + $0x148] sm:$0xff]
  %v53 = vld [vmem:[%s0 + $0x150] sm:$0xff]
  %v54 = vld [vmem:[%s0 + $0x158] sm:$0xff]
  %v55 = vld [vmem:[%s0 + $0x160] sm:$0xff]
  %v56 = vld [vmem:[%s0 + $0x168] sm:$0xff]
  %v57 = vld [vmem:[%s0 + $0x170] sm:$0xff]
  %v58 = vld [vmem:[%s0 + $0x178] sm:$0xff]
  %v59 = vld [vmem:[%s0 + $0x180] sm:$0xff]
  %v60 = vld [vmem:[%s0 + $0x188] sm:$0xff]
  %v61 = vld [vmem:[%s0 + $0x190] sm:$0xff]
  %v62 = vld [vmem:[%s0 + $0x198] sm:$0xff]
  %v63 = vld [vmem:[%s0 + $0x1a0] sm:$0xff]
  %v64 = vld [vmem:[%s0 + $0x1a8] sm:$0xff]
  %v65 = vld [vmem:[%s0 + $0x1b0] sm:$0xff]
  %v66 = vld [vmem:[%s0 + $0x1b8] sm:$0xff]
  %v67 = vld [vmem:[%s0 + $0x1c0] sm:$0xff]
  %v68 = vld [vmem:[%s0 + $0x1c8] sm:$0xff]
  %v69 = vld [vmem:[%s0 + $0x1d0] sm:$0xff]
  %v70 = vld [vmem:[%s0 + $0x1d8] sm:$0xff]
  %v71 = vld [vmem:[%s0 + $0x1e0] sm:$0xff]
  %v72 = vld [vmem:[%s0 + $0x1e8] sm:$0xff]
  %v73 = vld [vmem:[%s0 + $0x1f0] sm:$0xff]
  %v74 = vld [vmem:[%s0 + $0x1f8] sm:$0xff]
  %v75 = vld [vmem:[%s0 + $0x200] sm:$0xff]
  %v76 = vld [vmem:[%s0 + $0x208] sm:$0xff]
  %v77 = vld [vmem:[%s0 + $0x210] sm:$0xff]
  %v78 = vld [vmem:[%s0 + $0x218] sm:$0xff]
  %v79 = vld [vmem:[%s0 + $0x220] sm:$0xff]
  %v80 = vld [vmem:[%s0 + $0x228] sm:$0xff]
  %v81 = vld [vmem:[%s0 + $0x230] sm:$0xff]
  %v82 = vld [vmem:[%s0 + $0x238] sm:$0xff]
  %v83 = vld [vmem:[%s0 + $0x240] sm:$0xff]
  %v84 = vld [vmem:[%s0 + $0x248] sm:$0xff]
  %v85 = vld [vmem:[%s0 + $0x250] sm:$0xff]
  %v86 = vld [vmem:[%s0 + $0x258] sm:$0xff]
  %v87 = vld [vmem:[%s0 + $0x260] sm:$0xff]
  %v88 = vld [vmem:[%s0 + $0x268] sm:$0xff]
  %v89 = vld [vmem:[%s0 + $0x270] sm:$0xff]
  %v90 = vld [vmem:[%s0 + $0x278] sm:$0xff]
  %v91 = vld [vmem:[%s0 + $0x280] sm:$0xff]
  %v92 = vld [vmem:[%s0 + $0x288] sm:$0xff]
  %v93 = vld [vmem:[%s0 + $0x290] sm:$0xff]
  %v94 = vld [vmem:[%s0 + $0x298] sm:$0xff]
  %v95 = vld [vmem:[%s0 + $0x2a0] sm:$0xff]
  %v96 = vld [vmem:[%s0 + $0x2a8] sm:$0xff]
  %v97 = vld [vmem:[%s0 + $0x2b0] sm:$0xff]
  %v98 = vld [vmem:[%s0 + $0x2b8] sm:$0xff]
  %v99 = vld [vmem:[%s0 + $0x2c0] sm:$0xff]
  %v100 = vld [vmem:[%s0 + $0x2c8] sm:$0xff]
  %v101 = vld [vmem:[%s0 + $0x2d0] sm:$0xff]
  %v102 = vld [vmem:[%s0 + $0x2d8] sm:$0xff]
  %v103 = vld [vmem:[%s0 + $0x2e0] sm:$0xff]
  %v104 = vld [vmem:[%s0 + $0x2e8] sm:$0xff]
  %v105 = vld [vmem:[%s0 + $0x2f0] sm:$0xff]
  %v106 = vld [vmem:[%s0 + $0x2f8] sm:$0xff]
  %v107 = vld [vmem:[%s0 + $0x300] sm:$0xff]
  %v108 = vld [vmem:[%s0 + $0x308] sm:$0xff]
  %v109 = vld [vmem:[%s0 + $0x310] sm:$0xff]
  %v110 = vld [vmem:[%s0 + $0x318] sm:$0xff]
  %v111 = vld [vmem:[%s0 + $0x320] sm:$0xff]
  %v112 = vld [vmem:[%s0 + $0x328] sm:$0xff]
  %v113 = vld [vmem:[%s0 + $0x330] sm:$0xff]
  %v114 = vld [vmem:[%s0 + $0x338] sm:$0xff]
  %v115 = vld [vmem:[%s0 + $0x340] sm:$0xff]
  %v116 = vld [vmem:[%s0 + $0x348] sm:$0xff]
  %v117 = vld [vmem:[%s0 + $0x350] sm:$0xff]
  %v118 = vld [vmem:[%s0 + $0x358] sm:$0xff]
  %v119 = vld [vmem:[%s0 + $0x360] sm:$0xff]
  %v120 = vld [vmem:[%s0 + $0x368] sm:$0xff]
  %v121 = vld [vmem:[%s0 + $0x370] sm:$0xff]
  %v122 = vld [vmem:[%s0 + $0x378] sm:$0xff]
  %v123 = vld [vmem:[%s0 + $0x380] sm:$0xff]
  %v124 = vld [vmem:[%s0 + $0x388] sm:$0xff]
  %v125 = vld [vmem:[%s0 + $0x390] sm:$0xff]
  %v126 = vld [vmem:[%s0 + $0x398] sm:$0xff]
  %v127 = vld [vmem:[%s0 + $0x3a0] sm:$0xff]
  %v128 = vld [vmem:[%s0 + $0x3a8] sm:$0xff]
  %v129 = vld [vmem:[%s0 + $0x3b0] sm:$0xff]
  %v130 = vld [vmem:[%s0 + $0x3b8] sm:$0xff]
  %v131 = vld [vmem:[%s0 + $0x3c0] sm:$0xff]
  %v132 = vld [vmem:[%s0 + $0x3c8] sm:$0xff]
  %v133 = vld [vmem:[%s0 + $0x3d0] sm:$0xff]
  %v134 = vld [vmem:[%s0 + $0x3d8] sm:$0xff]
  %v135 = vld [vmem:[%s0 + $0x3e0] sm:$0xff]
  %v136 = vld [vmem:[%s0 + $0x3e8] sm:$0xff]
  %v137 = vld [vmem:[%s0 + $0x3f0] sm:$0xff]
  %v138 = vld [vmem:[%s0 + $0x3f8] sm:$0xff]
  %v139 = vld [vmem:[%s0 + $0x400] sm:$0xff]
  %v140 = vld [vmem:[%s0 + $0x408] sm:$0xff]
  %v141 = vld [vmem:[%s0 + $0x410] sm:$0xff]
  %v142 = vld [vmem:[%s0 + $0x418] sm:$0xff]
  %v143 = vld [vmem:[%s0 + $0x420] sm:$0xff]
  %v144 = vld [vmem:[%s0 + $0x428] sm:$0xff]
  %v145 = vld [vmem:[%s0 + $0x430] sm:$0xff]
  %v146 = vld [vmem:[%s0 + $0x438] sm:$0xff]
  %v147 = vld [vmem:[%s0 + $0x440] sm:$0xff]
  %v148 = vld [vmem:[%s0 + $0x448] sm:$0xff]
  %v149 = vld [vmem:[%s0 + $0x450] sm:$0xff]
  %v150 = vld [vmem:[%s0 + $0x458] sm:$0xff]
  %v151 = vld [vmem:[%s0 + $0x460] sm:$0xff]
  %v152 = vld [vmem:[%s0 + $0x468] sm:$0xff]
  %v153 = vld [vmem:[%s0 + $0x470] sm:$0xff]
  %v154 = vld [vmem:[%s0 + $0x478] sm:$0xff]
  %v155 = vld [vmem:[%s0 + $0x480] sm:$0xff]
  %v156 = vld [vmem:[%s0 + $0x488] sm:$0xff]
  %v157 = vld [vmem:[%s0 + $0x490] sm:$0xff]
  %v158 = vld [vmem:[%s0 + $0x498] sm:$0xff]
  %v159 = vld [vmem:[%s0 + $0x4a0] sm:$0xff]
  %v160 = vld [vmem:[%s0 + $0x4a8] sm:$0xff]
  %v161 = vld [vmem:[%s0 + $0x4b0] sm:$0xff]
  %v162 = vld [vmem:[%s0 + $0x4b8] sm:$0xff]
  %v163 = vld [vmem:[%s0 + $0x4c0] sm:$0xff]
  %v164 = vld [vmem:[%s0 + $0x4c8] sm:$0xff]
  %v165 = vld [vmem:[%s0 + $0x4d0] sm:$0xff]
  %v166 = vld [vmem:[%s0 + $0x4d8] sm:$0xff]
  %v167 = vld [vmem:[%s0 + $0x4e0] sm:$0xff]
  %v168 = vld [vmem:[%s0 + $0x4e8] sm:$0xff]
  %v169 = vld [vmem:[%s0 + $0x4f0] sm:$0xff]
  %v170 = vld [vmem:[%s0 + $0x4f8] sm:$0xff]
  %v171 = vld [vmem:[%s0 + $0x500] sm:$0xff]
  %v172 = vld [vmem:[%s0 + $0x508] sm:$0xff]
  %v173 = vld [vmem:[%s0 + $0x510] sm:$0xff]
  %v174 = vld [vmem:[%s0 + $0x518] sm:$0xff]
  %v175 = vld [vmem:[%s0 + $0x520] sm:$0xff]
  %v176 = vld [vmem:[%s0 + $0x528] sm:$0xff]
  %v177 = vld [vmem:[%s0 + $0x530] sm:$0xff]
  %v178 = vld [vmem:[%s0 + $0x538] sm:$0xff]
  %v179 = vld [vmem:[%s0 + $0x540] sm:$0xff]
  %v180 = vld [vmem:[%s0 + $0x548] sm:$0xff]
  %v181 = vld [vmem:[%s0 + $0x550] sm:$0xff]
  %v182 = vld [vmem:[%s0 + $0x558] sm:$0xff]
  %v183 = vld [vmem:[%s0 + $0x560] sm:$0xff]
  %v184 = vld [vmem:[%s0 + $0x568] sm:$0xff]
  %v185 = vld [vmem:[%s0 + $0x570] sm:$0xff]
  %v186 = vld [vmem:[%s0 + $0x578] sm:$0xff]
  %v187 = vld [vmem:[%s0 + $0x580] sm:$0xff]
  %v188 = vld [vmem:[%s0 + $0x588] sm:$0xff]
  %v189 = vld [vmem:[%s0 + $0x590] sm:$0xff]
  %v190 = vld [vmem:[%s0 + $0x598] sm:$0xff]
  %v191 = vld [vmem:[%s0 + $0x5a0] sm:$0xff]
  %v192 = vld [vmem:[%s0 + $0x5a8] sm:$0xff]
  %v193 = vld [vmem:[%s0 + $0x5b0] sm:$0xff]
  %v194 = vld [vmem:[%s0 + $0x5b8] sm:$0xff]
  %v195 = vld [vmem:[%s0 + $0x5c0] sm:$0xff]
  %v196 = vld [vmem:[%s0 + $0x5c8] sm:$0xff]
  %v197 = vld [vmem:[%s0 + $0x5d0] sm:$0xff]
  %v198 = vld [vmem:[%s0 + $0x5d8] sm:$0xff]
  %v199 = vld [vmem:[%s0 + $0x5e0] sm:$0xff]
  %v200 = vld [vmem:[%s0 + $0x5e8] sm:$0xff]
  %v201 = vld [vmem:[%s0 + $0x5f0] sm:$0xff]
  %v202 = vld [vmem:[%s0 + $0x5f8] sm:$0xff]
  %v203 = vld [vmem:[%s1] sm:$0xf]
  %vm204 = vcmask 31744
  %v206 = vsel %vm204, %v11, 0
  %v209 = vsel %vm204, %v12, 0
  %v212 = vsel %vm204, %v13, 0
  %v215 = vsel %vm204, %v14, 0
  %v218 = vsel %vm204, %v15, 0
  %v221 = vsel %vm204, %v16, 0
  %v224 = vsel %vm204, %v17, 0
  %v227 = vsel %vm204, %v18, 0
  %v230 = vsel %vm204, %v19, 0
  %v233 = vsel %vm204, %v20, 0
  %v236 = vsel %vm204, %v21, 0
  %v239 = vsel %vm204, %v22, 0
  %v242 = vsel %vm204, %v23, 0
  %v245 = vsel %vm204, %v24, 0
  %v248 = vsel %vm204, %v25, 0
  %v251 = vsel %vm204, %v26, 0
  %v254 = vsel %vm204, %v27, 0
  %v257 = vsel %vm204, %v28, 0
  %v260 = vsel %vm204, %v29, 0
  %v263 = vsel %vm204, %v30, 0
  %v266 = vsel %vm204, %v31, 0
  %v269 = vsel %vm204, %v32, 0
  %v272 = vsel %vm204, %v33, 0
  %v275 = vsel %vm204, %v34, 0
  %v278 = vsel %vm204, %v35, 0
  %v281 = vsel %vm204, %v36, 0
  %v284 = vsel %vm204, %v37, 0
  %v287 = vsel %vm204, %v38, 0
  %v290 = vsel %vm204, %v39, 0
  %v293 = vsel %vm204, %v40, 0
  %v296 = vsel %vm204, %v41, 0
  %v299 = vsel %vm204, %v42, 0
  %v302 = vsel %vm204, %v43, 0
  %v305 = vsel %vm204, %v44, 0
  %v308 = vsel %vm204, %v45, 0
  %v311 = vsel %vm204, %v46, 0
  %v314 = vsel %vm204, %v47, 0
  %v317 = vsel %vm204, %v48, 0
  %v320 = vsel %vm204, %v49, 0
  %v323 = vsel %vm204, %v50, 0
  %v326 = vsel %vm204, %v51, 0
  %v329 = vsel %vm204, %v52, 0
  %v332 = vsel %vm204, %v53, 0
  %v335 = vsel %vm204, %v54, 0
  %v338 = vsel %vm204, %v55, 0
  %v341 = vsel %vm204, %v56, 0
  %v344 = vsel %vm204, %v57, 0
  %v347 = vsel %vm204, %v58, 0
  %v350 = vsel %vm204, %v59, 0
  %v353 = vsel %vm204, %v60, 0
  %v356 = vsel %vm204, %v61, 0
  %v359 = vsel %vm204, %v62, 0
  %v362 = vsel %vm204, %v63, 0
  %v365 = vsel %vm204, %v64, 0
  %v368 = vsel %vm204, %v65, 0
  %v371 = vsel %vm204, %v66, 0
  %v374 = vsel %vm204, %v67, 0
  %v377 = vsel %vm204, %v68, 0
  %v380 = vsel %vm204, %v69, 0
  %v383 = vsel %vm204, %v70, 0
  %v386 = vsel %vm204, %v71, 0
  %v389 = vsel %vm204, %v72, 0
  %v392 = vsel %vm204, %v73, 0
  %v395 = vsel %vm204, %v74, 0
  %v398 = vsel %vm204, %v75, 0
  %v401 = vsel %vm204, %v76, 0
  %v404 = vsel %vm204, %v77, 0
  %v407 = vsel %vm204, %v78, 0
  %v410 = vsel %vm204, %v79, 0
  %v413 = vsel %vm204, %v80, 0
  %v416 = vsel %vm204, %v81, 0
  %v419 = vsel %vm204, %v82, 0
  %v422 = vsel %vm204, %v83, 0
  %v425 = vsel %vm204, %v84, 0
  %v428 = vsel %vm204, %v85, 0
  %v431 = vsel %vm204, %v86, 0
  %v434 = vsel %vm204, %v87, 0
  %v437 = vsel %vm204, %v88, 0
  %v440 = vsel %vm204, %v89, 0
  %v443 = vsel %vm204, %v90, 0
  %v446 = vsel %vm204, %v91, 0
  %v449 = vsel %vm204, %v92, 0
  %v452 = vsel %vm204, %v93, 0
  %v455 = vsel %vm204, %v94, 0
  %v458 = vsel %vm204, %v95, 0
  %v461 = vsel %vm204, %v96, 0
  %v464 = vsel %vm204, %v97, 0
  %v467 = vsel %vm204, %v98, 0
  %v470 = vsel %vm204, %v99, 0
  %v473 = vsel %vm204, %v100, 0
  %v476 = vsel %vm204, %v101, 0
  %v479 = vsel %vm204, %v102, 0
  %v482 = vsel %vm204, %v103, 0
  %v485 = vsel %vm204, %v104, 0
  %v488 = vsel %vm204, %v105, 0
  %v491 = vsel %vm204, %v106, 0
  %v494 = vsel %vm204, %v107, 0
  %v497 = vsel %vm204, %v108, 0
  %v500 = vsel %vm204, %v109, 0
  %v503 = vsel %vm204, %v110, 0
  %v506 = vsel %vm204, %v111, 0
  %v509 = vsel %vm204, %v112, 0
  %v512 = vsel %vm204, %v113, 0
  %v515 = vsel %vm204, %v114, 0
  %v518 = vsel %vm204, %v115, 0
  %v521 = vsel %vm204, %v116, 0
  %v524 = vsel %vm204, %v117, 0
  %v527 = vsel %vm204, %v118, 0
  %v530 = vsel %vm204, %v119, 0
  %v533 = vsel %vm204, %v120, 0
  %v536 = vsel %vm204, %v121, 0
  %v539 = vsel %vm204, %v122, 0
  %v542 = vsel %vm204, %v123, 0
  %v545 = vsel %vm204, %v124, 0
  %v548 = vsel %vm204, %v125, 0
  %v551 = vsel %vm204, %v126, 0
  %v554 = vsel %vm204, %v127, 0
  %v557 = vsel %vm204, %v128, 0
  %v560 = vsel %vm204, %v129, 0
  %v563 = vsel %vm204, %v130, 0
  %v566 = vsel %vm204, %v131, 0
  %v569 = vsel %vm204, %v132, 0
  %v572 = vsel %vm204, %v133, 0
  %v575 = vsel %vm204, %v134, 0
  %v578 = vsel %vm204, %v135, 0
  %v581 = vsel %vm204, %v136, 0
  %v584 = vsel %vm204, %v137, 0
  %v587 = vsel %vm204, %v138, 0
  %v590 = vsel %vm204, %v139, 0
  %v593 = vsel %vm204, %v140, 0
  %v596 = vsel %vm204, %v141, 0
  %v599 = vsel %vm204, %v142, 0
  %v602 = vsel %vm204, %v143, 0
  %v605 = vsel %vm204, %v144, 0
  %v608 = vsel %vm204, %v145, 0
  %v611 = vsel %vm204, %v146, 0
  %v614 = vsel %vm204, %v147, 0
  %v617 = vsel %vm204, %v148, 0
  %v620 = vsel %vm204, %v149, 0
  %v623 = vsel %vm204, %v150, 0
  %v626 = vsel %vm204, %v151, 0
  %v629 = vsel %vm204, %v152, 0
  %v632 = vsel %vm204, %v153, 0
  %v635 = vsel %vm204, %v154, 0
  %v638 = vsel %vm204, %v155, 0
  %v641 = vsel %vm204, %v156, 0
  %v644 = vsel %vm204, %v157, 0
  %v647 = vsel %vm204, %v158, 0
  %v650 = vsel %vm204, %v159, 0
  %v653 = vsel %vm204, %v160, 0
  %v656 = vsel %vm204, %v161, 0
  %v659 = vsel %vm204, %v162, 0
  %v662 = vsel %vm204, %v163, 0
  %v665 = vsel %vm204, %v164, 0
  %v668 = vsel %vm204, %v165, 0
  %v671 = vsel %vm204, %v166, 0
  %v674 = vsel %vm204, %v167, 0
  %v677 = vsel %vm204, %v168, 0
  %v680 = vsel %vm204, %v169, 0
  %v683 = vsel %vm204, %v170, 0
  %v686 = vsel %vm204, %v171, 0
  %v689 = vsel %vm204, %v172, 0
  %v692 = vsel %vm204, %v173, 0
  %v695 = vsel %vm204, %v174, 0
  %v698 = vsel %vm204, %v175, 0
  %v701 = vsel %vm204, %v176, 0
  %v704 = vsel %vm204, %v177, 0
  %v707 = vsel %vm204, %v178, 0
  %v710 = vsel %vm204, %v179, 0
  %v713 = vsel %vm204, %v180, 0
  %v716 = vsel %vm204, %v181, 0
  %v719 = vsel %vm204, %v182, 0
  %v722 = vsel %vm204, %v183, 0
  %v725 = vsel %vm204, %v184, 0
  %v728 = vsel %vm204, %v185, 0
  %v731 = vsel %vm204, %v186, 0
  %v734 = vsel %vm204, %v187, 0
  %v737 = vsel %vm204, %v188, 0
  %v740 = vsel %vm204, %v189, 0
  %v743 = vsel %vm204, %v190, 0
  %v746 = vsel %vm204, %v191, 0
  %v749 = vsel %vm204, %v192, 0
  %v752 = vsel %vm204, %v193, 0
  %v755 = vsel %vm204, %v194, 0
  %v758 = vsel %vm204, %v195, 0
  %v761 = vsel %vm204, %v196, 0
  %v764 = vsel %vm204, %v197, 0
  %v767 = vsel %vm204, %v198, 0
  %v770 = vsel %vm204, %v199, 0
  %v773 = vsel %vm204, %v200, 0
  %v776 = vsel %vm204, %v201, 0
  %v779 = vsel %vm204, %v202, 0
  %vm781 = vcmask 1043456
  %v783 = vsel %vm781, %v203, 0
  %785 = vmatprep.subr.mxu0 0.0
  %786 = vmatpush1.msra.mxu0 0.0
  %787 = vmatprep.subr.mxu0 0.0
  %788 = vmatpush1.msra.mxu0 0.0
  %789 = vmatprep.subr.mxu0 0.0
  %790 = vmatpush1.msra.mxu0 0.0
  %791 = vmatprep.subr.mxu0 0.0
  %792 = vmatpush1.msra.mxu0 0.0
  %793 = vmatprep.subr.mxu0 0.0
  %794 = vmatpush1.msra.mxu0 0.0
  %795 = vmatprep.subr.mxu0 0.0
  %796 = vmatpush1.msra.mxu0 0.0
  %797 = vmatprep.subr.mxu0 0.0
  %798 = vmatpush1.msra.mxu0 0.0
  %799 = vmatprep.subr.mxu0 0.0
  %800 = vmatpush1.msra.mxu0 0.0
  %801 = vmatprep.subr.mxu0 0.0
  %802 = vmatpush1.msra.mxu0 0.0
  %803 = vmatprep.subr.mxu0 0.0
  %804 = vmatpush1.msra.mxu0 0.0
  %805 = vmatprep.subr.mxu0 0.0
  %806 = vmatpush1.msra.mxu0 0.0
  %807 = vmatprep.subr.mxu0 0.0
  %808 = vmatpush1.msra.mxu0 0.0
  %809 = vmatprep.subr.mxu0 0.0
  %810 = vmatpush1.msra.mxu0 0.0
  %811 = vmatprep.subr.mxu0 0.0
  %812 = vmatpush1.msra.mxu0 0.0
  %813 = vmatprep.subr.mxu0 0.0
  %814 = vmatpush1.msra.mxu0 0.0
  %815 = vmatprep.subr.mxu0 0.0
  %816 = vmatpush1.msra.mxu0 %v783
  %817 = vmatprep.subr.mxu0 0.0
  %818 = vmatpush2.msra.mxu0 0.0
  %819 = vmatprep.subr.mxu0 0.0
  %820 = vmatpush2.msra.mxu0 0.0
  %821 = vmatprep.subr.mxu0 0.0
  %822 = vmatpush2.msra.mxu0 0.0
  %823 = vmatprep.subr.mxu0 0.0
  %824 = vmatpush2.msra.mxu0 0.0
  %825 = vmatprep.subr.mxu0 0.0
  %826 = vmatpush2.msra.mxu0 0.0
  %827 = vmatprep.subr.mxu0 0.0
  %828 = vmatpush2.msra.mxu0 0.0
  %829 = vmatprep.subr.mxu0 0.0
  %830 = vmatpush2.msra.mxu0 0.0
  %831 = vmatprep.subr.mxu0 0.0
  %832 = vmatpush2.msra.mxu0 0.0
  %833 = vmatprep.subr.mxu0 0.0
  %834 = vmatpush2.msra.mxu0 0.0
  %835 = vmatprep.subr.mxu0 0.0
  %836 = vmatpush2.msra.mxu0 0.0
  %837 = vmatprep.subr.mxu0 0.0
  %838 = vmatpush2.msra.mxu0 0.0
  %839 = vmatprep.subr.mxu0 0.0
  %840 = vmatpush2.msra.mxu0 0.0
  %841 = vmatprep.subr.mxu0 0.0
  %842 = vmatpush2.msra.mxu0 0.0
  %843 = vmatprep.subr.mxu0 0.0
  %844 = vmatpush2.msra.mxu0 0.0
  %845 = vmatprep.subr.mxu0 0.0
  %846 = vmatpush2.msra.mxu0 0.0
  %847 = vmatprep.subr.mxu0 0.0
  %848 = vmatpush2.msra.mxu0 0.0
  %849 = vmatprep.mubr.f32.mxu0 0.0
  %850 = vmatmul.mubr.f32.gmra.mxu0 %v206
  %v851 = vpop.f32.mrf.mxu0
  %v852 = vadd.f32 0.0, %v851
  %v853 = vpop.f32.mrf.mxu0
  %854 = vmatprep.mubr.f32.mxu0 0.0
  %855 = vmatmul.mubr.f32.gmra.mxu0 %v209
  %v856 = vpop.f32.mrf.mxu0
  %v857 = vadd.f32 0.0, %v856
  %v858 = vpop.f32.mrf.mxu0
  %859 = vmatprep.mubr.f32.mxu0 0.0
  %860 = vmatmul.mubr.f32.gmra.mxu0 %v212
  %v861 = vpop.f32.mrf.mxu0
  %v862 = vadd.f32 0.0, %v861
  %v863 = vpop.f32.mrf.mxu0
  %864 = vmatprep.mubr.f32.mxu0 0.0
  %865 = vmatmul.mubr.f32.gmra.mxu0 %v215
  %v866 = vpop.f32.mrf.mxu0
  %v867 = vadd.f32 0.0, %v866
  %v868 = vpop.f32.mrf.mxu0
  %869 = vmatprep.mubr.f32.mxu0 0.0
  %870 = vmatmul.mubr.f32.gmra.mxu0 %v218
  %v871 = vpop.f32.mrf.mxu0
  %v872 = vadd.f32 0.0, %v871
  %v873 = vpop.f32.mrf.mxu0
  %874 = vmatprep.mubr.f32.mxu0 0.0
  %875 = vmatmul.mubr.f32.gmra.mxu0 %v221
  %v876 = vpop.f32.mrf.mxu0
  %v877 = vadd.f32 0.0, %v876
  %v878 = vpop.f32.mrf.mxu0
  %879 = vmatprep.mubr.f32.mxu0 0.0
  %880 = vmatmul.mubr.f32.gmra.mxu0 %v224
  %v881 = vpop.f32.mrf.mxu0
  %v882 = vadd.f32 0.0, %v881
  %v883 = vpop.f32.mrf.mxu0
  %884 = vmatprep.mubr.f32.mxu0 0.0
  %885 = vmatmul.mubr.f32.gmra.mxu0 %v227
  %v886 = vpop.f32.mrf.mxu0
  %v887 = vadd.f32 0.0, %v886
  %v888 = vpop.f32.mrf.mxu0
  %889 = vmatprep.mubr.f32.mxu0 0.0
  %890 = vmatmul.mubr.f32.gmra.mxu0 %v230
  %v891 = vpop.f32.mrf.mxu0
  %v892 = vadd.f32 0.0, %v891
  %v893 = vpop.f32.mrf.mxu0
  %894 = vmatprep.mubr.f32.mxu0 0.0
  %895 = vmatmul.mubr.f32.gmra.mxu0 %v233
  %v896 = vpop.f32.mrf.mxu0
  %v897 = vadd.f32 0.0, %v896
  %v898 = vpop.f32.mrf.mxu0
  %899 = vmatprep.mubr.f32.mxu0 0.0
  %900 = vmatmul.mubr.f32.gmra.mxu0 %v236
  %v901 = vpop.f32.mrf.mxu0
  %v902 = vadd.f32 0.0, %v901
  %v903 = vpop.f32.mrf.mxu0
  %904 = vmatprep.mubr.f32.mxu0 0.0
  %905 = vmatmul.mubr.f32.gmra.mxu0 %v239
  %v906 = vpop.f32.mrf.mxu0
  %v907 = vadd.f32 0.0, %v906
  %v908 = vpop.f32.mrf.mxu0
  %909 = vmatprep.mubr.f32.mxu0 0.0
  %910 = vmatmul.mubr.f32.gmra.mxu0 %v242
  %v911 = vpop.f32.mrf.mxu0
  %v912 = vadd.f32 0.0, %v911
  %v913 = vpop.f32.mrf.mxu0
  %914 = vmatprep.mubr.f32.mxu0 0.0
  %915 = vmatmul.mubr.f32.gmra.mxu0 %v245
  %v916 = vpop.f32.mrf.mxu0
  %v917 = vadd.f32 0.0, %v916
  %v918 = vpop.f32.mrf.mxu0
  %919 = vmatprep.mubr.f32.mxu0 0.0
  %920 = vmatmul.mubr.f32.gmra.mxu0 %v248
  %v921 = vpop.f32.mrf.mxu0
  %v922 = vadd.f32 0.0, %v921
  %v923 = vpop.f32.mrf.mxu0
  %924 = vmatprep.mubr.f32.mxu0 0.0
  %925 = vmatmul.mubr.f32.gmra.mxu0 %v251
  %v926 = vpop.f32.mrf.mxu0
  %v927 = vadd.f32 0.0, %v926
  %v928 = vpop.f32.mrf.mxu0
  %929 = vmatprep.mubr.f32.mxu0 0.0
  %930 = vmatmul.mubr.f32.gmra.mxu0 %v254
  %v931 = vpop.f32.mrf.mxu0
  %v932 = vadd.f32 0.0, %v931
  %v933 = vpop.f32.mrf.mxu0
  %934 = vmatprep.mubr.f32.mxu0 0.0
  %935 = vmatmul.mubr.f32.gmra.mxu0 %v257
  %v936 = vpop.f32.mrf.mxu0
  %v937 = vadd.f32 0.0, %v936
  %v938 = vpop.f32.mrf.mxu0
  %939 = vmatprep.mubr.f32.mxu0 0.0
  %940 = vmatmul.mubr.f32.gmra.mxu0 %v260
  %v941 = vpop.f32.mrf.mxu0
  %v942 = vadd.f32 0.0, %v941
  %v943 = vpop.f32.mrf.mxu0
  %944 = vmatprep.mubr.f32.mxu0 0.0
  %945 = vmatmul.mubr.f32.gmra.mxu0 %v263
  %v946 = vpop.f32.mrf.mxu0
  %v947 = vadd.f32 0.0, %v946
  %v948 = vpop.f32.mrf.mxu0
  %949 = vmatprep.mubr.f32.mxu0 0.0
  %950 = vmatmul.mubr.f32.gmra.mxu0 %v266
  %v951 = vpop.f32.mrf.mxu0
  %v952 = vadd.f32 0.0, %v951
  %v953 = vpop.f32.mrf.mxu0
  %954 = vmatprep.mubr.f32.mxu0 0.0
  %955 = vmatmul.mubr.f32.gmra.mxu0 %v269
  %v956 = vpop.f32.mrf.mxu0
  %v957 = vadd.f32 0.0, %v956
  %v958 = vpop.f32.mrf.mxu0
  %959 = vmatprep.mubr.f32.mxu0 0.0
  %960 = vmatmul.mubr.f32.gmra.mxu0 %v272
  %v961 = vpop.f32.mrf.mxu0
  %v962 = vadd.f32 0.0, %v961
  %v963 = vpop.f32.mrf.mxu0
  %964 = vmatprep.mubr.f32.mxu0 0.0
  %965 = vmatmul.mubr.f32.gmra.mxu0 %v275
  %v966 = vpop.f32.mrf.mxu0
  %v967 = vadd.f32 0.0, %v966
  %v968 = vpop.f32.mrf.mxu0
  %969 = vmatprep.mubr.f32.mxu0 0.0
  %970 = vmatmul.mubr.f32.gmra.mxu0 %v278
  %v971 = vpop.f32.mrf.mxu0
  %v972 = vadd.f32 0.0, %v971
  %v973 = vpop.f32.mrf.mxu0
  %974 = vmatprep.mubr.f32.mxu0 0.0
  %975 = vmatmul.mubr.f32.gmra.mxu0 %v281
  %v976 = vpop.f32.mrf.mxu0
  %v977 = vadd.f32 0.0, %v976
  %v978 = vpop.f32.mrf.mxu0
  %979 = vmatprep.mubr.f32.mxu0 0.0
  %980 = vmatmul.mubr.f32.gmra.mxu0 %v284
  %v981 = vpop.f32.mrf.mxu0
  %v982 = vadd.f32 0.0, %v981
  %v983 = vpop.f32.mrf.mxu0
  %984 = vmatprep.mubr.f32.mxu0 0.0
  %985 = vmatmul.mubr.f32.gmra.mxu0 %v287
  %v986 = vpop.f32.mrf.mxu0
  %v987 = vadd.f32 0.0, %v986
  %v988 = vpop.f32.mrf.mxu0
  %989 = vmatprep.mubr.f32.mxu0 0.0
  %990 = vmatmul.mubr.f32.gmra.mxu0 %v290
  %v991 = vpop.f32.mrf.mxu0
  %v992 = vadd.f32 0.0, %v991
  %v993 = vpop.f32.mrf.mxu0
  %994 = vmatprep.mubr.f32.mxu0 0.0
  %995 = vmatmul.mubr.f32.gmra.mxu0 %v293
  %v996 = vpop.f32.mrf.mxu0
  %v997 = vadd.f32 0.0, %v996
  %v998 = vpop.f32.mrf.mxu0
  %999 = vmatprep.mubr.f32.mxu0 0.0
  %1000 = vmatmul.mubr.f32.gmra.mxu0 %v296
  %v1001 = vpop.f32.mrf.mxu0
  %v1002 = vadd.f32 0.0, %v1001
  %v1003 = vpop.f32.mrf.mxu0
  %1004 = vmatprep.mubr.f32.mxu0 0.0
  %1005 = vmatmul.mubr.f32.gmra.mxu0 %v299
  %v1006 = vpop.f32.mrf.mxu0
  %v1007 = vadd.f32 0.0, %v1006
  %v1008 = vpop.f32.mrf.mxu0
  %1009 = vmatprep.mubr.f32.mxu0 0.0
  %1010 = vmatmul.mubr.f32.gmra.mxu0 %v302
  %v1011 = vpop.f32.mrf.mxu0
  %v1012 = vadd.f32 0.0, %v1011
  %v1013 = vpop.f32.mrf.mxu0
  %1014 = vmatprep.mubr.f32.mxu0 0.0
  %1015 = vmatmul.mubr.f32.gmra.mxu0 %v305
  %v1016 = vpop.f32.mrf.mxu0
  %v1017 = vadd.f32 0.0, %v1016
  %v1018 = vpop.f32.mrf.mxu0
  %1019 = vmatprep.mubr.f32.mxu0 0.0
  %1020 = vmatmul.mubr.f32.gmra.mxu0 %v308
  %v1021 = vpop.f32.mrf.mxu0
  %v1022 = vadd.f32 0.0, %v1021
  %v1023 = vpop.f32.mrf.mxu0
  %1024 = vmatprep.mubr.f32.mxu0 0.0
  %1025 = vmatmul.mubr.f32.gmra.mxu0 %v311
  %v1026 = vpop.f32.mrf.mxu0
  %v1027 = vadd.f32 0.0, %v1026
  %v1028 = vpop.f32.mrf.mxu0
  %1029 = vmatprep.mubr.f32.mxu0 0.0
  %1030 = vmatmul.mubr.f32.gmra.mxu0 %v314
  %v1031 = vpop.f32.mrf.mxu0
  %v1032 = vadd.f32 0.0, %v1031
  %v1033 = vpop.f32.mrf.mxu0
  %1034 = vmatprep.mubr.f32.mxu0 0.0
  %1035 = vmatmul.mubr.f32.gmra.mxu0 %v317
  %v1036 = vpop.f32.mrf.mxu0
  %v1037 = vadd.f32 0.0, %v1036
  %v1038 = vpop.f32.mrf.mxu0
  %1039 = vmatprep.mubr.f32.mxu0 0.0
  %1040 = vmatmul.mubr.f32.gmra.mxu0 %v320
  %v1041 = vpop.f32.mrf.mxu0
  %v1042 = vadd.f32 0.0, %v1041
  %v1043 = vpop.f32.mrf.mxu0
  %1044 = vmatprep.mubr.f32.mxu0 0.0
  %1045 = vmatmul.mubr.f32.gmra.mxu0 %v323
  %v1046 = vpop.f32.mrf.mxu0
  %v1047 = vadd.f32 0.0, %v1046
  %v1048 = vpop.f32.mrf.mxu0
  %1049 = vmatprep.mubr.f32.mxu0 0.0
  %1050 = vmatmul.mubr.f32.gmra.mxu0 %v326
  %v1051 = vpop.f32.mrf.mxu0
  %v1052 = vadd.f32 0.0, %v1051
  %v1053 = vpop.f32.mrf.mxu0
  %1054 = vmatprep.mubr.f32.mxu0 0.0
  %1055 = vmatmul.mubr.f32.gmra.mxu0 %v329
  %v1056 = vpop.f32.mrf.mxu0
  %v1057 = vadd.f32 0.0, %v1056
  %v1058 = vpop.f32.mrf.mxu0
  %1059 = vmatprep.mubr.f32.mxu0 0.0
  %1060 = vmatmul.mubr.f32.gmra.mxu0 %v332
  %v1061 = vpop.f32.mrf.mxu0
  %v1062 = vadd.f32 0.0, %v1061
  %v1063 = vpop.f32.mrf.mxu0
  %1064 = vmatprep.mubr.f32.mxu0 0.0
  %1065 = vmatmul.mubr.f32.gmra.mxu0 %v335
  %v1066 = vpop.f32.mrf.mxu0
  %v1067 = vadd.f32 0.0, %v1066
  %v1068 = vpop.f32.mrf.mxu0
  %1069 = vmatprep.mubr.f32.mxu0 0.0
  %1070 = vmatmul.mubr.f32.gmra.mxu0 %v338
  %v1071 = vpop.f32.mrf.mxu0
  %v1072 = vadd.f32 0.0, %v1071
  %v1073 = vpop.f32.mrf.mxu0
  %1074 = vmatprep.mubr.f32.mxu0 0.0
  %1075 = vmatmul.mubr.f32.gmra.mxu0 %v341
  %v1076 = vpop.f32.mrf.mxu0
  %v1077 = vadd.f32 0.0, %v1076
  %v1078 = vpop.f32.mrf.mxu0
  %1079 = vmatprep.mubr.f32.mxu0 0.0
  %1080 = vmatmul.mubr.f32.gmra.mxu0 %v344
  %v1081 = vpop.f32.mrf.mxu0
  %v1082 = vadd.f32 0.0, %v1081
  %v1083 = vpop.f32.mrf.mxu0
  %1084 = vmatprep.mubr.f32.mxu0 0.0
  %1085 = vmatmul.mubr.f32.gmra.mxu0 %v347
  %v1086 = vpop.f32.mrf.mxu0
  %v1087 = vadd.f32 0.0, %v1086
  %v1088 = vpop.f32.mrf.mxu0
  %1089 = vmatprep.mubr.f32.mxu0 0.0
  %1090 = vmatmul.mubr.f32.gmra.mxu0 %v350
  %v1091 = vpop.f32.mrf.mxu0
  %v1092 = vadd.f32 0.0, %v1091
  %v1093 = vpop.f32.mrf.mxu0
  %1094 = vmatprep.mubr.f32.mxu0 0.0
  %1095 = vmatmul.mubr.f32.gmra.mxu0 %v353
  %v1096 = vpop.f32.mrf.mxu0
  %v1097 = vadd.f32 0.0, %v1096
  %v1098 = vpop.f32.mrf.mxu0
  %1099 = vmatprep.mubr.f32.mxu0 0.0
  %1100 = vmatmul.mubr.f32.gmra.mxu0 %v356
  %v1101 = vpop.f32.mrf.mxu0
  %v1102 = vadd.f32 0.0, %v1101
  %v1103 = vpop.f32.mrf.mxu0
  %1104 = vmatprep.mubr.f32.mxu0 0.0
  %1105 = vmatmul.mubr.f32.gmra.mxu0 %v359
  %v1106 = vpop.f32.mrf.mxu0
  %v1107 = vadd.f32 0.0, %v1106
  %v1108 = vpop.f32.mrf.mxu0
  %1109 = vmatprep.mubr.f32.mxu0 0.0
  %1110 = vmatmul.mubr.f32.gmra.mxu0 %v362
  %v1111 = vpop.f32.mrf.mxu0
  %v1112 = vadd.f32 0.0, %v1111
  %v1113 = vpop.f32.mrf.mxu0
  %1114 = vmatprep.mubr.f32.mxu0 0.0
  %1115 = vmatmul.mubr.f32.gmra.mxu0 %v365
  %v1116 = vpop.f32.mrf.mxu0
  %v1117 = vadd.f32 0.0, %v1116
  %v1118 = vpop.f32.mrf.mxu0
  %1119 = vmatprep.mubr.f32.mxu0 0.0
  %1120 = vmatmul.mubr.f32.gmra.mxu0 %v368
  %v1121 = vpop.f32.mrf.mxu0
  %v1122 = vadd.f32 0.0, %v1121
  %v1123 = vpop.f32.mrf.mxu0
  %1124 = vmatprep.mubr.f32.mxu0 0.0
  %1125 = vmatmul.mubr.f32.gmra.mxu0 %v371
  %v1126 = vpop.f32.mrf.mxu0
  %v1127 = vadd.f32 0.0, %v1126
  %v1128 = vpop.f32.mrf.mxu0
  %1129 = vmatprep.mubr.f32.mxu0 0.0
  %1130 = vmatmul.mubr.f32.gmra.mxu0 %v374
  %v1131 = vpop.f32.mrf.mxu0
  %v1132 = vadd.f32 0.0, %v1131
  %v1133 = vpop.f32.mrf.mxu0
  %1134 = vmatprep.mubr.f32.mxu0 0.0
  %1135 = vmatmul.mubr.f32.gmra.mxu0 %v377
  %v1136 = vpop.f32.mrf.mxu0
  %v1137 = vadd.f32 0.0, %v1136
  %v1138 = vpop.f32.mrf.mxu0
  %1139 = vmatprep.mubr.f32.mxu0 0.0
  %1140 = vmatmul.mubr.f32.gmra.mxu0 %v380
  %v1141 = vpop.f32.mrf.mxu0
  %v1142 = vadd.f32 0.0, %v1141
  %v1143 = vpop.f32.mrf.mxu0
  %1144 = vmatprep.mubr.f32.mxu0 0.0
  %1145 = vmatmul.mubr.f32.gmra.mxu0 %v383
  %v1146 = vpop.f32.mrf.mxu0
  %v1147 = vadd.f32 0.0, %v1146
  %v1148 = vpop.f32.mrf.mxu0
  %1149 = vmatprep.mubr.f32.mxu0 0.0
  %1150 = vmatmul.mubr.f32.gmra.mxu0 %v386
  %v1151 = vpop.f32.mrf.mxu0
  %v1152 = vadd.f32 0.0, %v1151
  %v1153 = vpop.f32.mrf.mxu0
  %1154 = vmatprep.mubr.f32.mxu0 0.0
  %1155 = vmatmul.mubr.f32.gmra.mxu0 %v389
  %v1156 = vpop.f32.mrf.mxu0
  %v1157 = vadd.f32 0.0, %v1156
  %v1158 = vpop.f32.mrf.mxu0
  %1159 = vmatprep.mubr.f32.mxu0 0.0
  %1160 = vmatmul.mubr.f32.gmra.mxu0 %v392
  %v1161 = vpop.f32.mrf.mxu0
  %v1162 = vadd.f32 0.0, %v1161
  %v1163 = vpop.f32.mrf.mxu0
  %1164 = vmatprep.mubr.f32.mxu0 0.0
  %1165 = vmatmul.mubr.f32.gmra.mxu0 %v395
  %v1166 = vpop.f32.mrf.mxu0
  %v1167 = vadd.f32 0.0, %v1166
  %v1168 = vpop.f32.mrf.mxu0
  %1169 = vmatprep.mubr.f32.mxu0 0.0
  %1170 = vmatmul.mubr.f32.gmra.mxu0 %v398
  %v1171 = vpop.f32.mrf.mxu0
  %v1172 = vadd.f32 0.0, %v1171
  %v1173 = vpop.f32.mrf.mxu0
  %1174 = vmatprep.mubr.f32.mxu0 0.0
  %1175 = vmatmul.mubr.f32.gmra.mxu0 %v401
  %v1176 = vpop.f32.mrf.mxu0
  %v1177 = vadd.f32 0.0, %v1176
  %v1178 = vpop.f32.mrf.mxu0
  %1179 = vmatprep.mubr.f32.mxu0 0.0
  %1180 = vmatmul.mubr.f32.gmra.mxu0 %v404
  %v1181 = vpop.f32.mrf.mxu0
  %v1182 = vadd.f32 0.0, %v1181
  %v1183 = vpop.f32.mrf.mxu0
  %1184 = vmatprep.mubr.f32.mxu0 0.0
  %1185 = vmatmul.mubr.f32.gmra.mxu0 %v407
  %v1186 = vpop.f32.mrf.mxu0
  %v1187 = vadd.f32 0.0, %v1186
  %v1188 = vpop.f32.mrf.mxu0
  %1189 = vmatprep.mubr.f32.mxu0 0.0
  %1190 = vmatmul.mubr.f32.gmra.mxu0 %v410
  %v1191 = vpop.f32.mrf.mxu0
  %v1192 = vadd.f32 0.0, %v1191
  %v1193 = vpop.f32.mrf.mxu0
  %1194 = vmatprep.mubr.f32.mxu0 0.0
  %1195 = vmatmul.mubr.f32.gmra.mxu0 %v413
  %v1196 = vpop.f32.mrf.mxu0
  %v1197 = vadd.f32 0.0, %v1196
  %v1198 = vpop.f32.mrf.mxu0
  %1199 = vmatprep.mubr.f32.mxu0 0.0
  %1200 = vmatmul.mubr.f32.gmra.mxu0 %v416
  %v1201 = vpop.f32.mrf.mxu0
  %v1202 = vadd.f32 0.0, %v1201
  %v1203 = vpop.f32.mrf.mxu0
  %1204 = vmatprep.mubr.f32.mxu0 0.0
  %1205 = vmatmul.mubr.f32.gmra.mxu0 %v419
  %v1206 = vpop.f32.mrf.mxu0
  %v1207 = vadd.f32 0.0, %v1206
  %v1208 = vpop.f32.mrf.mxu0
  %1209 = vmatprep.mubr.f32.mxu0 0.0
  %1210 = vmatmul.mubr.f32.gmra.mxu0 %v422
  %v1211 = vpop.f32.mrf.mxu0
  %v1212 = vadd.f32 0.0, %v1211
  %v1213 = vpop.f32.mrf.mxu0
  %1214 = vmatprep.mubr.f32.mxu0 0.0
  %1215 = vmatmul.mubr.f32.gmra.mxu0 %v425
  %v1216 = vpop.f32.mrf.mxu0
  %v1217 = vadd.f32 0.0, %v1216
  %v1218 = vpop.f32.mrf.mxu0
  %1219 = vmatprep.mubr.f32.mxu0 0.0
  %1220 = vmatmul.mubr.f32.gmra.mxu0 %v428
  %v1221 = vpop.f32.mrf.mxu0
  %v1222 = vadd.f32 0.0, %v1221
  %v1223 = vpop.f32.mrf.mxu0
  %1224 = vmatprep.mubr.f32.mxu0 0.0
  %1225 = vmatmul.mubr.f32.gmra.mxu0 %v431
  %v1226 = vpop.f32.mrf.mxu0
  %v1227 = vadd.f32 0.0, %v1226
  %v1228 = vpop.f32.mrf.mxu0
  %1229 = vmatprep.mubr.f32.mxu0 0.0
  %1230 = vmatmul.mubr.f32.gmra.mxu0 %v434
  %v1231 = vpop.f32.mrf.mxu0
  %v1232 = vadd.f32 0.0, %v1231
  %v1233 = vpop.f32.mrf.mxu0
  %1234 = vmatprep.mubr.f32.mxu0 0.0
  %1235 = vmatmul.mubr.f32.gmra.mxu0 %v437
  %v1236 = vpop.f32.mrf.mxu0
  %v1237 = vadd.f32 0.0, %v1236
  %v1238 = vpop.f32.mrf.mxu0
  %1239 = vmatprep.mubr.f32.mxu0 0.0
  %1240 = vmatmul.mubr.f32.gmra.mxu0 %v440
  %v1241 = vpop.f32.mrf.mxu0
  %v1242 = vadd.f32 0.0, %v1241
  %v1243 = vpop.f32.mrf.mxu0
  %1244 = vmatprep.mubr.f32.mxu0 0.0
  %1245 = vmatmul.mubr.f32.gmra.mxu0 %v443
  %v1246 = vpop.f32.mrf.mxu0
  %v1247 = vadd.f32 0.0, %v1246
  %v1248 = vpop.f32.mrf.mxu0
  %1249 = vmatprep.mubr.f32.mxu0 0.0
  %1250 = vmatmul.mubr.f32.gmra.mxu0 %v446
  %v1251 = vpop.f32.mrf.mxu0
  %v1252 = vadd.f32 0.0, %v1251
  %v1253 = vpop.f32.mrf.mxu0
  %1254 = vmatprep.mubr.f32.mxu0 0.0
  %1255 = vmatmul.mubr.f32.gmra.mxu0 %v449
  %v1256 = vpop.f32.mrf.mxu0
  %v1257 = vadd.f32 0.0, %v1256
  %v1258 = vpop.f32.mrf.mxu0
  %1259 = vmatprep.mubr.f32.mxu0 0.0
  %1260 = vmatmul.mubr.f32.gmra.mxu0 %v452
  %v1261 = vpop.f32.mrf.mxu0
  %v1262 = vadd.f32 0.0, %v1261
  %v1263 = vpop.f32.mrf.mxu0
  %1264 = vmatprep.mubr.f32.mxu0 0.0
  %1265 = vmatmul.mubr.f32.gmra.mxu0 %v455
  %v1266 = vpop.f32.mrf.mxu0
  %v1267 = vadd.f32 0.0, %v1266
  %v1268 = vpop.f32.mrf.mxu0
  %1269 = vmatprep.mubr.f32.mxu0 0.0
  %1270 = vmatmul.mubr.f32.gmra.mxu0 %v458
  %v1271 = vpop.f32.mrf.mxu0
  %v1272 = vadd.f32 0.0, %v1271
  %v1273 = vpop.f32.mrf.mxu0
  %1274 = vmatprep.mubr.f32.mxu0 0.0
  %1275 = vmatmul.mubr.f32.gmra.mxu0 %v461
  %v1276 = vpop.f32.mrf.mxu0
  %v1277 = vadd.f32 0.0, %v1276
  %v1278 = vpop.f32.mrf.mxu0
  %1279 = vmatprep.mubr.f32.mxu0 0.0
  %1280 = vmatmul.mubr.f32.gmra.mxu0 %v464
  %v1281 = vpop.f32.mrf.mxu0
  %v1282 = vadd.f32 0.0, %v1281
  %v1283 = vpop.f32.mrf.mxu0
  %1284 = vmatprep.mubr.f32.mxu0 0.0
  %1285 = vmatmul.mubr.f32.gmra.mxu0 %v467
  %v1286 = vpop.f32.mrf.mxu0
  %v1287 = vadd.f32 0.0, %v1286
  %v1288 = vpop.f32.mrf.mxu0
  %1289 = vmatprep.mubr.f32.mxu0 0.0
  %1290 = vmatmul.mubr.f32.gmra.mxu0 %v470
  %v1291 = vpop.f32.mrf.mxu0
  %v1292 = vadd.f32 0.0, %v1291
  %v1293 = vpop.f32.mrf.mxu0
  %1294 = vmatprep.mubr.f32.mxu0 0.0
  %1295 = vmatmul.mubr.f32.gmra.mxu0 %v473
  %v1296 = vpop.f32.mrf.mxu0
  %v1297 = vadd.f32 0.0, %v1296
  %v1298 = vpop.f32.mrf.mxu0
  %1299 = vmatprep.mubr.f32.mxu0 0.0
  %1300 = vmatmul.mubr.f32.gmra.mxu0 %v476
  %v1301 = vpop.f32.mrf.mxu0
  %v1302 = vadd.f32 0.0, %v1301
  %v1303 = vpop.f32.mrf.mxu0
  %1304 = vmatprep.mubr.f32.mxu0 0.0
  %1305 = vmatmul.mubr.f32.gmra.mxu0 %v479
  %v1306 = vpop.f32.mrf.mxu0
  %v1307 = vadd.f32 0.0, %v1306
  %v1308 = vpop.f32.mrf.mxu0
  %1309 = vmatprep.mubr.f32.mxu0 0.0
  %1310 = vmatmul.mubr.f32.gmra.mxu0 %v482
  %v1311 = vpop.f32.mrf.mxu0
  %v1312 = vadd.f32 0.0, %v1311
  %v1313 = vpop.f32.mrf.mxu0
  %1314 = vmatprep.mubr.f32.mxu0 0.0
  %1315 = vmatmul.mubr.f32.gmra.mxu0 %v485
  %v1316 = vpop.f32.mrf.mxu0
  %v1317 = vadd.f32 0.0, %v1316
  %v1318 = vpop.f32.mrf.mxu0
  %1319 = vmatprep.mubr.f32.mxu0 0.0
  %1320 = vmatmul.mubr.f32.gmra.mxu0 %v488
  %v1321 = vpop.f32.mrf.mxu0
  %v1322 = vadd.f32 0.0, %v1321
  %v1323 = vpop.f32.mrf.mxu0
  %1324 = vmatprep.mubr.f32.mxu0 0.0
  %1325 = vmatmul.mubr.f32.gmra.mxu0 %v491
  %v1326 = vpop.f32.mrf.mxu0
  %v1327 = vadd.f32 0.0, %v1326
  %v1328 = vpop.f32.mrf.mxu0
  %1329 = vmatprep.mubr.f32.mxu0 0.0
  %1330 = vmatmul.mubr.f32.gmra.mxu0 %v494
  %v1331 = vpop.f32.mrf.mxu0
  %v1332 = vadd.f32 0.0, %v1331
  %v1333 = vpop.f32.mrf.mxu0
  %1334 = vmatprep.mubr.f32.mxu0 0.0
  %1335 = vmatmul.mubr.f32.gmra.mxu0 %v497
  %v1336 = vpop.f32.mrf.mxu0
  %v1337 = vadd.f32 0.0, %v1336
  %v1338 = vpop.f32.mrf.mxu0
  %1339 = vmatprep.mubr.f32.mxu0 0.0
  %1340 = vmatmul.mubr.f32.gmra.mxu0 %v500
  %v1341 = vpop.f32.mrf.mxu0
  %v1342 = vadd.f32 0.0, %v1341
  %v1343 = vpop.f32.mrf.mxu0
  %1344 = vmatprep.mubr.f32.mxu0 0.0
  %1345 = vmatmul.mubr.f32.gmra.mxu0 %v503
  %v1346 = vpop.f32.mrf.mxu0
  %v1347 = vadd.f32 0.0, %v1346
  %v1348 = vpop.f32.mrf.mxu0
  %1349 = vmatprep.mubr.f32.mxu0 0.0
  %1350 = vmatmul.mubr.f32.gmra.mxu0 %v506
  %v1351 = vpop.f32.mrf.mxu0
  %v1352 = vadd.f32 0.0, %v1351
  %v1353 = vpop.f32.mrf.mxu0
  %1354 = vmatprep.mubr.f32.mxu0 0.0
  %1355 = vmatmul.mubr.f32.gmra.mxu0 %v509
  %v1356 = vpop.f32.mrf.mxu0
  %v1357 = vadd.f32 0.0, %v1356
  %v1358 = vpop.f32.mrf.mxu0
  %1359 = vmatprep.mubr.f32.mxu0 0.0
  %1360 = vmatmul.mubr.f32.gmra.mxu0 %v512
  %v1361 = vpop.f32.mrf.mxu0
  %v1362 = vadd.f32 0.0, %v1361
  %v1363 = vpop.f32.mrf.mxu0
  %1364 = vmatprep.mubr.f32.mxu0 0.0
  %1365 = vmatmul.mubr.f32.gmra.mxu0 %v515
  %v1366 = vpop.f32.mrf.mxu0
  %v1367 = vadd.f32 0.0, %v1366
  %v1368 = vpop.f32.mrf.mxu0
  %1369 = vmatprep.mubr.f32.mxu0 0.0
  %1370 = vmatmul.mubr.f32.gmra.mxu0 %v518
  %v1371 = vpop.f32.mrf.mxu0
  %v1372 = vadd.f32 0.0, %v1371
  %v1373 = vpop.f32.mrf.mxu0
  %1374 = vmatprep.mubr.f32.mxu0 0.0
  %1375 = vmatmul.mubr.f32.gmra.mxu0 %v521
  %v1376 = vpop.f32.mrf.mxu0
  %v1377 = vadd.f32 0.0, %v1376
  %v1378 = vpop.f32.mrf.mxu0
  %1379 = vmatprep.mubr.f32.mxu0 0.0
  %1380 = vmatmul.mubr.f32.gmra.mxu0 %v524
  %v1381 = vpop.f32.mrf.mxu0
  %v1382 = vadd.f32 0.0, %v1381
  %v1383 = vpop.f32.mrf.mxu0
  %1384 = vmatprep.mubr.f32.mxu0 0.0
  %1385 = vmatmul.mubr.f32.gmra.mxu0 %v527
  %v1386 = vpop.f32.mrf.mxu0
  %v1387 = vadd.f32 0.0, %v1386
  %v1388 = vpop.f32.mrf.mxu0
  %1389 = vmatprep.mubr.f32.mxu0 0.0
  %1390 = vmatmul.mubr.f32.gmra.mxu0 %v530
  %v1391 = vpop.f32.mrf.mxu0
  %v1392 = vadd.f32 0.0, %v1391
  %v1393 = vpop.f32.mrf.mxu0
  %1394 = vmatprep.mubr.f32.mxu0 0.0
  %1395 = vmatmul.mubr.f32.gmra.mxu0 %v533
  %v1396 = vpop.f32.mrf.mxu0
  %v1397 = vadd.f32 0.0, %v1396
  %v1398 = vpop.f32.mrf.mxu0
  %1399 = vmatprep.mubr.f32.mxu0 0.0
  %1400 = vmatmul.mubr.f32.gmra.mxu0 %v536
  %v1401 = vpop.f32.mrf.mxu0
  %v1402 = vadd.f32 0.0, %v1401
  %v1403 = vpop.f32.mrf.mxu0
  %1404 = vmatprep.mubr.f32.mxu0 0.0
  %1405 = vmatmul.mubr.f32.gmra.mxu0 %v539
  %v1406 = vpop.f32.mrf.mxu0
  %v1407 = vadd.f32 0.0, %v1406
  %v1408 = vpop.f32.mrf.mxu0
  %1409 = vmatprep.mubr.f32.mxu0 0.0
  %1410 = vmatmul.mubr.f32.gmra.mxu0 %v542
  %v1411 = vpop.f32.mrf.mxu0
  %v1412 = vadd.f32 0.0, %v1411
  %v1413 = vpop.f32.mrf.mxu0
  %1414 = vmatprep.mubr.f32.mxu0 0.0
  %1415 = vmatmul.mubr.f32.gmra.mxu0 %v545
  %v1416 = vpop.f32.mrf.mxu0
  %v1417 = vadd.f32 0.0, %v1416
  %v1418 = vpop.f32.mrf.mxu0
  %1419 = vmatprep.mubr.f32.mxu0 0.0
  %1420 = vmatmul.mubr.f32.gmra.mxu0 %v548
  %v1421 = vpop.f32.mrf.mxu0
  %v1422 = vadd.f32 0.0, %v1421
  %v1423 = vpop.f32.mrf.mxu0
  %1424 = vmatprep.mubr.f32.mxu0 0.0
  %1425 = vmatmul.mubr.f32.gmra.mxu0 %v551
  %v1426 = vpop.f32.mrf.mxu0
  %v1427 = vadd.f32 0.0, %v1426
  %v1428 = vpop.f32.mrf.mxu0
  %1429 = vmatprep.mubr.f32.mxu0 0.0
  %1430 = vmatmul.mubr.f32.gmra.mxu0 %v554
  %v1431 = vpop.f32.mrf.mxu0
  %v1432 = vadd.f32 0.0, %v1431
  %v1433 = vpop.f32.mrf.mxu0
  %1434 = vmatprep.mubr.f32.mxu0 0.0
  %1435 = vmatmul.mubr.f32.gmra.mxu0 %v557
  %v1436 = vpop.f32.mrf.mxu0
  %v1437 = vadd.f32 0.0, %v1436
  %v1438 = vpop.f32.mrf.mxu0
  %1439 = vmatprep.mubr.f32.mxu0 0.0
  %1440 = vmatmul.mubr.f32.gmra.mxu0 %v560
  %v1441 = vpop.f32.mrf.mxu0
  %v1442 = vadd.f32 0.0, %v1441
  %v1443 = vpop.f32.mrf.mxu0
  %1444 = vmatprep.mubr.f32.mxu0 0.0
  %1445 = vmatmul.mubr.f32.gmra.mxu0 %v563
  %v1446 = vpop.f32.mrf.mxu0
  %v1447 = vadd.f32 0.0, %v1446
  %v1448 = vpop.f32.mrf.mxu0
  %1449 = vmatprep.mubr.f32.mxu0 0.0
  %1450 = vmatmul.mubr.f32.gmra.mxu0 %v566
  %v1451 = vpop.f32.mrf.mxu0
  %v1452 = vadd.f32 0.0, %v1451
  %v1453 = vpop.f32.mrf.mxu0
  %1454 = vmatprep.mubr.f32.mxu0 0.0
  %1455 = vmatmul.mubr.f32.gmra.mxu0 %v569
  %v1456 = vpop.f32.mrf.mxu0
  %v1457 = vadd.f32 0.0, %v1456
  %v1458 = vpop.f32.mrf.mxu0
  %1459 = vmatprep.mubr.f32.mxu0 0.0
  %1460 = vmatmul.mubr.f32.gmra.mxu0 %v572
  %v1461 = vpop.f32.mrf.mxu0
  %v1462 = vadd.f32 0.0, %v1461
  %v1463 = vpop.f32.mrf.mxu0
  %1464 = vmatprep.mubr.f32.mxu0 0.0
  %1465 = vmatmul.mubr.f32.gmra.mxu0 %v575
  %v1466 = vpop.f32.mrf.mxu0
  %v1467 = vadd.f32 0.0, %v1466
  %v1468 = vpop.f32.mrf.mxu0
  %1469 = vmatprep.mubr.f32.mxu0 0.0
  %1470 = vmatmul.mubr.f32.gmra.mxu0 %v578
  %v1471 = vpop.f32.mrf.mxu0
  %v1472 = vadd.f32 0.0, %v1471
  %v1473 = vpop.f32.mrf.mxu0
  %1474 = vmatprep.mubr.f32.mxu0 0.0
  %1475 = vmatmul.mubr.f32.gmra.mxu0 %v581
  %v1476 = vpop.f32.mrf.mxu0
  %v1477 = vadd.f32 0.0, %v1476
  %v1478 = vpop.f32.mrf.mxu0
  %1479 = vmatprep.mubr.f32.mxu0 0.0
  %1480 = vmatmul.mubr.f32.gmra.mxu0 %v584
  %v1481 = vpop.f32.mrf.mxu0
  %v1482 = vadd.f32 0.0, %v1481
  %v1483 = vpop.f32.mrf.mxu0
  %1484 = vmatprep.mubr.f32.mxu0 0.0
  %1485 = vmatmul.mubr.f32.gmra.mxu0 %v587
  %v1486 = vpop.f32.mrf.mxu0
  %v1487 = vadd.f32 0.0, %v1486
  %v1488 = vpop.f32.mrf.mxu0
  %1489 = vmatprep.mubr.f32.mxu0 0.0
  %1490 = vmatmul.mubr.f32.gmra.mxu0 %v590
  %v1491 = vpop.f32.mrf.mxu0
  %v1492 = vadd.f32 0.0, %v1491
  %v1493 = vpop.f32.mrf.mxu0
  %1494 = vmatprep.mubr.f32.mxu0 0.0
  %1495 = vmatmul.mubr.f32.gmra.mxu0 %v593
  %v1496 = vpop.f32.mrf.mxu0
  %v1497 = vadd.f32 0.0, %v1496
  %v1498 = vpop.f32.mrf.mxu0
  %1499 = vmatprep.mubr.f32.mxu0 0.0
  %1500 = vmatmul.mubr.f32.gmra.mxu0 %v596
  %v1501 = vpop.f32.mrf.mxu0
  %v1502 = vadd.f32 0.0, %v1501
  %v1503 = vpop.f32.mrf.mxu0
  %1504 = vmatprep.mubr.f32.mxu0 0.0
  %1505 = vmatmul.mubr.f32.gmra.mxu0 %v599
  %v1506 = vpop.f32.mrf.mxu0
  %v1507 = vadd.f32 0.0, %v1506
  %v1508 = vpop.f32.mrf.mxu0
  %1509 = vmatprep.mubr.f32.mxu0 0.0
  %1510 = vmatmul.mubr.f32.gmra.mxu0 %v602
  %v1511 = vpop.f32.mrf.mxu0
  %v1512 = vadd.f32 0.0, %v1511
  %v1513 = vpop.f32.mrf.mxu0
  %1514 = vmatprep.mubr.f32.mxu0 0.0
  %1515 = vmatmul.mubr.f32.gmra.mxu0 %v605
  %v1516 = vpop.f32.mrf.mxu0
  %v1517 = vadd.f32 0.0, %v1516
  %v1518 = vpop.f32.mrf.mxu0
  %1519 = vmatprep.mubr.f32.mxu0 0.0
  %1520 = vmatmul.mubr.f32.gmra.mxu0 %v608
  %v1521 = vpop.f32.mrf.mxu0
  %v1522 = vadd.f32 0.0, %v1521
  %v1523 = vpop.f32.mrf.mxu0
  %1524 = vmatprep.mubr.f32.mxu0 0.0
  %1525 = vmatmul.mubr.f32.gmra.mxu0 %v611
  %v1526 = vpop.f32.mrf.mxu0
  %v1527 = vadd.f32 0.0, %v1526
  %v1528 = vpop.f32.mrf.mxu0
  %1529 = vmatprep.mubr.f32.mxu0 0.0
  %1530 = vmatmul.mubr.f32.gmra.mxu0 %v614
  %v1531 = vpop.f32.mrf.mxu0
  %v1532 = vadd.f32 0.0, %v1531
  %v1533 = vpop.f32.mrf.mxu0
  %1534 = vmatprep.mubr.f32.mxu0 0.0
  %1535 = vmatmul.mubr.f32.gmra.mxu0 %v617
  %v1536 = vpop.f32.mrf.mxu0
  %v1537 = vadd.f32 0.0, %v1536
  %v1538 = vpop.f32.mrf.mxu0
  %1539 = vmatprep.mubr.f32.mxu0 0.0
  %1540 = vmatmul.mubr.f32.gmra.mxu0 %v620
  %v1541 = vpop.f32.mrf.mxu0
  %v1542 = vadd.f32 0.0, %v1541
  %v1543 = vpop.f32.mrf.mxu0
  %1544 = vmatprep.mubr.f32.mxu0 0.0
  %1545 = vmatmul.mubr.f32.gmra.mxu0 %v623
  %v1546 = vpop.f32.mrf.mxu0
  %v1547 = vadd.f32 0.0, %v1546
  %v1548 = vpop.f32.mrf.mxu0
  %1549 = vmatprep.mubr.f32.mxu0 0.0
  %1550 = vmatmul.mubr.f32.gmra.mxu0 %v626
  %v1551 = vpop.f32.mrf.mxu0
  %v1552 = vadd.f32 0.0, %v1551
  %v1553 = vpop.f32.mrf.mxu0
  %1554 = vmatprep.mubr.f32.mxu0 0.0
  %1555 = vmatmul.mubr.f32.gmra.mxu0 %v629
  %v1556 = vpop.f32.mrf.mxu0
  %v1557 = vadd.f32 0.0, %v1556
  %v1558 = vpop.f32.mrf.mxu0
  %1559 = vmatprep.mubr.f32.mxu0 0.0
  %1560 = vmatmul.mubr.f32.gmra.mxu0 %v632
  %v1561 = vpop.f32.mrf.mxu0
  %v1562 = vadd.f32 0.0, %v1561
  %v1563 = vpop.f32.mrf.mxu0
  %1564 = vmatprep.mubr.f32.mxu0 0.0
  %1565 = vmatmul.mubr.f32.gmra.mxu0 %v635
  %v1566 = vpop.f32.mrf.mxu0
  %v1567 = vadd.f32 0.0, %v1566
  %v1568 = vpop.f32.mrf.mxu0
  %1569 = vmatprep.mubr.f32.mxu0 0.0
  %1570 = vmatmul.mubr.f32.gmra.mxu0 %v638
  %v1571 = vpop.f32.mrf.mxu0
  %v1572 = vadd.f32 0.0, %v1571
  %v1573 = vpop.f32.mrf.mxu0
  %1574 = vmatprep.mubr.f32.mxu0 0.0
  %1575 = vmatmul.mubr.f32.gmra.mxu0 %v641
  %v1576 = vpop.f32.mrf.mxu0
  %v1577 = vadd.f32 0.0, %v1576
  %v1578 = vpop.f32.mrf.mxu0
  %1579 = vmatprep.mubr.f32.mxu0 0.0
  %1580 = vmatmul.mubr.f32.gmra.mxu0 %v644
  %v1581 = vpop.f32.mrf.mxu0
  %v1582 = vadd.f32 0.0, %v1581
  %v1583 = vpop.f32.mrf.mxu0
  %1584 = vmatprep.mubr.f32.mxu0 0.0
  %1585 = vmatmul.mubr.f32.gmra.mxu0 %v647
  %v1586 = vpop.f32.mrf.mxu0
  %v1587 = vadd.f32 0.0, %v1586
  %v1588 = vpop.f32.mrf.mxu0
  %1589 = vmatprep.mubr.f32.mxu0 0.0
  %1590 = vmatmul.mubr.f32.gmra.mxu0 %v650
  %v1591 = vpop.f32.mrf.mxu0
  %v1592 = vadd.f32 0.0, %v1591
  %v1593 = vpop.f32.mrf.mxu0
  %1594 = vmatprep.mubr.f32.mxu0 0.0
  %1595 = vmatmul.mubr.f32.gmra.mxu0 %v653
  %v1596 = vpop.f32.mrf.mxu0
  %v1597 = vadd.f32 0.0, %v1596
  %v1598 = vpop.f32.mrf.mxu0
  %1599 = vmatprep.mubr.f32.mxu0 0.0
  %1600 = vmatmul.mubr.f32.gmra.mxu0 %v656
  %v1601 = vpop.f32.mrf.mxu0
  %v1602 = vadd.f32 0.0, %v1601
  %v1603 = vpop.f32.mrf.mxu0
  %1604 = vmatprep.mubr.f32.mxu0 0.0
  %1605 = vmatmul.mubr.f32.gmra.mxu0 %v659
  %v1606 = vpop.f32.mrf.mxu0
  %v1607 = vadd.f32 0.0, %v1606
  %v1608 = vpop.f32.mrf.mxu0
  %1609 = vmatprep.mubr.f32.mxu0 0.0
  %1610 = vmatmul.mubr.f32.gmra.mxu0 %v662
  %v1611 = vpop.f32.mrf.mxu0
  %v1612 = vadd.f32 0.0, %v1611
  %v1613 = vpop.f32.mrf.mxu0
  %1614 = vmatprep.mubr.f32.mxu0 0.0
  %1615 = vmatmul.mubr.f32.gmra.mxu0 %v665
  %v1616 = vpop.f32.mrf.mxu0
  %v1617 = vadd.f32 0.0, %v1616
  %v1618 = vpop.f32.mrf.mxu0
  %1619 = vmatprep.mubr.f32.mxu0 0.0
  %1620 = vmatmul.mubr.f32.gmra.mxu0 %v668
  %v1621 = vpop.f32.mrf.mxu0
  %v1622 = vadd.f32 0.0, %v1621
  %v1623 = vpop.f32.mrf.mxu0
  %1624 = vmatprep.mubr.f32.mxu0 0.0
  %1625 = vmatmul.mubr.f32.gmra.mxu0 %v671
  %v1626 = vpop.f32.mrf.mxu0
  %v1627 = vadd.f32 0.0, %v1626
  %v1628 = vpop.f32.mrf.mxu0
  %1629 = vmatprep.mubr.f32.mxu0 0.0
  %1630 = vmatmul.mubr.f32.gmra.mxu0 %v674
  %v1631 = vpop.f32.mrf.mxu0
  %v1632 = vadd.f32 0.0, %v1631
  %v1633 = vpop.f32.mrf.mxu0
  %1634 = vmatprep.mubr.f32.mxu0 0.0
  %1635 = vmatmul.mubr.f32.gmra.mxu0 %v677
  %v1636 = vpop.f32.mrf.mxu0
  %v1637 = vadd.f32 0.0, %v1636
  %v1638 = vpop.f32.mrf.mxu0
  %1639 = vmatprep.mubr.f32.mxu0 0.0
  %1640 = vmatmul.mubr.f32.gmra.mxu0 %v680
  %v1641 = vpop.f32.mrf.mxu0
  %v1642 = vadd.f32 0.0, %v1641
  %v1643 = vpop.f32.mrf.mxu0
  %1644 = vmatprep.mubr.f32.mxu0 0.0
  %1645 = vmatmul.mubr.f32.gmra.mxu0 %v683
  %v1646 = vpop.f32.mrf.mxu0
  %v1647 = vadd.f32 0.0, %v1646
  %v1648 = vpop.f32.mrf.mxu0
  %1649 = vmatprep.mubr.f32.mxu0 0.0
  %1650 = vmatmul.mubr.f32.gmra.mxu0 %v686
  %v1651 = vpop.f32.mrf.mxu0
  %v1652 = vadd.f32 0.0, %v1651
  %v1653 = vpop.f32.mrf.mxu0
  %1654 = vmatprep.mubr.f32.mxu0 0.0
  %1655 = vmatmul.mubr.f32.gmra.mxu0 %v689
  %v1656 = vpop.f32.mrf.mxu0
  %v1657 = vadd.f32 0.0, %v1656
  %v1658 = vpop.f32.mrf.mxu0
  %1659 = vmatprep.mubr.f32.mxu0 0.0
  %1660 = vmatmul.mubr.f32.gmra.mxu0 %v692
  %v1661 = vpop.f32.mrf.mxu0
  %v1662 = vadd.f32 0.0, %v1661
  %v1663 = vpop.f32.mrf.mxu0
  %1664 = vmatprep.mubr.f32.mxu0 0.0
  %1665 = vmatmul.mubr.f32.gmra.mxu0 %v695
  %v1666 = vpop.f32.mrf.mxu0
  %v1667 = vadd.f32 0.0, %v1666
  %v1668 = vpop.f32.mrf.mxu0
  %1669 = vmatprep.mubr.f32.mxu0 0.0
  %1670 = vmatmul.mubr.f32.gmra.mxu0 %v698
  %v1671 = vpop.f32.mrf.mxu0
  %v1672 = vadd.f32 0.0, %v1671
  %v1673 = vpop.f32.mrf.mxu0
  %1674 = vmatprep.mubr.f32.mxu0 0.0
  %1675 = vmatmul.mubr.f32.gmra.mxu0 %v701
  %v1676 = vpop.f32.mrf.mxu0
  %v1677 = vadd.f32 0.0, %v1676
  %v1678 = vpop.f32.mrf.mxu0
  %1679 = vmatprep.mubr.f32.mxu0 0.0
  %1680 = vmatmul.mubr.f32.gmra.mxu0 %v704
  %v1681 = vpop.f32.mrf.mxu0
  %v1682 = vadd.f32 0.0, %v1681
  %v1683 = vpop.f32.mrf.mxu0
  %1684 = vmatprep.mubr.f32.mxu0 0.0
  %1685 = vmatmul.mubr.f32.gmra.mxu0 %v707
  %v1686 = vpop.f32.mrf.mxu0
  %v1687 = vadd.f32 0.0, %v1686
  %v1688 = vpop.f32.mrf.mxu0
  %1689 = vmatprep.mubr.f32.mxu0 0.0
  %1690 = vmatmul.mubr.f32.gmra.mxu0 %v710
  %v1691 = vpop.f32.mrf.mxu0
  %v1692 = vadd.f32 0.0, %v1691
  %v1693 = vpop.f32.mrf.mxu0
  %1694 = vmatprep.mubr.f32.mxu0 0.0
  %1695 = vmatmul.mubr.f32.gmra.mxu0 %v713
  %v1696 = vpop.f32.mrf.mxu0
  %v1697 = vadd.f32 0.0, %v1696
  %v1698 = vpop.f32.mrf.mxu0
  %1699 = vmatprep.mubr.f32.mxu0 0.0
  %1700 = vmatmul.mubr.f32.gmra.mxu0 %v716
  %v1701 = vpop.f32.mrf.mxu0
  %v1702 = vadd.f32 0.0, %v1701
  %v1703 = vpop.f32.mrf.mxu0
  %1704 = vmatprep.mubr.f32.mxu0 0.0
  %1705 = vmatmul.mubr.f32.gmra.mxu0 %v719
  %v1706 = vpop.f32.mrf.mxu0
  %v1707 = vadd.f32 0.0, %v1706
  %v1708 = vpop.f32.mrf.mxu0
  %1709 = vmatprep.mubr.f32.mxu0 0.0
  %1710 = vmatmul.mubr.f32.gmra.mxu0 %v722
  %v1711 = vpop.f32.mrf.mxu0
  %v1712 = vadd.f32 0.0, %v1711
  %v1713 = vpop.f32.mrf.mxu0
  %1714 = vmatprep.mubr.f32.mxu0 0.0
  %1715 = vmatmul.mubr.f32.gmra.mxu0 %v725
  %v1716 = vpop.f32.mrf.mxu0
  %v1717 = vadd.f32 0.0, %v1716
  %v1718 = vpop.f32.mrf.mxu0
  %1719 = vmatprep.mubr.f32.mxu0 0.0
  %1720 = vmatmul.mubr.f32.gmra.mxu0 %v728
  %v1721 = vpop.f32.mrf.mxu0
  %v1722 = vadd.f32 0.0, %v1721
  %v1723 = vpop.f32.mrf.mxu0
  %1724 = vmatprep.mubr.f32.mxu0 0.0
  %1725 = vmatmul.mubr.f32.gmra.mxu0 %v731
  %v1726 = vpop.f32.mrf.mxu0
  %v1727 = vadd.f32 0.0, %v1726
  %v1728 = vpop.f32.mrf.mxu0
  %1729 = vmatprep.mubr.f32.mxu0 0.0
  %1730 = vmatmul.mubr.f32.gmra.mxu0 %v734
  %v1731 = vpop.f32.mrf.mxu0
  %v1732 = vadd.f32 0.0, %v1731
  %v1733 = vpop.f32.mrf.mxu0
  %1734 = vmatprep.mubr.f32.mxu0 0.0
  %1735 = vmatmul.mubr.f32.gmra.mxu0 %v737
  %v1736 = vpop.f32.mrf.mxu0
  %v1737 = vadd.f32 0.0, %v1736
  %v1738 = vpop.f32.mrf.mxu0
  %1739 = vmatprep.mubr.f32.mxu0 0.0
  %1740 = vmatmul.mubr.f32.gmra.mxu0 %v740
  %v1741 = vpop.f32.mrf.mxu0
  %v1742 = vadd.f32 0.0, %v1741
  %v1743 = vpop.f32.mrf.mxu0
  %1744 = vmatprep.mubr.f32.mxu0 0.0
  %1745 = vmatmul.mubr.f32.gmra.mxu0 %v743
  %v1746 = vpop.f32.mrf.mxu0
  %v1747 = vadd.f32 0.0, %v1746
  %v1748 = vpop.f32.mrf.mxu0
  %1749 = vmatprep.mubr.f32.mxu0 0.0
  %1750 = vmatmul.mubr.f32.gmra.mxu0 %v746
  %v1751 = vpop.f32.mrf.mxu0
  %v1752 = vadd.f32 0.0, %v1751
  %v1753 = vpop.f32.mrf.mxu0
  %1754 = vmatprep.mubr.f32.mxu0 0.0
  %1755 = vmatmul.mubr.f32.gmra.mxu0 %v749
  %v1756 = vpop.f32.mrf.mxu0
  %v1757 = vadd.f32 0.0, %v1756
  %v1758 = vpop.f32.mrf.mxu0
  %1759 = vmatprep.mubr.f32.mxu0 0.0
  %1760 = vmatmul.mubr.f32.gmra.mxu0 %v752
  %v1761 = vpop.f32.mrf.mxu0
  %v1762 = vadd.f32 0.0, %v1761
  %v1763 = vpop.f32.mrf.mxu0
  %1764 = vmatprep.mubr.f32.mxu0 0.0
  %1765 = vmatmul.mubr.f32.gmra.mxu0 %v755
  %v1766 = vpop.f32.mrf.mxu0
  %v1767 = vadd.f32 0.0, %v1766
  %v1768 = vpop.f32.mrf.mxu0
  %1769 = vmatprep.mubr.f32.mxu0 0.0
  %1770 = vmatmul.mubr.f32.gmra.mxu0 %v758
  %v1771 = vpop.f32.mrf.mxu0
  %v1772 = vadd.f32 0.0, %v1771
  %v1773 = vpop.f32.mrf.mxu0
  %1774 = vmatprep.mubr.f32.mxu0 0.0
  %1775 = vmatmul.mubr.f32.gmra.mxu0 %v761
  %v1776 = vpop.f32.mrf.mxu0
  %v1777 = vadd.f32 0.0, %v1776
  %v1778 = vpop.f32.mrf.mxu0
  %1779 = vmatprep.mubr.f32.mxu0 0.0
  %1780 = vmatmul.mubr.f32.gmra.mxu0 %v764
  %v1781 = vpop.f32.mrf.mxu0
  %v1782 = vadd.f32 0.0, %v1781
  %v1783 = vpop.f32.mrf.mxu0
  %1784 = vmatprep.mubr.f32.mxu0 0.0
  %1785 = vmatmul.mubr.f32.gmra.mxu0 %v767
  %v1786 = vpop.f32.mrf.mxu0
  %v1787 = vadd.f32 0.0, %v1786
  %v1788 = vpop.f32.mrf.mxu0
  %1789 = vmatprep.mubr.f32.mxu0 0.0
  %1790 = vmatmul.mubr.f32.gmra.mxu0 %v770
  %v1791 = vpop.f32.mrf.mxu0
  %v1792 = vadd.f32 0.0, %v1791
  %v1793 = vpop.f32.mrf.mxu0
  %1794 = vmatprep.mubr.f32.mxu0 0.0
  %1795 = vmatmul.mubr.f32.gmra.mxu0 %v773
  %v1796 = vpop.f32.mrf.mxu0
  %v1797 = vadd.f32 0.0, %v1796
  %v1798 = vpop.f32.mrf.mxu0
  %1799 = vmatprep.mubr.f32.mxu0 0.0
  %1800 = vmatmul.mubr.f32.gmra.mxu0 %v776
  %v1801 = vpop.f32.mrf.mxu0
  %v1802 = vadd.f32 0.0, %v1801
  %v1803 = vpop.f32.mrf.mxu0
  %1804 = vmatprep.mubr.f32.mxu0 0.0
  %1805 = vmatmul.mubr.f32.gmra.mxu0 %v779
  %v1806 = vpop.f32.mrf.mxu0
  %v1807 = vadd.f32 0.0, %v1806
  %v1808 = vpop.f32.mrf.mxu0
  %1809 = vdwg.mxu0
  %vm1810 = vcmask 64512
  %1811 = vst.msk [vmem:[%s2] sm:$0xff] %vm1810, %v852
  %1812 = vst.msk [vmem:[%s2 + $0x8] sm:$0xff] %vm1810, %v857
  %1813 = vst.msk [vmem:[%s2 + $0x10] sm:$0xff] %vm1810, %v862
  %1814 = vst.msk [vmem:[%s2 + $0x18] sm:$0xff] %vm1810, %v867
  %1815 = vst.msk [vmem:[%s2 + $0x20] sm:$0xff] %vm1810, %v872
  %1816 = vst.msk [vmem:[%s2 + $0x28] sm:$0xff] %vm1810, %v877
  %1817 = vst.msk [vmem:[%s2 + $0x30] sm:$0xff] %vm1810, %v882
  %1818 = vst.msk [vmem:[%s2 + $0x38] sm:$0xff] %vm1810, %v887
  %1819 = vst.msk [vmem:[%s2 + $0x40] sm:$0xff] %vm1810, %v892
  %1820 = vst.msk [vmem:[%s2 + $0x48] sm:$0xff] %vm1810, %v897
  %1821 = vst.msk [vmem:[%s2 + $0x50] sm:$0xff] %vm1810, %v902
  %1822 = vst.msk [vmem:[%s2 + $0x58] sm:$0xff] %vm1810, %v907
  %1823 = vst.msk [vmem:[%s2 + $0x60] sm:$0xff] %vm1810, %v912
  %1824 = vst.msk [vmem:[%s2 + $0x68] sm:$0xff] %vm1810, %v917
  %1825 = vst.msk [vmem:[%s2 + $0x70] sm:$0xff] %vm1810, %v922
  %1826 = vst.msk [vmem:[%s2 + $0x78] sm:$0xff] %vm1810, %v927
  %1827 = vst.msk [vmem:[%s2 + $0x80] sm:$0xff] %vm1810, %v932
  %1828 = vst.msk [vmem:[%s2 + $0x88] sm:$0xff] %vm1810, %v937
  %1829 = vst.msk [vmem:[%s2 + $0x90] sm:$0xff] %vm1810, %v942
  %1830 = vst.msk [vmem:[%s2 + $0x98] sm:$0xff] %vm1810, %v947
  %1831 = vst.msk [vmem:[%s2 + $0xa0] sm:$0xff] %vm1810, %v952
  %1832 = vst.msk [vmem:[%s2 + $0xa8] sm:$0xff] %vm1810, %v957
  %1833 = vst.msk [vmem:[%s2 + $0xb0] sm:$0xff] %vm1810, %v962
  %1834 = vst.msk [vmem:[%s2 + $0xb8] sm:$0xff] %vm1810, %v967
  %1835 = vst.msk [vmem:[%s2 + $0xc0] sm:$0xff] %vm1810, %v972
  %1836 = vst.msk [vmem:[%s2 + $0xc8] sm:$0xff] %vm1810, %v977
  %1837 = vst.msk [vmem:[%s2 + $0xd0] sm:$0xff] %vm1810, %v982
  %1838 = vst.msk [vmem:[%s2 + $0xd8] sm:$0xff] %vm1810, %v987
  %1839 = vst.msk [vmem:[%s2 + $0xe0] sm:$0xff] %vm1810, %v992
  %1840 = vst.msk [vmem:[%s2 + $0xe8] sm:$0xff] %vm1810, %v997
  %1841 = vst.msk [vmem:[%s2 + $0xf0] sm:$0xff] %vm1810, %v1002
  %1842 = vst.msk [vmem:[%s2 + $0xf8] sm:$0xff] %vm1810, %v1007
  %1843 = vst.msk [vmem:[%s2 + $0x100] sm:$0xff] %vm1810, %v1012
  %1844 = vst.msk [vmem:[%s2 + $0x108] sm:$0xff] %vm1810, %v1017
  %1845 = vst.msk [vmem:[%s2 + $0x110] sm:$0xff] %vm1810, %v1022
  %1846 = vst.msk [vmem:[%s2 + $0x118] sm:$0xff] %vm1810, %v1027
  %1847 = vst.msk [vmem:[%s2 + $0x120] sm:$0xff] %vm1810, %v1032
  %1848 = vst.msk [vmem:[%s2 + $0x128] sm:$0xff] %vm1810, %v1037
  %1849 = vst.msk [vmem:[%s2 + $0x130] sm:$0xff] %vm1810, %v1042
  %1850 = vst.msk [vmem:[%s2 + $0x138] sm:$0xff] %vm1810, %v1047
  %1851 = vst.msk [vmem:[%s2 + $0x140] sm:$0xff] %vm1810, %v1052
  %1852 = vst.msk [vmem:[%s2 + $0x148] sm:$0xff] %vm1810, %v1057
  %1853 = vst.msk [vmem:[%s2 + $0x150] sm:$0xff] %vm1810, %v1062
  %1854 = vst.msk [vmem:[%s2 + $0x158] sm:$0xff] %vm1810, %v1067
  %1855 = vst.msk [vmem:[%s2 + $0x160] sm:$0xff] %vm1810, %v1072
  %1856 = vst.msk [vmem:[%s2 + $0x168] sm:$0xff] %vm1810, %v1077
  %1857 = vst.msk [vmem:[%s2 + $0x170] sm:$0xff] %vm1810, %v1082
  %1858 = vst.msk [vmem:[%s2 + $0x178] sm:$0xff] %vm1810, %v1087
  %1859 = vst.msk [vmem:[%s2 + $0x180] sm:$0xff] %vm1810, %v1092
  %1860 = vst.msk [vmem:[%s2 + $0x188] sm:$0xff] %vm1810, %v1097
  %1861 = vst.msk [vmem:[%s2 + $0x190] sm:$0xff] %vm1810, %v1102
  %1862 = vst.msk [vmem:[%s2 + $0x198] sm:$0xff] %vm1810, %v1107
  %1863 = vst.msk [vmem:[%s2 + $0x1a0] sm:$0xff] %vm1810, %v1112
  %1864 = vst.msk [vmem:[%s2 + $0x1a8] sm:$0xff] %vm1810, %v1117
  %1865 = vst.msk [vmem:[%s2 + $0x1b0] sm:$0xff] %vm1810, %v1122
  %1866 = vst.msk [vmem:[%s2 + $0x1b8] sm:$0xff] %vm1810, %v1127
  %1867 = vst.msk [vmem:[%s2 + $0x1c0] sm:$0xff] %vm1810, %v1132
  %1868 = vst.msk [vmem:[%s2 + $0x1c8] sm:$0xff] %vm1810, %v1137
  %1869 = vst.msk [vmem:[%s2 + $0x1d0] sm:$0xff] %vm1810, %v1142
  %1870 = vst.msk [vmem:[%s2 + $0x1d8] sm:$0xff] %vm1810, %v1147
  %1871 = vst.msk [vmem:[%s2 + $0x1e0] sm:$0xff] %vm1810, %v1152
  %1872 = vst.msk [vmem:[%s2 + $0x1e8] sm:$0xff] %vm1810, %v1157
  %1873 = vst.msk [vmem:[%s2 + $0x1f0] sm:$0xff] %vm1810, %v1162
  %1874 = vst.msk [vmem:[%s2 + $0x1f8] sm:$0xff] %vm1810, %v1167
  %1875 = vst.msk [vmem:[%s2 + $0x200] sm:$0xff] %vm1810, %v1172
  %1876 = vst.msk [vmem:[%s2 + $0x208] sm:$0xff] %vm1810, %v1177
  %1877 = vst.msk [vmem:[%s2 + $0x210] sm:$0xff] %vm1810, %v1182
  %1878 = vst.msk [vmem:[%s2 + $0x218] sm:$0xff] %vm1810, %v1187
  %1879 = vst.msk [vmem:[%s2 + $0x220] sm:$0xff] %vm1810, %v1192
  %1880 = vst.msk [vmem:[%s2 + $0x228] sm:$0xff] %vm1810, %v1197
  %1881 = vst.msk [vmem:[%s2 + $0x230] sm:$0xff] %vm1810, %v1202
  %1882 = vst.msk [vmem:[%s2 + $0x238] sm:$0xff] %vm1810, %v1207
  %1883 = vst.msk [vmem:[%s2 + $0x240] sm:$0xff] %vm1810, %v1212
  %1884 = vst.msk [vmem:[%s2 + $0x248] sm:$0xff] %vm1810, %v1217
  %1885 = vst.msk [vmem:[%s2 + $0x250] sm:$0xff] %vm1810, %v1222
  %1886 = vst.msk [vmem:[%s2 + $0x258] sm:$0xff] %vm1810, %v1227
  %1887 = vst.msk [vmem:[%s2 + $0x260] sm:$0xff] %vm1810, %v1232
  %1888 = vst.msk [vmem:[%s2 + $0x268] sm:$0xff] %vm1810, %v1237
  %1889 = vst.msk [vmem:[%s2 + $0x270] sm:$0xff] %vm1810, %v1242
  %1890 = vst.msk [vmem:[%s2 + $0x278] sm:$0xff] %vm1810, %v1247
  %1891 = vst.msk [vmem:[%s2 + $0x280] sm:$0xff] %vm1810, %v1252
  %1892 = vst.msk [vmem:[%s2 + $0x288] sm:$0xff] %vm1810, %v1257
  %1893 = vst.msk [vmem:[%s2 + $0x290] sm:$0xff] %vm1810, %v1262
  %1894 = vst.msk [vmem:[%s2 + $0x298] sm:$0xff] %vm1810, %v1267
  %1895 = vst.msk [vmem:[%s2 + $0x2a0] sm:$0xff] %vm1810, %v1272
  %1896 = vst.msk [vmem:[%s2 + $0x2a8] sm:$0xff] %vm1810, %v1277
  %1897 = vst.msk [vmem:[%s2 + $0x2b0] sm:$0xff] %vm1810, %v1282
  %1898 = vst.msk [vmem:[%s2 + $0x2b8] sm:$0xff] %vm1810, %v1287
  %1899 = vst.msk [vmem:[%s2 + $0x2c0] sm:$0xff] %vm1810, %v1292
  %1900 = vst.msk [vmem:[%s2 + $0x2c8] sm:$0xff] %vm1810, %v1297
  %1901 = vst.msk [vmem:[%s2 + $0x2d0] sm:$0xff] %vm1810, %v1302
  %1902 = vst.msk [vmem:[%s2 + $0x2d8] sm:$0xff] %vm1810, %v1307
  %1903 = vst.msk [vmem:[%s2 + $0x2e0] sm:$0xff] %vm1810, %v1312
  %1904 = vst.msk [vmem:[%s2 + $0x2e8] sm:$0xff] %vm1810, %v1317
  %1905 = vst.msk [vmem:[%s2 + $0x2f0] sm:$0xff] %vm1810, %v1322
  %1906 = vst.msk [vmem:[%s2 + $0x2f8] sm:$0xff] %vm1810, %v1327
  %1907 = vst.msk [vmem:[%s2 + $0x300] sm:$0xff] %vm1810, %v1332
  %1908 = vst.msk [vmem:[%s2 + $0x308] sm:$0xff] %vm1810, %v1337
  %1909 = vst.msk [vmem:[%s2 + $0x310] sm:$0xff] %vm1810, %v1342
  %1910 = vst.msk [vmem:[%s2 + $0x318] sm:$0xff] %vm1810, %v1347
  %1911 = vst.msk [vmem:[%s2 + $0x320] sm:$0xff] %vm1810, %v1352
  %1912 = vst.msk [vmem:[%s2 + $0x328] sm:$0xff] %vm1810, %v1357
  %1913 = vst.msk [vmem:[%s2 + $0x330] sm:$0xff] %vm1810, %v1362
  %1914 = vst.msk [vmem:[%s2 + $0x338] sm:$0xff] %vm1810, %v1367
  %1915 = vst.msk [vmem:[%s2 + $0x340] sm:$0xff] %vm1810, %v1372
  %1916 = vst.msk [vmem:[%s2 + $0x348] sm:$0xff] %vm1810, %v1377
  %1917 = vst.msk [vmem:[%s2 + $0x350] sm:$0xff] %vm1810, %v1382
  %1918 = vst.msk [vmem:[%s2 + $0x358] sm:$0xff] %vm1810, %v1387
  %1919 = vst.msk [vmem:[%s2 + $0x360] sm:$0xff] %vm1810, %v1392
  %1920 = vst.msk [vmem:[%s2 + $0x368] sm:$0xff] %vm1810, %v1397
  %1921 = vst.msk [vmem:[%s2 + $0x370] sm:$0xff] %vm1810, %v1402
  %1922 = vst.msk [vmem:[%s2 + $0x378] sm:$0xff] %vm1810, %v1407
  %1923 = vst.msk [vmem:[%s2 + $0x380] sm:$0xff] %vm1810, %v1412
  %1924 = vst.msk [vmem:[%s2 + $0x388] sm:$0xff] %vm1810, %v1417
  %1925 = vst.msk [vmem:[%s2 + $0x390] sm:$0xff] %vm1810, %v1422
  %1926 = vst.msk [vmem:[%s2 + $0x398] sm:$0xff] %vm1810, %v1427
  %1927 = vst.msk [vmem:[%s2 + $0x3a0] sm:$0xff] %vm1810, %v1432
  %1928 = vst.msk [vmem:[%s2 + $0x3a8] sm:$0xff] %vm1810, %v1437
  %1929 = vst.msk [vmem:[%s2 + $0x3b0] sm:$0xff] %vm1810, %v1442
  %1930 = vst.msk [vmem:[%s2 + $0x3b8] sm:$0xff] %vm1810, %v1447
  %1931 = vst.msk [vmem:[%s2 + $0x3c0] sm:$0xff] %vm1810, %v1452
  %1932 = vst.msk [vmem:[%s2 + $0x3c8] sm:$0xff] %vm1810, %v1457
  %1933 = vst.msk [vmem:[%s2 + $0x3d0] sm:$0xff] %vm1810, %v1462
  %1934 = vst.msk [vmem:[%s2 + $0x3d8] sm:$0xff] %vm1810, %v1467
  %1935 = vst.msk [vmem:[%s2 + $0x3e0] sm:$0xff] %vm1810, %v1472
  %1936 = vst.msk [vmem:[%s2 + $0x3e8] sm:$0xff] %vm1810, %v1477
  %1937 = vst.msk [vmem:[%s2 + $0x3f0] sm:$0xff] %vm1810, %v1482
  %1938 = vst.msk [vmem:[%s2 + $0x3f8] sm:$0xff] %vm1810, %v1487
  %1939 = vst.msk [vmem:[%s2 + $0x400] sm:$0xff] %vm1810, %v1492
  %1940 = vst.msk [vmem:[%s2 + $0x408] sm:$0xff] %vm1810, %v1497
  %1941 = vst.msk [vmem:[%s2 + $0x410] sm:$0xff] %vm1810, %v1502
  %1942 = vst.msk [vmem:[%s2 + $0x418] sm:$0xff] %vm1810, %v1507
  %1943 = vst.msk [vmem:[%s2 + $0x420] sm:$0xff] %vm1810, %v1512
  %1944 = vst.msk [vmem:[%s2 + $0x428] sm:$0xff] %vm1810, %v1517
  %1945 = vst.msk [vmem:[%s2 + $0x430] sm:$0xff] %vm1810, %v1522
  %1946 = vst.msk [vmem:[%s2 + $0x438] sm:$0xff] %vm1810, %v1527
  %1947 = vst.msk [vmem:[%s2 + $0x440] sm:$0xff] %vm1810, %v1532
  %1948 = vst.msk [vmem:[%s2 + $0x448] sm:$0xff] %vm1810, %v1537
  %1949 = vst.msk [vmem:[%s2 + $0x450] sm:$0xff] %vm1810, %v1542
  %1950 = vst.msk [vmem:[%s2 + $0x458] sm:$0xff] %vm1810, %v1547
  %1951 = vst.msk [vmem:[%s2 + $0x460] sm:$0xff] %vm1810, %v1552
  %1952 = vst.msk [vmem:[%s2 + $0x468] sm:$0xff] %vm1810, %v1557
  %1953 = vst.msk [vmem:[%s2 + $0x470] sm:$0xff] %vm1810, %v1562
  %1954 = vst.msk [vmem:[%s2 + $0x478] sm:$0xff] %vm1810, %v1567
  %1955 = vst.msk [vmem:[%s2 + $0x480] sm:$0xff] %vm1810, %v1572
  %1956 = vst.msk [vmem:[%s2 + $0x488] sm:$0xff] %vm1810, %v1577
  %1957 = vst.msk [vmem:[%s2 + $0x490] sm:$0xff] %vm1810, %v1582
  %1958 = vst.msk [vmem:[%s2 + $0x498] sm:$0xff] %vm1810, %v1587
  %1959 = vst.msk [vmem:[%s2 + $0x4a0] sm:$0xff] %vm1810, %v1592
  %1960 = vst.msk [vmem:[%s2 + $0x4a8] sm:$0xff] %vm1810, %v1597
  %1961 = vst.msk [vmem:[%s2 + $0x4b0] sm:$0xff] %vm1810, %v1602
  %1962 = vst.msk [vmem:[%s2 + $0x4b8] sm:$0xff] %vm1810, %v1607
  %1963 = vst.msk [vmem:[%s2 + $0x4c0] sm:$0xff] %vm1810, %v1612
  %1964 = vst.msk [vmem:[%s2 + $0x4c8] sm:$0xff] %vm1810, %v1617
  %1965 = vst.msk [vmem:[%s2 + $0x4d0] sm:$0xff] %vm1810, %v1622
  %1966 = vst.msk [vmem:[%s2 + $0x4d8] sm:$0xff] %vm1810, %v1627
  %1967 = vst.msk [vmem:[%s2 + $0x4e0] sm:$0xff] %vm1810, %v1632
  %1968 = vst.msk [vmem:[%s2 + $0x4e8] sm:$0xff] %vm1810, %v1637
  %1969 = vst.msk [vmem:[%s2 + $0x4f0] sm:$0xff] %vm1810, %v1642
  %1970 = vst.msk [vmem:[%s2 + $0x4f8] sm:$0xff] %vm1810, %v1647
  %1971 = vst.msk [vmem:[%s2 + $0x500] sm:$0xff] %vm1810, %v1652
  %1972 = vst.msk [vmem:[%s2 + $0x508] sm:$0xff] %vm1810, %v1657
  %1973 = vst.msk [vmem:[%s2 + $0x510] sm:$0xff] %vm1810, %v1662
  %1974 = vst.msk [vmem:[%s2 + $0x518] sm:$0xff] %vm1810, %v1667
  %1975 = vst.msk [vmem:[%s2 + $0x520] sm:$0xff] %vm1810, %v1672
  %1976 = vst.msk [vmem:[%s2 + $0x528] sm:$0xff] %vm1810, %v1677
  %1977 = vst.msk [vmem:[%s2 + $0x530] sm:$0xff] %vm1810, %v1682
  %1978 = vst.msk [vmem:[%s2 + $0x538] sm:$0xff] %vm1810, %v1687
  %1979 = vst.msk [vmem:[%s2 + $0x540] sm:$0xff] %vm1810, %v1692
  %1980 = vst.msk [vmem:[%s2 + $0x548] sm:$0xff] %vm1810, %v1697
  %1981 = vst.msk [vmem:[%s2 + $0x550] sm:$0xff] %vm1810, %v1702
  %1982 = vst.msk [vmem:[%s2 + $0x558] sm:$0xff] %vm1810, %v1707
  %1983 = vst.msk [vmem:[%s2 + $0x560] sm:$0xff] %vm1810, %v1712
  %1984 = vst.msk [vmem:[%s2 + $0x568] sm:$0xff] %vm1810, %v1717
  %1985 = vst.msk [vmem:[%s2 + $0x570] sm:$0xff] %vm1810, %v1722
  %1986 = vst.msk [vmem:[%s2 + $0x578] sm:$0xff] %vm1810, %v1727
  %1987 = vst.msk [vmem:[%s2 + $0x580] sm:$0xff] %vm1810, %v1732
  %1988 = vst.msk [vmem:[%s2 + $0x588] sm:$0xff] %vm1810, %v1737
  %1989 = vst.msk [vmem:[%s2 + $0x590] sm:$0xff] %vm1810, %v1742
  %1990 = vst.msk [vmem:[%s2 + $0x598] sm:$0xff] %vm1810, %v1747
  %1991 = vst.msk [vmem:[%s2 + $0x5a0] sm:$0xff] %vm1810, %v1752
  %1992 = vst.msk [vmem:[%s2 + $0x5a8] sm:$0xff] %vm1810, %v1757
  %1993 = vst.msk [vmem:[%s2 + $0x5b0] sm:$0xff] %vm1810, %v1762
  %1994 = vst.msk [vmem:[%s2 + $0x5b8] sm:$0xff] %vm1810, %v1767
  %1995 = vst.msk [vmem:[%s2 + $0x5c0] sm:$0xff] %vm1810, %v1772
  %1996 = vst.msk [vmem:[%s2 + $0x5c8] sm:$0xff] %vm1810, %v1777
  %1997 = vst.msk [vmem:[%s2 + $0x5d0] sm:$0xff] %vm1810, %v1782
  %1998 = vst.msk [vmem:[%s2 + $0x5d8] sm:$0xff] %vm1810, %v1787
  %1999 = vst.msk [vmem:[%s2 + $0x5e0] sm:$0xff] %vm1810, %v1792
  %2000 = vst.msk [vmem:[%s2 + $0x5e8] sm:$0xff] %vm1810, %v1797
  %2001 = vst.msk [vmem:[%s2 + $0x5f0] sm:$0xff] %vm1810, %v1802
  %2002 = vst.msk [vmem:[%s2 + $0x5f8] sm:$0xff] %vm1810, %v1807
  // Predicated region
  $region10: #{sparse_feature_pyramid.16} parent=0 // pred_check
    _
  $region11: #{sparse_feature_pyramid.16} parent=0 // pred_check_branch
    %2004 = sbr.rel (0) target = $region13
  $region12: #{sparse_feature_pyramid.16} parent=0 // pred_region
    _
  $region13: #{sparse_feature_pyramid.16} parent=0 // pred_fallthru
    _
  // Predicated region
  $region14: #{sparse_feature_pyramid.16} parent=0 // pred_check
    _
  $region15: #{sparse_feature_pyramid.16} parent=0 // pred_check_branch
    %2006 = sbr.rel (0) target = $region17
  $region16: #{sparse_feature_pyramid.16} parent=0 // pred_region
    _
  $region17: #{sparse_feature_pyramid.16} parent=0 // pred_fallthru
    _

</llo_original>
